<compile_context>
chip_gen: v7x
topology: tpu7x:2x2x1
jax: 0.10.0
libtpu: 0.0.40
codegen_flags: <defaults>
</compile_context>

<pallas_src>
import jax
import jax.numpy as jnp
from jax.experimental import pallas as pl
from jax.experimental.pallas import tpu as pltpu

H = 32            # rnn_size / decoder hidden
E = 32            # word embedding dim
FEAT_EMB = 8      # per-WALS-feature embedding dim
N_FEATURES = 4    # 2 feature types x 2 features each
N_FEAT_VALUES = 4
WALS_DIM = N_FEATURES * FEAT_EMB   # 32
DEC_LAYERS = 1
VOCAB_SRC = 17
VOCAB_TGT = 19


# ----------------------------------------------------------------------------
# Pallas kernels
# ----------------------------------------------------------------------------
def _lstm_step(xg_t, h, c, whh, Hd):
    # One LSTM step: a single lane-dense (B,H) @ (H,4H=128) MXU matmul,
    # then static 32-lane gate slices (i | f | g | o).
    gates = xg_t + jnp.dot(h, whh, preferred_element_type=jnp.float32)  # (B,4H)
    i = jax.nn.sigmoid(gates[:, 0 * Hd:1 * Hd])
    f = jax.nn.sigmoid(gates[:, 1 * Hd:2 * Hd])
    g = jnp.tanh(gates[:, 2 * Hd:3 * Hd])
    o = jax.nn.sigmoid(gates[:, 3 * Hd:4 * Hd])
    c_new = f * c + i * g
    h_new = o * jnp.tanh(c_new)
    return h_new, c_new


def _enc_lstm_kernel(xg_ref, whh_ref, ctx_ref, hN_ref, cN_ref):
    # xg_ref:  (T, B, 4H)  precomputed x @ W_ih + b, gates concatenated [i|f|g|o]
    # whh_ref: (H, 4H)     recurrent weights, gates concatenated
    # ctx_ref: (B, T, H)   encoder context, emitted directly attention-ready
    T, B, G = xg_ref.shape
    Hd = G // 4
    whh = whh_ref[...]                                   # hoisted weight load

    h = jnp.zeros((B, Hd), jnp.float32)
    c = jnp.zeros((B, Hd), jnp.float32)
    for t in range(T):                                   # static, fully unrolled
        h, c = _lstm_step(xg_ref[t], h, c, whh, Hd)
        ctx_ref[:, t, :] = h                             # static-index store
    hN_ref[0] = h
    cN_ref[0] = c


def lstm_encoder(xg, whh):
    # xg: (T, B, 4H), whh: (H, 4H) -> ctx (B, T, H), h_n (1,B,H), c_n (1,B,H)
    T, B, G = xg.shape
    Hd = G // 4
    return pl.pallas_call(
        _enc_lstm_kernel,
        out_shape=(jax.ShapeDtypeStruct((B, T, Hd), jnp.float32),
                   jax.ShapeDtypeStruct((1, B, Hd), jnp.float32),
                   jax.ShapeDtypeStruct((1, B, Hd), jnp.float32)),
        grid=(1,),
        in_specs=[pl.BlockSpec((T, B, G), lambda i: (0, 0, 0)),
                  pl.BlockSpec((Hd, G), lambda i: (0, 0))],
        out_specs=(pl.BlockSpec((B, T, Hd), lambda i: (0, 0, 0)),
                   pl.BlockSpec((1, B, Hd), lambda i: (0, 0, 0)),
                   pl.BlockSpec((1, B, Hd), lambda i: (0, 0, 0))),
    )(xg, whh)


def _dec_attn_lstm_kernel(xg_ref, whh_ref, wa_ref, woutc_ref, wouth_ref,
                          ctx_ref, h0_ref, c0_ref, wals_ref,
                          out_ref, attn_ref, hN_ref, cN_ref, h_all_scr):
    # xg_ref:  (T, B, 4H) precomputed y @ W_ih + b, gates concatenated
    # whh_ref: (H, 4H)    recurrent weights, gates concatenated
    # ctx_ref: (B, Ts, H) encoder context (single layout for both contractions)
    # h_all_scr: (B, T, H) VMEM scratch holding every decoder hidden state
    T, B, G = xg_ref.shape
    Hd = G // 4
    Ts = ctx_ref.shape[1]
    whh = whh_ref[...]
    wals = wals_ref[0]

    # combine_enc_hidden_wals_proj: the reference adds the WALS vector to every
    # element of the encoder (h, c) tuple, so both h and c are shifted.
    h = h0_ref[0] + wals
    c = c0_ref[0] + wals

    # ---- serial LSTM recurrence (attention hoisted out of this loop) ----
    for t in range(T):                                   # static, fully unrolled
        h, c = _lstm_step(xg_ref[t], h, c, whh, Hd)
        h_all_scr[:, t, :] = h                           # static-index store
    hN_ref[0] = h
    cN_ref[0] = c

    # ---- batched global attention ("general" score) over all T queries ----
    ctx = ctx_ref[...]                                   # (B, Ts, H)
    h_all = h_all_scr[...]                               # (B, T, H)
    wa_b = jnp.broadcast_to(wa_ref[...], (B, Hd, Hd))
    woutc_b = jnp.broadcast_to(woutc_ref[...], (B, Hd, Hd))
    wouth_b = jnp.broadcast_to(wouth_ref[...], (B, Hd, Hd))

    # score(h, s) = (h W_a) . s — all batched MXU matmuls.
    hW = jnp.einsum('bth,bhk->btk', h_all, wa_b,
                    preferred_element_type=jnp.float32)        # (B, T, H)
    scores = jnp.einsum('btk,bsk->bts', hW, ctx,
                        preferred_element_type=jnp.float32)    # (B, T, Ts)
    # TODO(synk): no source-length mask (`lengths` ignored), matches encoder.
    m = jnp.max(scores, axis=-1, keepdims=True)
    e = jnp.exp(scores - m)
    denom = jnp.sum(e, axis=-1, keepdims=True)
    align = e * pl.reciprocal(denom, approx=True)              # (B, T, Ts)
    cvec = jnp.einsum('bts,bsh->bth', align, ctx,
                      preferred_element_type=jnp.float32)      # (B, T, H)

    # linear_out([c; h]) with tanh, no bias (concat weight split in halves).
    attn_h = jnp.tanh(
        jnp.einsum('bth,bhk->btk', cvec, woutc_b,
                   preferred_element_type=jnp.float32)
        + jnp.einsum('bth,bhk->btk', h_all, wouth_b,
                     preferred_element_type=jnp.float32))      # (B, T, H)

    out_ref[...] = attn_h                                # single wide store
    attn_ref[...] = align                                # single wide store


def lstm_attn_decoder(xg, whh, wa, wout_c, wout_h, ctx_bth, h0, c0, wals):
    T, B, G = xg.shape
    Hd = G // 4
    Ts = ctx_bth.shape[1]
    return pl.pallas_call(
        _dec_attn_lstm_kernel,
        out_shape=(jax.ShapeDtypeStruct((B, T, Hd), jnp.float32),
                   jax.ShapeDtypeStruct((B, T, Ts), jnp.float32),
                   jax.ShapeDtypeStruct((1, B, Hd), jnp.float32),
                   jax.ShapeDtypeStruct((1, B, Hd), jnp.float32)),
        grid=(1,),
        in_specs=[pl.BlockSpec((T, B, G), lambda i: (0, 0, 0)),
                  pl.BlockSpec((Hd, G), lambda i: (0, 0)),
                  pl.BlockSpec((Hd, Hd), lambda i: (0, 0)),
                  pl.BlockSpec((Hd, Hd), lambda i: (0, 0)),
                  pl.BlockSpec((Hd, Hd), lambda i: (0, 0)),
                  pl.BlockSpec((B, Ts, Hd), lambda i: (0, 0, 0)),
                  pl.BlockSpec((1, B, Hd), lambda i: (0, 0, 0)),
                  pl.BlockSpec((1, B, Hd), lambda i: (0, 0, 0)),
                  pl.BlockSpec((1, B, Hd), lambda i: (0, 0, 0))],
        out_specs=(pl.BlockSpec((B, T, Hd), lambda i: (0, 0, 0)),
                   pl.BlockSpec((B, T, Ts), lambda i: (0, 0, 0)),
                   pl.BlockSpec((1, B, Hd), lambda i: (0, 0, 0)),
                   pl.BlockSpec((1, B, Hd), lambda i: (0, 0, 0))),
        scratch_shapes=[pltpu.VMEM((B, T, Hd), jnp.float32)],
    )(xg, whh, wa, wout_c, wout_h, ctx_bth, h0, c0, wals)


# ----------------------------------------------------------------------------
# Glue: WALS feature assembly, parameter prep, full forward (plain JAX / XLA)
# ----------------------------------------------------------------------------
def flip_simulation_languages(langs, flip):
    if flip:
        langs[0], langs[1] = langs[1], langs[0]
    return langs


def get_local_features_jax(params):
    # wals_model == 'DecInitHidden_Target': target-language features only,
    # concatenated per feature type then across types, then the MLP.
    embs = [params["wals_emb"][f][params["feature_values_target"][f]].reshape(1, -1)
            for f in range(N_FEATURES)]
    feats = jnp.concatenate(embs, axis=1)                      # (1, WALS_DIM)
    # TODO(synk): exact MLP_target_or_both architecture unknown; a single
    # Linear(WALS_DIM -> H) is used here (tiny op, plain JAX — not a kernel).
    return feats @ params["mlp_w"] + params["mlp_b"]           # (1, H)


def _input_gates(emb, wih, b):
    # Hoisted input projection: one matmul over all time steps, gates kept
    # concatenated along the lane dim.  (T, B, E) -> (T, B, 4H=128).
    T, B, E_ = emb.shape
    G = wih.shape[1]
    g = emb.reshape(T * B, E_) @ wih + b                       # (T*B, 4H)
    return g.reshape(T, B, G)


def _forward_core(params, src, tgt, lengths, dec_state):
    del lengths  # TODO(synk): packed sequences / length masking not modeled.
    # wals features -> (1, H) -> (dec_layers, B, H)
    wals = get_local_features_jax(params)                      # (1, H)
    _, B, _ = src.shape
    wals_modelB = jnp.tile(wals.reshape(1, 1, H), (DEC_LAYERS, B, 1))

    tgt_in = tgt[:-1]

    # word embeddings (gather = glue)
    src_emb = params["src_embedding"][src[:, :, 0]]            # (T_src, B, E)
    tgt_emb = params["tgt_embedding"][tgt_in[:, :, 0]]         # (T_tgt-1, B, E)

    # hoisted x @ W_ih + b projections (gate-concatenated, lane-dense 4H=128)
    enc_xg = _input_gates(src_emb, params["enc_wih"], params["enc_b"])
    dec_xg = _input_gates(tgt_emb, params["dec_wih"], params["dec_b"])

    # encoder: context emitted directly as (B, T_src, H)
    ctx_bth, h_n, c_n = lstm_encoder(enc_xg, params["enc_whh"])

    # combine_enc_hidden_wals_proj fused into the decoder kernel init.
    # TODO(synk): input_feed / coverage variants of StdRNNDecoder not modeled.
    if dec_state is None:
        h0, c0, wals_in = h_n, c_n, wals_modelB
    else:
        h0, c0 = dec_state
        wals_in = jnp.zeros_like(wals_modelB)

    out_bth, attn_bts, dec_h, dec_c = lstm_attn_decoder(
        dec_xg, params["dec_whh"],
        params["attn_wa"], params["attn_wout_c"], params["attn_wout_h"],
        ctx_bth, h0, c0, wals_in)

    # back to the module's (time, batch, ...) convention (tiny XLA transposes)
    out = jnp.transpose(out_bth, (1, 0, 2))                    # (T_tgt-1, B, H)
    attn = jnp.transpose(attn_bts, (1, 0, 2))                  # (T_tgt-1, B, T_src)
    attns = {"std": attn}
    new_dec_state = (dec_h, dec_c)
    return out, attns, new_dec_state


_forward_jit = jax.jit(_forward_core)


def decoder_initialization_forward(params, src, tgt, lengths,
                                   dec_state=None, flipping=False):
    sim_langs = flip_simulation_languages(["src_lang", "tgt_lang"], flipping)
    del sim_langs  # bookkeeping only; target-language features already selected
    return _forward_jit(params, src, tgt, lengths, dec_state)


def init_params(key):
    ks = jax.random.split(key, 14)
    s = 0.1
    p = {}
    p["wals_emb"] = jax.random.normal(ks[0], (N_FEATURES, N_FEAT_VALUES, FEAT_EMB),
                                      jnp.float32) * s
    p["feature_values_target"] = jnp.arange(N_FEATURES, dtype=jnp.int32) % N_FEAT_VALUES
    p["mlp_w"] = jax.random.normal(ks[1], (WALS_DIM, H), jnp.float32) * s
    p["mlp_b"] = jnp.zeros((1, H), jnp.float32)
    p["src_embedding"] = jax.random.normal(ks[2], (VOCAB_SRC, E), jnp.float32) * s
    p["tgt_embedding"] = jax.random.normal(ks[3], (VOCAB_TGT, E), jnp.float32) * s
    p["enc_wih"] = jax.random.normal(ks[4], (E, 4 * H), jnp.float32) * s
    p["enc_whh"] = jax.random.normal(ks[5], (H, 4 * H), jnp.float32) * s
    p["enc_b"] = jnp.zeros((1, 4 * H), jnp.float32)
    p["dec_wih"] = jax.random.normal(ks[6], (E, 4 * H), jnp.float32) * s
    p["dec_whh"] = jax.random.normal(ks[7], (H, 4 * H), jnp.float32) * s
    p["dec_b"] = jnp.zeros((1, 4 * H), jnp.float32)
    p["attn_wa"] = jax.random.normal(ks[8], (H, H), jnp.float32) * s
    p["attn_wout_c"] = jax.random.normal(ks[9], (H, H), jnp.float32) * s
    p["attn_wout_h"] = jax.random.normal(ks[10], (H, H), jnp.float32) * s
    return p


if __name__ == "__main__":
    key = jax.random.PRNGKey(0)
    params = init_params(key)
    k_src, k_tgt = jax.random.split(jax.random.PRNGKey(1))

    T_SRC, T_TGT, B = 8, 8, 2
    src = jax.random.randint(k_src, (T_SRC, B, 1), 0, VOCAB_SRC, dtype=jnp.int32)
    tgt = jax.random.randint(k_tgt, (T_TGT, B, 1), 0, VOCAB_TGT, dtype=jnp.int32)
    lengths = jnp.full((B,), T_SRC, dtype=jnp.int32)

    out, attns, dec_state = decoder_initialization_forward(params, src, tgt, lengths)
    jax.block_until_ready((out, attns["std"], dec_state))

    assert out.shape == (T_TGT - 1, B, H)
    assert attns["std"].shape == (T_TGT - 1, B, T_SRC)
    assert dec_state[0].shape == (DEC_LAYERS, B, H)
    print("KERNEL_OK")
</pallas_src>

<mosaic_0001>
module attributes {stable_mosaic.version = 11 : i64} {
  func.func @_enc_lstm_kernel(%arg0: i32, %arg1: memref<8x2x128xf32, #tpu.memory_space<vmem>>, %arg2: memref<32x128xf32, #tpu.memory_space<vmem>>, %arg3: memref<2x8x32xf32, #tpu.memory_space<vmem>>, %arg4: memref<1x2x32xf32, #tpu.memory_space<vmem>>, %arg5: memref<1x2x32xf32, #tpu.memory_space<vmem>>) attributes {dimension_semantics = [#tpu.dimension_semantics<arbitrary>], iteration_bounds = array<i64: 1>, scalar_prefetch = 0 : i64, scratch_operands = 0 : i64, tpu.core_type = #tpu.core_type<tc>, window_params = [{pipeline_mode = #tpu.pipeline_mode<synchronous>, transform_indices = @transform_0, window_bounds = array<i64: 8, 2, 128>}, {pipeline_mode = #tpu.pipeline_mode<synchronous>, transform_indices = @transform_1, window_bounds = array<i64: 32, 128>}, {pipeline_mode = #tpu.pipeline_mode<synchronous>, transform_indices = @transform_2, window_bounds = array<i64: 2, 8, 32>}, {pipeline_mode = #tpu.pipeline_mode<synchronous>, transform_indices = @transform_3, window_bounds = array<i64: 1, 2, 32>}, {pipeline_mode = #tpu.pipeline_mode<synchronous>, transform_indices = @transform_4, window_bounds = array<i64: 1, 2, 32>}]} {
    %c0 = arith.constant 0 : index
    %c0_0 = arith.constant 0 : index
    %0 = vector.load %arg2[%c0, %c0_0] : memref<32x128xf32, #tpu.memory_space<vmem>>, vector<32x128xf32>
    %cst = arith.constant 0.000000e+00 : f32
    %1 = vector.broadcast %cst : f32 to vector<2x32xf32>
    %cst_1 = arith.constant 0.000000e+00 : f32
    %2 = vector.broadcast %cst_1 : f32 to vector<2x32xf32>
    %c0_2 = arith.constant 0 : index
    %c0_3 = arith.constant 0 : index
    %c0_4 = arith.constant 0 : index
    %3 = vector.load %arg1[%c0_2, %c0_3, %c0_4] : memref<8x2x128xf32, #tpu.memory_space<vmem>>, vector<1x2x128xf32>
    %4 = vector.shape_cast %3 : vector<1x2x128xf32> to vector<2x128xf32>
    %cst_5 = arith.constant dense<0.000000e+00> : vector<2x128xf32>
    %5 = tpu.matmul %1, %0, %cst_5 {dimension_numbers = #tpu.dot_dimension_numbers<[1], [0], [0], [1], [0, 0, 1, 1], [], []>} : vector<2x32xf32>, vector<32x128xf32>, vector<2x128xf32> -> vector<2x128xf32>
    %6 = arith.addf %4, %5 : vector<2x128xf32>
    %7 = vector.extract_strided_slice %6 {offsets = [0, 0], sizes = [2, 32], strides = [1, 1]} : vector<2x128xf32> to vector<2x32xf32>
    %8 = arith.negf %7 : vector<2x32xf32>
    %9 = math.exp %8 : vector<2x32xf32>
    %cst_6 = arith.constant 1.000000e+00 : f32
    %10 = vector.broadcast %cst_6 : f32 to vector<2x32xf32>
    %11 = arith.addf %10, %9 : vector<2x32xf32>
    %12 = arith.divf %10, %11 : vector<2x32xf32>
    %13 = vector.extract_strided_slice %6 {offsets = [0, 32], sizes = [2, 32], strides = [1, 1]} : vector<2x128xf32> to vector<2x32xf32>
    %14 = arith.negf %13 : vector<2x32xf32>
    %15 = math.exp %14 : vector<2x32xf32>
    %cst_7 = arith.constant 1.000000e+00 : f32
    %16 = vector.broadcast %cst_7 : f32 to vector<2x32xf32>
    %17 = arith.addf %16, %15 : vector<2x32xf32>
    %18 = arith.divf %16, %17 : vector<2x32xf32>
    %19 = vector.extract_strided_slice %6 {offsets = [0, 64], sizes = [2, 32], strides = [1, 1]} : vector<2x128xf32> to vector<2x32xf32>
    %20 = math.tanh %19 : vector<2x32xf32>
    %21 = vector.extract_strided_slice %6 {offsets = [0, 96], sizes = [2, 32], strides = [1, 1]} : vector<2x128xf32> to vector<2x32xf32>
    %22 = arith.negf %21 : vector<2x32xf32>
    %23 = math.exp %22 : vector<2x32xf32>
    %cst_8 = arith.constant 1.000000e+00 : f32
    %24 = vector.broadcast %cst_8 : f32 to vector<2x32xf32>
    %25 = arith.addf %24, %23 : vector<2x32xf32>
    %26 = arith.divf %24, %25 : vector<2x32xf32>
    %27 = arith.mulf %18, %2 : vector<2x32xf32>
    %28 = arith.mulf %12, %20 : vector<2x32xf32>
    %29 = arith.addf %27, %28 : vector<2x32xf32>
    %30 = math.tanh %29 : vector<2x32xf32>
    %31 = arith.mulf %26, %30 : vector<2x32xf32>
    %c0_9 = arith.constant 0 : index
    %c0_10 = arith.constant 0 : index
    %c0_11 = arith.constant 0 : index
    %32 = vector.load %arg3[%c0_9, %c0_10, %c0_11] : memref<2x8x32xf32, #tpu.memory_space<vmem>>, vector<2x1x32xf32>
    %33 = vector.shape_cast %32 : vector<2x1x32xf32> to vector<2x32xf32>
    %34 = vector.shape_cast %31 : vector<2x32xf32> to vector<2x1x32xf32>
    tpu.vector_store %arg3[%c0_9, %c0_10, %c0_11], %34 {strides = array<i32>} : memref<2x8x32xf32, #tpu.memory_space<vmem>>, vector<2x1x32xf32>,
    %c1 = arith.constant 1 : index
    %c0_12 = arith.constant 0 : index
    %c0_13 = arith.constant 0 : index
    %35 = vector.load %arg1[%c1, %c0_12, %c0_13] : memref<8x2x128xf32, #tpu.memory_space<vmem>>, vector<1x2x128xf32>
    %36 = vector.shape_cast %35 : vector<1x2x128xf32> to vector<2x128xf32>
    %cst_14 = arith.constant dense<0.000000e+00> : vector<2x128xf32>
    %37 = tpu.matmul %31, %0, %cst_14 {dimension_numbers = #tpu.dot_dimension_numbers<[1], [0], [0], [1], [0, 0, 1, 1], [], []>} : vector<2x32xf32>, vector<32x128xf32>, vector<2x128xf32> -> vector<2x128xf32>
    %38 = arith.addf %36, %37 : vector<2x128xf32>
    %39 = vector.extract_strided_slice %38 {offsets = [0, 0], sizes = [2, 32], strides = [1, 1]} : vector<2x128xf32> to vector<2x32xf32>
    %40 = arith.negf %39 : vector<2x32xf32>
    %41 = math.exp %40 : vector<2x32xf32>
    %cst_15 = arith.constant 1.000000e+00 : f32
    %42 = vector.broadcast %cst_15 : f32 to vector<2x32xf32>
    %43 = arith.addf %42, %41 : vector<2x32xf32>
    %44 = arith.divf %42, %43 : vector<2x32xf32>
    %45 = vector.extract_strided_slice %38 {offsets = [0, 32], sizes = [2, 32], strides = [1, 1]} : vector<2x128xf32> to vector<2x32xf32>
    %46 = arith.negf %45 : vector<2x32xf32>
    %47 = math.exp %46 : vector<2x32xf32>
    %cst_16 = arith.constant 1.000000e+00 : f32
    %48 = vector.broadcast %cst_16 : f32 to vector<2x32xf32>
    %49 = arith.addf %48, %47 : vector<2x32xf32>
    %50 = arith.divf %48, %49 : vector<2x32xf32>
    %51 = vector.extract_strided_slice %38 {offsets = [0, 64], sizes = [2, 32], strides = [1, 1]} : vector<2x128xf32> to vector<2x32xf32>
    %52 = math.tanh %51 : vector<2x32xf32>
    %53 = vector.extract_strided_slice %38 {offsets = [0, 96], sizes = [2, 32], strides = [1, 1]} : vector<2x128xf32> to vector<2x32xf32>
    %54 = arith.negf %53 : vector<2x32xf32>
    %55 = math.exp %54 : vector<2x32xf32>
    %cst_17 = arith.constant 1.000000e+00 : f32
    %56 = vector.broadcast %cst_17 : f32 to vector<2x32xf32>
    %57 = arith.addf %56, %55 : vector<2x32xf32>
    %58 = arith.divf %56, %57 : vector<2x32xf32>
    %59 = arith.mulf %50, %29 : vector<2x32xf32>
    %60 = arith.mulf %44, %52 : vector<2x32xf32>
    %61 = arith.addf %59, %60 : vector<2x32xf32>
    %62 = math.tanh %61 : vector<2x32xf32>
    %63 = arith.mulf %58, %62 : vector<2x32xf32>
    %c0_18 = arith.constant 0 : index
    %c1_19 = arith.constant 1 : index
    %c0_20 = arith.constant 0 : index
    %64 = vector.load %arg3[%c0_18, %c1_19, %c0_20] : memref<2x8x32xf32, #tpu.memory_space<vmem>>, vector<2x1x32xf32>
    %65 = vector.shape_cast %64 : vector<2x1x32xf32> to vector<2x32xf32>
    %66 = vector.shape_cast %63 : vector<2x32xf32> to vector<2x1x32xf32>
    tpu.vector_store %arg3[%c0_18, %c1_19, %c0_20], %66 {strides = array<i32>} : memref<2x8x32xf32, #tpu.memory_space<vmem>>, vector<2x1x32xf32>,
    %c2 = arith.constant 2 : index
    %c0_21 = arith.constant 0 : index
    %c0_22 = arith.constant 0 : index
    %67 = vector.load %arg1[%c2, %c0_21, %c0_22] : memref<8x2x128xf32, #tpu.memory_space<vmem>>, vector<1x2x128xf32>
    %68 = vector.shape_cast %67 : vector<1x2x128xf32> to vector<2x128xf32>
    %cst_23 = arith.constant dense<0.000000e+00> : vector<2x128xf32>
    %69 = tpu.matmul %63, %0, %cst_23 {dimension_numbers = #tpu.dot_dimension_numbers<[1], [0], [0], [1], [0, 0, 1, 1], [], []>} : vector<2x32xf32>, vector<32x128xf32>, vector<2x128xf32> -> vector<2x128xf32>
    %70 = arith.addf %68, %69 : vector<2x128xf32>
    %71 = vector.extract_strided_slice %70 {offsets = [0, 0], sizes = [2, 32], strides = [1, 1]} : vector<2x128xf32> to vector<2x32xf32>
    %72 = arith.negf %71 : vector<2x32xf32>
    %73 = math.exp %72 : vector<2x32xf32>
    %cst_24 = arith.constant 1.000000e+00 : f32
    %74 = vector.broadcast %cst_24 : f32 to vector<2x32xf32>
    %75 = arith.addf %74, %73 : vector<2x32xf32>
    %76 = arith.divf %74, %75 : vector<2x32xf32>
    %77 = vector.extract_strided_slice %70 {offsets = [0, 32], sizes = [2, 32], strides = [1, 1]} : vector<2x128xf32> to vector<2x32xf32>
    %78 = arith.negf %77 : vector<2x32xf32>
    %79 = math.exp %78 : vector<2x32xf32>
    %cst_25 = arith.constant 1.000000e+00 : f32
    %80 = vector.broadcast %cst_25 : f32 to vector<2x32xf32>
    %81 = arith.addf %80, %79 : vector<2x32xf32>
    %82 = arith.divf %80, %81 : vector<2x32xf32>
    %83 = vector.extract_strided_slice %70 {offsets = [0, 64], sizes = [2, 32], strides = [1, 1]} : vector<2x128xf32> to vector<2x32xf32>
    %84 = math.tanh %83 : vector<2x32xf32>
    %85 = vector.extract_strided_slice %70 {offsets = [0, 96], sizes = [2, 32], strides = [1, 1]} : vector<2x128xf32> to vector<2x32xf32>
    %86 = arith.negf %85 : vector<2x32xf32>
    %87 = math.exp %86 : vector<2x32xf32>
    %cst_26 = arith.constant 1.000000e+00 : f32
    %88 = vector.broadcast %cst_26 : f32 to vector<2x32xf32>
    %89 = arith.addf %88, %87 : vector<2x32xf32>
    %90 = arith.divf %88, %89 : vector<2x32xf32>
    %91 = arith.mulf %82, %61 : vector<2x32xf32>
    %92 = arith.mulf %76, %84 : vector<2x32xf32>
    %93 = arith.addf %91, %92 : vector<2x32xf32>
    %94 = math.tanh %93 : vector<2x32xf32>
    %95 = arith.mulf %90, %94 : vector<2x32xf32>
    %c0_27 = arith.constant 0 : index
    %c2_28 = arith.constant 2 : index
    %c0_29 = arith.constant 0 : index
    %96 = vector.load %arg3[%c0_27, %c2_28, %c0_29] : memref<2x8x32xf32, #tpu.memory_space<vmem>>, vector<2x1x32xf32>
    %97 = vector.shape_cast %96 : vector<2x1x32xf32> to vector<2x32xf32>
    %98 = vector.shape_cast %95 : vector<2x32xf32> to vector<2x1x32xf32>
    tpu.vector_store %arg3[%c0_27, %c2_28, %c0_29], %98 {strides = array<i32>} : memref<2x8x32xf32, #tpu.memory_space<vmem>>, vector<2x1x32xf32>,
    %c3 = arith.constant 3 : index
    %c0_30 = arith.constant 0 : index
    %c0_31 = arith.constant 0 : index
    %99 = vector.load %arg1[%c3, %c0_30, %c0_31] : memref<8x2x128xf32, #tpu.memory_space<vmem>>, vector<1x2x128xf32>
    %100 = vector.shape_cast %99 : vector<1x2x128xf32> to vector<2x128xf32>
    %cst_32 = arith.constant dense<0.000000e+00> : vector<2x128xf32>
    %101 = tpu.matmul %95, %0, %cst_32 {dimension_numbers = #tpu.dot_dimension_numbers<[1], [0], [0], [1], [0, 0, 1, 1], [], []>} : vector<2x32xf32>, vector<32x128xf32>, vector<2x128xf32> -> vector<2x128xf32>
    %102 = arith.addf %100, %101 : vector<2x128xf32>
    %103 = vector.extract_strided_slice %102 {offsets = [0, 0], sizes = [2, 32], strides = [1, 1]} : vector<2x128xf32> to vector<2x32xf32>
    %104 = arith.negf %103 : vector<2x32xf32>
    %105 = math.exp %104 : vector<2x32xf32>
    %cst_33 = arith.constant 1.000000e+00 : f32
    %106 = vector.broadcast %cst_33 : f32 to vector<2x32xf32>
    %107 = arith.addf %106, %105 : vector<2x32xf32>
    %108 = arith.divf %106, %107 : vector<2x32xf32>
    %109 = vector.extract_strided_slice %102 {offsets = [0, 32], sizes = [2, 32], strides = [1, 1]} : vector<2x128xf32> to vector<2x32xf32>
    %110 = arith.negf %109 : vector<2x32xf32>
    %111 = math.exp %110 : vector<2x32xf32>
    %cst_34 = arith.constant 1.000000e+00 : f32
    %112 = vector.broadcast %cst_34 : f32 to vector<2x32xf32>
    %113 = arith.addf %112, %111 : vector<2x32xf32>
    %114 = arith.divf %112, %113 : vector<2x32xf32>
    %115 = vector.extract_strided_slice %102 {offsets = [0, 64], sizes = [2, 32], strides = [1, 1]} : vector<2x128xf32> to vector<2x32xf32>
    %116 = math.tanh %115 : vector<2x32xf32>
    %117 = vector.extract_strided_slice %102 {offsets = [0, 96], sizes = [2, 32], strides = [1, 1]} : vector<2x128xf32> to vector<2x32xf32>
    %118 = arith.negf %117 : vector<2x32xf32>
    %119 = math.exp %118 : vector<2x32xf32>
    %cst_35 = arith.constant 1.000000e+00 : f32
    %120 = vector.broadcast %cst_35 : f32 to vector<2x32xf32>
    %121 = arith.addf %120, %119 : vector<2x32xf32>
    %122 = arith.divf %120, %121 : vector<2x32xf32>
    %123 = arith.mulf %114, %93 : vector<2x32xf32>
    %124 = arith.mulf %108, %116 : vector<2x32xf32>
    %125 = arith.addf %123, %124 : vector<2x32xf32>
    %126 = math.tanh %125 : vector<2x32xf32>
    %127 = arith.mulf %122, %126 : vector<2x32xf32>
    %c0_36 = arith.constant 0 : index
    %c3_37 = arith.constant 3 : index
    %c0_38 = arith.constant 0 : index
    %128 = vector.load %arg3[%c0_36, %c3_37, %c0_38] : memref<2x8x32xf32, #tpu.memory_space<vmem>>, vector<2x1x32xf32>
    %129 = vector.shape_cast %128 : vector<2x1x32xf32> to vector<2x32xf32>
    %130 = vector.shape_cast %127 : vector<2x32xf32> to vector<2x1x32xf32>
    tpu.vector_store %arg3[%c0_36, %c3_37, %c0_38], %130 {strides = array<i32>} : memref<2x8x32xf32, #tpu.memory_space<vmem>>, vector<2x1x32xf32>,
    %c4 = arith.constant 4 : index
    %c0_39 = arith.constant 0 : index
    %c0_40 = arith.constant 0 : index
    %131 = vector.load %arg1[%c4, %c0_39, %c0_40] : memref<8x2x128xf32, #tpu.memory_space<vmem>>, vector<1x2x128xf32>
    %132 = vector.shape_cast %131 : vector<1x2x128xf32> to vector<2x128xf32>
    %cst_41 = arith.constant dense<0.000000e+00> : vector<2x128xf32>
    %133 = tpu.matmul %127, %0, %cst_41 {dimension_numbers = #tpu.dot_dimension_numbers<[1], [0], [0], [1], [0, 0, 1, 1], [], []>} : vector<2x32xf32>, vector<32x128xf32>, vector<2x128xf32> -> vector<2x128xf32>
    %134 = arith.addf %132, %133 : vector<2x128xf32>
    %135 = vector.extract_strided_slice %134 {offsets = [0, 0], sizes = [2, 32], strides = [1, 1]} : vector<2x128xf32> to vector<2x32xf32>
    %136 = arith.negf %135 : vector<2x32xf32>
    %137 = math.exp %136 : vector<2x32xf32>
    %cst_42 = arith.constant 1.000000e+00 : f32
    %138 = vector.broadcast %cst_42 : f32 to vector<2x32xf32>
    %139 = arith.addf %138, %137 : vector<2x32xf32>
    %140 = arith.divf %138, %139 : vector<2x32xf32>
    %141 = vector.extract_strided_slice %134 {offsets = [0, 32], sizes = [2, 32], strides = [1, 1]} : vector<2x128xf32> to vector<2x32xf32>
    %142 = arith.negf %141 : vector<2x32xf32>
    %143 = math.exp %142 : vector<2x32xf32>
    %cst_43 = arith.constant 1.000000e+00 : f32
    %144 = vector.broadcast %cst_43 : f32 to vector<2x32xf32>
    %145 = arith.addf %144, %143 : vector<2x32xf32>
    %146 = arith.divf %144, %145 : vector<2x32xf32>
    %147 = vector.extract_strided_slice %134 {offsets = [0, 64], sizes = [2, 32], strides = [1, 1]} : vector<2x128xf32> to vector<2x32xf32>
    %148 = math.tanh %147 : vector<2x32xf32>
    %149 = vector.extract_strided_slice %134 {offsets = [0, 96], sizes = [2, 32], strides = [1, 1]} : vector<2x128xf32> to vector<2x32xf32>
    %150 = arith.negf %149 : vector<2x32xf32>
    %151 = math.exp %150 : vector<2x32xf32>
    %cst_44 = arith.constant 1.000000e+00 : f32
    %152 = vector.broadcast %cst_44 : f32 to vector<2x32xf32>
    %153 = arith.addf %152, %151 : vector<2x32xf32>
    %154 = arith.divf %152, %153 : vector<2x32xf32>
    %155 = arith.mulf %146, %125 : vector<2x32xf32>
    %156 = arith.mulf %140, %148 : vector<2x32xf32>
    %157 = arith.addf %155, %156 : vector<2x32xf32>
    %158 = math.tanh %157 : vector<2x32xf32>
    %159 = arith.mulf %154, %158 : vector<2x32xf32>
    %c0_45 = arith.constant 0 : index
    %c4_46 = arith.constant 4 : index
    %c0_47 = arith.constant 0 : index
    %160 = vector.load %arg3[%c0_45, %c4_46, %c0_47] : memref<2x8x32xf32, #tpu.memory_space<vmem>>, vector<2x1x32xf32>
    %161 = vector.shape_cast %160 : vector<2x1x32xf32> to vector<2x32xf32>
    %162 = vector.shape_cast %159 : vector<2x32xf32> to vector<2x1x32xf32>
    tpu.vector_store %arg3[%c0_45, %c4_46, %c0_47], %162 {strides = array<i32>} : memref<2x8x32xf32, #tpu.memory_space<vmem>>, vector<2x1x32xf32>,
    %c5 = arith.constant 5 : index
    %c0_48 = arith.constant 0 : index
    %c0_49 = arith.constant 0 : index
    %163 = vector.load %arg1[%c5, %c0_48, %c0_49] : memref<8x2x128xf32, #tpu.memory_space<vmem>>, vector<1x2x128xf32>
    %164 = vector.shape_cast %163 : vector<1x2x128xf32> to vector<2x128xf32>
    %cst_50 = arith.constant dense<0.000000e+00> : vector<2x128xf32>
    %165 = tpu.matmul %159, %0, %cst_50 {dimension_numbers = #tpu.dot_dimension_numbers<[1], [0], [0], [1], [0, 0, 1, 1], [], []>} : vector<2x32xf32>, vector<32x128xf32>, vector<2x128xf32> -> vector<2x128xf32>
    %166 = arith.addf %164, %165 : vector<2x128xf32>
    %167 = vector.extract_strided_slice %166 {offsets = [0, 0], sizes = [2, 32], strides = [1, 1]} : vector<2x128xf32> to vector<2x32xf32>
    %168 = arith.negf %167 : vector<2x32xf32>
    %169 = math.exp %168 : vector<2x32xf32>
    %cst_51 = arith.constant 1.000000e+00 : f32
    %170 = vector.broadcast %cst_51 : f32 to vector<2x32xf32>
    %171 = arith.addf %170, %169 : vector<2x32xf32>
    %172 = arith.divf %170, %171 : vector<2x32xf32>
    %173 = vector.extract_strided_slice %166 {offsets = [0, 32], sizes = [2, 32], strides = [1, 1]} : vector<2x128xf32> to vector<2x32xf32>
    %174 = arith.negf %173 : vector<2x32xf32>
    %175 = math.exp %174 : vector<2x32xf32>
    %cst_52 = arith.constant 1.000000e+00 : f32
    %176 = vector.broadcast %cst_52 : f32 to vector<2x32xf32>
    %177 = arith.addf %176, %175 : vector<2x32xf32>
    %178 = arith.divf %176, %177 : vector<2x32xf32>
    %179 = vector.extract_strided_slice %166 {offsets = [0, 64], sizes = [2, 32], strides = [1, 1]} : vector<2x128xf32> to vector<2x32xf32>
    %180 = math.tanh %179 : vector<2x32xf32>
    %181 = vector.extract_strided_slice %166 {offsets = [0, 96], sizes = [2, 32], strides = [1, 1]} : vector<2x128xf32> to vector<2x32xf32>
    %182 = arith.negf %181 : vector<2x32xf32>
    %183 = math.exp %182 : vector<2x32xf32>
    %cst_53 = arith.constant 1.000000e+00 : f32
    %184 = vector.broadcast %cst_53 : f32 to vector<2x32xf32>
    %185 = arith.addf %184, %183 : vector<2x32xf32>
    %186 = arith.divf %184, %185 : vector<2x32xf32>
    %187 = arith.mulf %178, %157 : vector<2x32xf32>
    %188 = arith.mulf %172, %180 : vector<2x32xf32>
    %189 = arith.addf %187, %188 : vector<2x32xf32>
    %190 = math.tanh %189 : vector<2x32xf32>
    %191 = arith.mulf %186, %190 : vector<2x32xf32>
    %c0_54 = arith.constant 0 : index
    %c5_55 = arith.constant 5 : index
    %c0_56 = arith.constant 0 : index
    %192 = vector.load %arg3[%c0_54, %c5_55, %c0_56] : memref<2x8x32xf32, #tpu.memory_space<vmem>>, vector<2x1x32xf32>
    %193 = vector.shape_cast %192 : vector<2x1x32xf32> to vector<2x32xf32>
    %194 = vector.shape_cast %191 : vector<2x32xf32> to vector<2x1x32xf32>
    tpu.vector_store %arg3[%c0_54, %c5_55, %c0_56], %194 {strides = array<i32>} : memref<2x8x32xf32, #tpu.memory_space<vmem>>, vector<2x1x32xf32>,
    %c6 = arith.constant 6 : index
    %c0_57 = arith.constant 0 : index
    %c0_58 = arith.constant 0 : index
    %195 = vector.load %arg1[%c6, %c0_57, %c0_58] : memref<8x2x128xf32, #tpu.memory_space<vmem>>, vector<1x2x128xf32>
    %196 = vector.shape_cast %195 : vector<1x2x128xf32> to vector<2x128xf32>
    %cst_59 = arith.constant dense<0.000000e+00> : vector<2x128xf32>
    %197 = tpu.matmul %191, %0, %cst_59 {dimension_numbers = #tpu.dot_dimension_numbers<[1], [0], [0], [1], [0, 0, 1, 1], [], []>} : vector<2x32xf32>, vector<32x128xf32>, vector<2x128xf32> -> vector<2x128xf32>
    %198 = arith.addf %196, %197 : vector<2x128xf32>
    %199 = vector.extract_strided_slice %198 {offsets = [0, 0], sizes = [2, 32], strides = [1, 1]} : vector<2x128xf32> to vector<2x32xf32>
    %200 = arith.negf %199 : vector<2x32xf32>
    %201 = math.exp %200 : vector<2x32xf32>
    %cst_60 = arith.constant 1.000000e+00 : f32
    %202 = vector.broadcast %cst_60 : f32 to vector<2x32xf32>
    %203 = arith.addf %202, %201 : vector<2x32xf32>
    %204 = arith.divf %202, %203 : vector<2x32xf32>
    %205 = vector.extract_strided_slice %198 {offsets = [0, 32], sizes = [2, 32], strides = [1, 1]} : vector<2x128xf32> to vector<2x32xf32>
    %206 = arith.negf %205 : vector<2x32xf32>
    %207 = math.exp %206 : vector<2x32xf32>
    %cst_61 = arith.constant 1.000000e+00 : f32
    %208 = vector.broadcast %cst_61 : f32 to vector<2x32xf32>
    %209 = arith.addf %208, %207 : vector<2x32xf32>
    %210 = arith.divf %208, %209 : vector<2x32xf32>
    %211 = vector.extract_strided_slice %198 {offsets = [0, 64], sizes = [2, 32], strides = [1, 1]} : vector<2x128xf32> to vector<2x32xf32>
    %212 = math.tanh %211 : vector<2x32xf32>
    %213 = vector.extract_strided_slice %198 {offsets = [0, 96], sizes = [2, 32], strides = [1, 1]} : vector<2x128xf32> to vector<2x32xf32>
    %214 = arith.negf %213 : vector<2x32xf32>
    %215 = math.exp %214 : vector<2x32xf32>
    %cst_62 = arith.constant 1.000000e+00 : f32
    %216 = vector.broadcast %cst_62 : f32 to vector<2x32xf32>
    %217 = arith.addf %216, %215 : vector<2x32xf32>
    %218 = arith.divf %216, %217 : vector<2x32xf32>
    %219 = arith.mulf %210, %189 : vector<2x32xf32>
    %220 = arith.mulf %204, %212 : vector<2x32xf32>
    %221 = arith.addf %219, %220 : vector<2x32xf32>
    %222 = math.tanh %221 : vector<2x32xf32>
    %223 = arith.mulf %218, %222 : vector<2x32xf32>
    %c0_63 = arith.constant 0 : index
    %c6_64 = arith.constant 6 : index
    %c0_65 = arith.constant 0 : index
    %224 = vector.load %arg3[%c0_63, %c6_64, %c0_65] : memref<2x8x32xf32, #tpu.memory_space<vmem>>, vector<2x1x32xf32>
    %225 = vector.shape_cast %224 : vector<2x1x32xf32> to vector<2x32xf32>
    %226 = vector.shape_cast %223 : vector<2x32xf32> to vector<2x1x32xf32>
    tpu.vector_store %arg3[%c0_63, %c6_64, %c0_65], %226 {strides = array<i32>} : memref<2x8x32xf32, #tpu.memory_space<vmem>>, vector<2x1x32xf32>,
    %c7 = arith.constant 7 : index
    %c0_66 = arith.constant 0 : index
    %c0_67 = arith.constant 0 : index
    %227 = vector.load %arg1[%c7, %c0_66, %c0_67] : memref<8x2x128xf32, #tpu.memory_space<vmem>>, vector<1x2x128xf32>
    %228 = vector.shape_cast %227 : vector<1x2x128xf32> to vector<2x128xf32>
    %cst_68 = arith.constant dense<0.000000e+00> : vector<2x128xf32>
    %229 = tpu.matmul %223, %0, %cst_68 {dimension_numbers = #tpu.dot_dimension_numbers<[1], [0], [0], [1], [0, 0, 1, 1], [], []>} : vector<2x32xf32>, vector<32x128xf32>, vector<2x128xf32> -> vector<2x128xf32>
    %230 = arith.addf %228, %229 : vector<2x128xf32>
    %231 = vector.extract_strided_slice %230 {offsets = [0, 0], sizes = [2, 32], strides = [1, 1]} : vector<2x128xf32> to vector<2x32xf32>
    %232 = arith.negf %231 : vector<2x32xf32>
    %233 = math.exp %232 : vector<2x32xf32>
    %cst_69 = arith.constant 1.000000e+00 : f32
    %234 = vector.broadcast %cst_69 : f32 to vector<2x32xf32>
    %235 = arith.addf %234, %233 : vector<2x32xf32>
    %236 = arith.divf %234, %235 : vector<2x32xf32>
    %237 = vector.extract_strided_slice %230 {offsets = [0, 32], sizes = [2, 32], strides = [1, 1]} : vector<2x128xf32> to vector<2x32xf32>
    %238 = arith.negf %237 : vector<2x32xf32>
    %239 = math.exp %238 : vector<2x32xf32>
    %cst_70 = arith.constant 1.000000e+00 : f32
    %240 = vector.broadcast %cst_70 : f32 to vector<2x32xf32>
    %241 = arith.addf %240, %239 : vector<2x32xf32>
    %242 = arith.divf %240, %241 : vector<2x32xf32>
    %243 = vector.extract_strided_slice %230 {offsets = [0, 64], sizes = [2, 32], strides = [1, 1]} : vector<2x128xf32> to vector<2x32xf32>
    %244 = math.tanh %243 : vector<2x32xf32>
    %245 = vector.extract_strided_slice %230 {offsets = [0, 96], sizes = [2, 32], strides = [1, 1]} : vector<2x128xf32> to vector<2x32xf32>
    %246 = arith.negf %245 : vector<2x32xf32>
    %247 = math.exp %246 : vector<2x32xf32>
    %cst_71 = arith.constant 1.000000e+00 : f32
    %248 = vector.broadcast %cst_71 : f32 to vector<2x32xf32>
    %249 = arith.addf %248, %247 : vector<2x32xf32>
    %250 = arith.divf %248, %249 : vector<2x32xf32>
    %251 = arith.mulf %242, %221 : vector<2x32xf32>
    %252 = arith.mulf %236, %244 : vector<2x32xf32>
    %253 = arith.addf %251, %252 : vector<2x32xf32>
    %254 = math.tanh %253 : vector<2x32xf32>
    %255 = arith.mulf %250, %254 : vector<2x32xf32>
    %c0_72 = arith.constant 0 : index
    %c7_73 = arith.constant 7 : index
    %c0_74 = arith.constant 0 : index
    %256 = vector.load %arg3[%c0_72, %c7_73, %c0_74] : memref<2x8x32xf32, #tpu.memory_space<vmem>>, vector<2x1x32xf32>
    %257 = vector.shape_cast %256 : vector<2x1x32xf32> to vector<2x32xf32>
    %258 = vector.shape_cast %255 : vector<2x32xf32> to vector<2x1x32xf32>
    tpu.vector_store %arg3[%c0_72, %c7_73, %c0_74], %258 {strides = array<i32>} : memref<2x8x32xf32, #tpu.memory_space<vmem>>, vector<2x1x32xf32>,
    %c0_75 = arith.constant 0 : index
    %c0_76 = arith.constant 0 : index
    %c0_77 = arith.constant 0 : index
    %259 = vector.load %arg4[%c0_75, %c0_76, %c0_77] : memref<1x2x32xf32, #tpu.memory_space<vmem>>, vector<1x2x32xf32>
    %260 = vector.shape_cast %259 : vector<1x2x32xf32> to vector<2x32xf32>
    %261 = vector.shape_cast %255 : vector<2x32xf32> to vector<1x2x32xf32>
    tpu.vector_store %arg4[%c0_75, %c0_76, %c0_77], %261 {strides = array<i32>} : memref<1x2x32xf32, #tpu.memory_space<vmem>>, vector<1x2x32xf32>,
    %c0_78 = arith.constant 0 : index
    %c0_79 = arith.constant 0 : index
    %c0_80 = arith.constant 0 : index
    %262 = vector.load %arg5[%c0_78, %c0_79, %c0_80] : memref<1x2x32xf32, #tpu.memory_space<vmem>>, vector<1x2x32xf32>
    %263 = vector.shape_cast %262 : vector<1x2x32xf32> to vector<2x32xf32>
    %264 = vector.shape_cast %253 : vector<2x32xf32> to vector<1x2x32xf32>
    tpu.vector_store %arg5[%c0_78, %c0_79, %c0_80], %264 {strides = array<i32>} : memref<1x2x32xf32, #tpu.memory_space<vmem>>, vector<1x2x32xf32>,
    return
  }
  func.func @transform_0(%arg0: i32) -> (i32, i32, i32) {
    %c0_i32 = arith.constant 0 : i32
    %c0_i32_0 = arith.constant 0 : i32
    %c0_i32_1 = arith.constant 0 : i32
    %c0_i32_2 = arith.constant 0 : i32
    return %c0_i32, %c0_i32_0, %c0_i32_1 : i32, i32, i32
  }
  func.func @transform_1(%arg0: i32) -> (i32, i32) {
    %c0_i32 = arith.constant 0 : i32
    %c0_i32_0 = arith.constant 0 : i32
    %c0_i32_1 = arith.constant 0 : i32
    return %c0_i32, %c0_i32_0 : i32, i32
  }
  func.func @transform_2(%arg0: i32) -> (i32, i32, i32) {
    %c0_i32 = arith.constant 0 : i32
    %c0_i32_0 = arith.constant 0 : i32
    %c0_i32_1 = arith.constant 0 : i32
    %c0_i32_2 = arith.constant 0 : i32
    return %c0_i32, %c0_i32_0, %c0_i32_1 : i32, i32, i32
  }
  func.func @transform_3(%arg0: i32) -> (i32, i32, i32) {
    %c0_i32 = arith.constant 0 : i32
    %c0_i32_0 = arith.constant 0 : i32
    %c0_i32_1 = arith.constant 0 : i32
    %c0_i32_2 = arith.constant 0 : i32
    return %c0_i32, %c0_i32_0, %c0_i32_1 : i32, i32, i32
  }
  func.func @transform_4(%arg0: i32) -> (i32, i32, i32) {
    %c0_i32 = arith.constant 0 : i32
    %c0_i32_0 = arith.constant 0 : i32
    %c0_i32_1 = arith.constant 0 : i32
    %c0_i32_2 = arith.constant 0 : i32
    return %c0_i32, %c0_i32_0, %c0_i32_1 : i32, i32, i32
  }
}

module attributes {stable_mosaic.version = 11 : i64} {
  func.func @_dec_attn_lstm_kernel(%arg0: i32, %arg1: memref<7x2x128xf32, #tpu.memory_space<vmem>>, %arg2: memref<32x128xf32, #tpu.memory_space<vmem>>, %arg3: memref<32x32xf32, #tpu.memory_space<vmem>>, %arg4: memref<32x32xf32, #tpu.memory_space<vmem>>, %arg5: memref<32x32xf32, #tpu.memory_space<vmem>>, %arg6: memref<2x8x32xf32, #tpu.memory_space<vmem>>, %arg7: memref<1x2x32xf32, #tpu.memory_space<vmem>>, %arg8: memref<1x2x32xf32, #tpu.memory_space<vmem>>, %arg9: memref<1x2x32xf32, #tpu.memory_space<vmem>>, %arg10: memref<2x7x32xf32, #tpu.memory_space<vmem>>, %arg11: memref<2x7x8xf32, #tpu.memory_space<vmem>>, %arg12: memref<1x2x32xf32, #tpu.memory_space<vmem>>, %arg13: memref<1x2x32xf32, #tpu.memory_space<vmem>>, %arg14: memref<2x7x32xf32, #tpu.memory_space<vmem>>) attributes {dimension_semantics = [#tpu.dimension_semantics<arbitrary>], iteration_bounds = array<i64: 1>, scalar_prefetch = 0 : i64, scratch_operands = 1 : i64, tpu.core_type = #tpu.core_type<tc>, window_params = [{pipeline_mode = #tpu.pipeline_mode<synchronous>, transform_indices = @transform_0, window_bounds = array<i64: 7, 2, 128>}, {pipeline_mode = #tpu.pipeline_mode<synchronous>, transform_indices = @transform_1, window_bounds = array<i64: 32, 128>}, {pipeline_mode = #tpu.pipeline_mode<synchronous>, transform_indices = @transform_2, window_bounds = array<i64: 32, 32>}, {pipeline_mode = #tpu.pipeline_mode<synchronous>, transform_indices = @transform_3, window_bounds = array<i64: 32, 32>}, {pipeline_mode = #tpu.pipeline_mode<synchronous>, transform_indices = @transform_4, window_bounds = array<i64: 32, 32>}, {pipeline_mode = #tpu.pipeline_mode<synchronous>, transform_indices = @transform_5, window_bounds = array<i64: 2, 8, 32>}, {pipeline_mode = #tpu.pipeline_mode<synchronous>, transform_indices = @transform_6, window_bounds = array<i64: 1, 2, 32>}, {pipeline_mode = #tpu.pipeline_mode<synchronous>, transform_indices = @transform_7, window_bounds = array<i64: 1, 2, 32>}, {pipeline_mode = #tpu.pipeline_mode<synchronous>, transform_indices = @transform_8, window_bounds = array<i64: 1, 2, 32>}, {pipeline_mode = #tpu.pipeline_mode<synchronous>, transform_indices = @transform_9, window_bounds = array<i64: 2, 7, 32>}, {pipeline_mode = #tpu.pipeline_mode<synchronous>, transform_indices = @transform_10, window_bounds = array<i64: 2, 7, 8>}, {pipeline_mode = #tpu.pipeline_mode<synchronous>, transform_indices = @transform_11, window_bounds = array<i64: 1, 2, 32>}, {pipeline_mode = #tpu.pipeline_mode<synchronous>, transform_indices = @transform_12, window_bounds = array<i64: 1, 2, 32>}]} {
    %c0 = arith.constant 0 : index
    %c0_0 = arith.constant 0 : index
    %0 = vector.load %arg2[%c0, %c0_0] : memref<32x128xf32, #tpu.memory_space<vmem>>, vector<32x128xf32>
    %c0_1 = arith.constant 0 : index
    %c0_2 = arith.constant 0 : index
    %c0_3 = arith.constant 0 : index
    %1 = vector.load %arg9[%c0_1, %c0_2, %c0_3] : memref<1x2x32xf32, #tpu.memory_space<vmem>>, vector<1x2x32xf32>
    %2 = vector.shape_cast %1 : vector<1x2x32xf32> to vector<2x32xf32>
    %c0_4 = arith.constant 0 : index
    %c0_5 = arith.constant 0 : index
    %c0_6 = arith.constant 0 : index
    %3 = vector.load %arg7[%c0_4, %c0_5, %c0_6] : memref<1x2x32xf32, #tpu.memory_space<vmem>>, vector<1x2x32xf32>
    %4 = vector.shape_cast %3 : vector<1x2x32xf32> to vector<2x32xf32>
    %5 = arith.addf %4, %2 : vector<2x32xf32>
    %c0_7 = arith.constant 0 : index
    %c0_8 = arith.constant 0 : index
    %c0_9 = arith.constant 0 : index
    %6 = vector.load %arg8[%c0_7, %c0_8, %c0_9] : memref<1x2x32xf32, #tpu.memory_space<vmem>>, vector<1x2x32xf32>
    %7 = vector.shape_cast %6 : vector<1x2x32xf32> to vector<2x32xf32>
    %8 = arith.addf %7, %2 : vector<2x32xf32>
    %c0_10 = arith.constant 0 : index
    %c0_11 = arith.constant 0 : index
    %c0_12 = arith.constant 0 : index
    %9 = vector.load %arg1[%c0_10, %c0_11, %c0_12] : memref<7x2x128xf32, #tpu.memory_space<vmem>>, vector<1x2x128xf32>
    %10 = vector.shape_cast %9 : vector<1x2x128xf32> to vector<2x128xf32>
    %cst = arith.constant dense<0.000000e+00> : vector<2x128xf32>
    %11 = tpu.matmul %5, %0, %cst {dimension_numbers = #tpu.dot_dimension_numbers<[1], [0], [0], [1], [0, 0, 1, 1], [], []>} : vector<2x32xf32>, vector<32x128xf32>, vector<2x128xf32> -> vector<2x128xf32>
    %12 = arith.addf %10, %11 : vector<2x128xf32>
    %13 = vector.extract_strided_slice %12 {offsets = [0, 0], sizes = [2, 32], strides = [1, 1]} : vector<2x128xf32> to vector<2x32xf32>
    %14 = arith.negf %13 : vector<2x32xf32>
    %15 = math.exp %14 : vector<2x32xf32>
    %cst_13 = arith.constant 1.000000e+00 : f32
    %16 = vector.broadcast %cst_13 : f32 to vector<2x32xf32>
    %17 = arith.addf %16, %15 : vector<2x32xf32>
    %18 = arith.divf %16, %17 : vector<2x32xf32>
    %19 = vector.extract_strided_slice %12 {offsets = [0, 32], sizes = [2, 32], strides = [1, 1]} : vector<2x128xf32> to vector<2x32xf32>
    %20 = arith.negf %19 : vector<2x32xf32>
    %21 = math.exp %20 : vector<2x32xf32>
    %cst_14 = arith.constant 1.000000e+00 : f32
    %22 = vector.broadcast %cst_14 : f32 to vector<2x32xf32>
    %23 = arith.addf %22, %21 : vector<2x32xf32>
    %24 = arith.divf %22, %23 : vector<2x32xf32>
    %25 = vector.extract_strided_slice %12 {offsets = [0, 64], sizes = [2, 32], strides = [1, 1]} : vector<2x128xf32> to vector<2x32xf32>
    %26 = math.tanh %25 : vector<2x32xf32>
    %27 = vector.extract_strided_slice %12 {offsets = [0, 96], sizes = [2, 32], strides = [1, 1]} : vector<2x128xf32> to vector<2x32xf32>
    %28 = arith.negf %27 : vector<2x32xf32>
    %29 = math.exp %28 : vector<2x32xf32>
    %cst_15 = arith.constant 1.000000e+00 : f32
    %30 = vector.broadcast %cst_15 : f32 to vector<2x32xf32>
    %31 = arith.addf %30, %29 : vector<2x32xf32>
    %32 = arith.divf %30, %31 : vector<2x32xf32>
    %33 = arith.mulf %24, %8 : vector<2x32xf32>
    %34 = arith.mulf %18, %26 : vector<2x32xf32>
    %35 = arith.addf %33, %34 : vector<2x32xf32>
    %36 = math.tanh %35 : vector<2x32xf32>
    %37 = arith.mulf %32, %36 : vector<2x32xf32>
    %c0_16 = arith.constant 0 : index
    %c0_17 = arith.constant 0 : index
    %c0_18 = arith.constant 0 : index
    %38 = vector.load %arg14[%c0_16, %c0_17, %c0_18] : memref<2x7x32xf32, #tpu.memory_space<vmem>>, vector<2x1x32xf32>
    %39 = vector.shape_cast %38 : vector<2x1x32xf32> to vector<2x32xf32>
    %40 = vector.shape_cast %37 : vector<2x32xf32> to vector<2x1x32xf32>
    tpu.vector_store %arg14[%c0_16, %c0_17, %c0_18], %40 {strides = array<i32>} : memref<2x7x32xf32, #tpu.memory_space<vmem>>, vector<2x1x32xf32>,
    %c1 = arith.constant 1 : index
    %c0_19 = arith.constant 0 : index
    %c0_20 = arith.constant 0 : index
    %41 = vector.load %arg1[%c1, %c0_19, %c0_20] : memref<7x2x128xf32, #tpu.memory_space<vmem>>, vector<1x2x128xf32>
    %42 = vector.shape_cast %41 : vector<1x2x128xf32> to vector<2x128xf32>
    %cst_21 = arith.constant dense<0.000000e+00> : vector<2x128xf32>
    %43 = tpu.matmul %37, %0, %cst_21 {dimension_numbers = #tpu.dot_dimension_numbers<[1], [0], [0], [1], [0, 0, 1, 1], [], []>} : vector<2x32xf32>, vector<32x128xf32>, vector<2x128xf32> -> vector<2x128xf32>
    %44 = arith.addf %42, %43 : vector<2x128xf32>
    %45 = vector.extract_strided_slice %44 {offsets = [0, 0], sizes = [2, 32], strides = [1, 1]} : vector<2x128xf32> to vector<2x32xf32>
    %46 = arith.negf %45 : vector<2x32xf32>
    %47 = math.exp %46 : vector<2x32xf32>
    %cst_22 = arith.constant 1.000000e+00 : f32
    %48 = vector.broadcast %cst_22 : f32 to vector<2x32xf32>
    %49 = arith.addf %48, %47 : vector<2x32xf32>
    %50 = arith.divf %48, %49 : vector<2x32xf32>
    %51 = vector.extract_strided_slice %44 {offsets = [0, 32], sizes = [2, 32], strides = [1, 1]} : vector<2x128xf32> to vector<2x32xf32>
    %52 = arith.negf %51 : vector<2x32xf32>
    %53 = math.exp %52 : vector<2x32xf32>
    %cst_23 = arith.constant 1.000000e+00 : f32
    %54 = vector.broadcast %cst_23 : f32 to vector<2x32xf32>
    %55 = arith.addf %54, %53 : vector<2x32xf32>
    %56 = arith.divf %54, %55 : vector<2x32xf32>
    %57 = vector.extract_strided_slice %44 {offsets = [0, 64], sizes = [2, 32], strides = [1, 1]} : vector<2x128xf32> to vector<2x32xf32>
    %58 = math.tanh %57 : vector<2x32xf32>
    %59 = vector.extract_strided_slice %44 {offsets = [0, 96], sizes = [2, 32], strides = [1, 1]} : vector<2x128xf32> to vector<2x32xf32>
    %60 = arith.negf %59 : vector<2x32xf32>
    %61 = math.exp %60 : vector<2x32xf32>
    %cst_24 = arith.constant 1.000000e+00 : f32
    %62 = vector.broadcast %cst_24 : f32 to vector<2x32xf32>
    %63 = arith.addf %62, %61 : vector<2x32xf32>
    %64 = arith.divf %62, %63 : vector<2x32xf32>
    %65 = arith.mulf %56, %35 : vector<2x32xf32>
    %66 = arith.mulf %50, %58 : vector<2x32xf32>
    %67 = arith.addf %65, %66 : vector<2x32xf32>
    %68 = math.tanh %67 : vector<2x32xf32>
    %69 = arith.mulf %64, %68 : vector<2x32xf32>
    %c0_25 = arith.constant 0 : index
    %c1_26 = arith.constant 1 : index
    %c0_27 = arith.constant 0 : index
    %70 = vector.load %arg14[%c0_25, %c1_26, %c0_27] : memref<2x7x32xf32, #tpu.memory_space<vmem>>, vector<2x1x32xf32>
    %71 = vector.shape_cast %70 : vector<2x1x32xf32> to vector<2x32xf32>
    %72 = vector.shape_cast %69 : vector<2x32xf32> to vector<2x1x32xf32>
    tpu.vector_store %arg14[%c0_25, %c1_26, %c0_27], %72 {strides = array<i32>} : memref<2x7x32xf32, #tpu.memory_space<vmem>>, vector<2x1x32xf32>,
    %c2 = arith.constant 2 : index
    %c0_28 = arith.constant 0 : index
    %c0_29 = arith.constant 0 : index
    %73 = vector.load %arg1[%c2, %c0_28, %c0_29] : memref<7x2x128xf32, #tpu.memory_space<vmem>>, vector<1x2x128xf32>
    %74 = vector.shape_cast %73 : vector<1x2x128xf32> to vector<2x128xf32>
    %cst_30 = arith.constant dense<0.000000e+00> : vector<2x128xf32>
    %75 = tpu.matmul %69, %0, %cst_30 {dimension_numbers = #tpu.dot_dimension_numbers<[1], [0], [0], [1], [0, 0, 1, 1], [], []>} : vector<2x32xf32>, vector<32x128xf32>, vector<2x128xf32> -> vector<2x128xf32>
    %76 = arith.addf %74, %75 : vector<2x128xf32>
    %77 = vector.extract_strided_slice %76 {offsets = [0, 0], sizes = [2, 32], strides = [1, 1]} : vector<2x128xf32> to vector<2x32xf32>
    %78 = arith.negf %77 : vector<2x32xf32>
    %79 = math.exp %78 : vector<2x32xf32>
    %cst_31 = arith.constant 1.000000e+00 : f32
    %80 = vector.broadcast %cst_31 : f32 to vector<2x32xf32>
    %81 = arith.addf %80, %79 : vector<2x32xf32>
    %82 = arith.divf %80, %81 : vector<2x32xf32>
    %83 = vector.extract_strided_slice %76 {offsets = [0, 32], sizes = [2, 32], strides = [1, 1]} : vector<2x128xf32> to vector<2x32xf32>
    %84 = arith.negf %83 : vector<2x32xf32>
    %85 = math.exp %84 : vector<2x32xf32>
    %cst_32 = arith.constant 1.000000e+00 : f32
    %86 = vector.broadcast %cst_32 : f32 to vector<2x32xf32>
    %87 = arith.addf %86, %85 : vector<2x32xf32>
    %88 = arith.divf %86, %87 : vector<2x32xf32>
    %89 = vector.extract_strided_slice %76 {offsets = [0, 64], sizes = [2, 32], strides = [1, 1]} : vector<2x128xf32> to vector<2x32xf32>
    %90 = math.tanh %89 : vector<2x32xf32>
    %91 = vector.extract_strided_slice %76 {offsets = [0, 96], sizes = [2, 32], strides = [1, 1]} : vector<2x128xf32> to vector<2x32xf32>
    %92 = arith.negf %91 : vector<2x32xf32>
    %93 = math.exp %92 : vector<2x32xf32>
    %cst_33 = arith.constant 1.000000e+00 : f32
    %94 = vector.broadcast %cst_33 : f32 to vector<2x32xf32>
    %95 = arith.addf %94, %93 : vector<2x32xf32>
    %96 = arith.divf %94, %95 : vector<2x32xf32>
    %97 = arith.mulf %88, %67 : vector<2x32xf32>
    %98 = arith.mulf %82, %90 : vector<2x32xf32>
    %99 = arith.addf %97, %98 : vector<2x32xf32>
    %100 = math.tanh %99 : vector<2x32xf32>
    %101 = arith.mulf %96, %100 : vector<2x32xf32>
    %c0_34 = arith.constant 0 : index
    %c2_35 = arith.constant 2 : index
    %c0_36 = arith.constant 0 : index
    %102 = vector.load %arg14[%c0_34, %c2_35, %c0_36] : memref<2x7x32xf32, #tpu.memory_space<vmem>>, vector<2x1x32xf32>
    %103 = vector.shape_cast %102 : vector<2x1x32xf32> to vector<2x32xf32>
    %104 = vector.shape_cast %101 : vector<2x32xf32> to vector<2x1x32xf32>
    tpu.vector_store %arg14[%c0_34, %c2_35, %c0_36], %104 {strides = array<i32>} : memref<2x7x32xf32, #tpu.memory_space<vmem>>, vector<2x1x32xf32>,
    %c3 = arith.constant 3 : index
    %c0_37 = arith.constant 0 : index
    %c0_38 = arith.constant 0 : index
    %105 = vector.load %arg1[%c3, %c0_37, %c0_38] : memref<7x2x128xf32, #tpu.memory_space<vmem>>, vector<1x2x128xf32>
    %106 = vector.shape_cast %105 : vector<1x2x128xf32> to vector<2x128xf32>
    %cst_39 = arith.constant dense<0.000000e+00> : vector<2x128xf32>
    %107 = tpu.matmul %101, %0, %cst_39 {dimension_numbers = #tpu.dot_dimension_numbers<[1], [0], [0], [1], [0, 0, 1, 1], [], []>} : vector<2x32xf32>, vector<32x128xf32>, vector<2x128xf32> -> vector<2x128xf32>
    %108 = arith.addf %106, %107 : vector<2x128xf32>
    %109 = vector.extract_strided_slice %108 {offsets = [0, 0], sizes = [2, 32], strides = [1, 1]} : vector<2x128xf32> to vector<2x32xf32>
    %110 = arith.negf %109 : vector<2x32xf32>
    %111 = math.exp %110 : vector<2x32xf32>
    %cst_40 = arith.constant 1.000000e+00 : f32
    %112 = vector.broadcast %cst_40 : f32 to vector<2x32xf32>
    %113 = arith.addf %112, %111 : vector<2x32xf32>
    %114 = arith.divf %112, %113 : vector<2x32xf32>
    %115 = vector.extract_strided_slice %108 {offsets = [0, 32], sizes = [2, 32], strides = [1, 1]} : vector<2x128xf32> to vector<2x32xf32>
    %116 = arith.negf %115 : vector<2x32xf32>
    %117 = math.exp %116 : vector<2x32xf32>
    %cst_41 = arith.constant 1.000000e+00 : f32
    %118 = vector.broadcast %cst_41 : f32 to vector<2x32xf32>
    %119 = arith.addf %118, %117 : vector<2x32xf32>
    %120 = arith.divf %118, %119 : vector<2x32xf32>
    %121 = vector.extract_strided_slice %108 {offsets = [0, 64], sizes = [2, 32], strides = [1, 1]} : vector<2x128xf32> to vector<2x32xf32>
    %122 = math.tanh %121 : vector<2x32xf32>
    %123 = vector.extract_strided_slice %108 {offsets = [0, 96], sizes = [2, 32], strides = [1, 1]} : vector<2x128xf32> to vector<2x32xf32>
    %124 = arith.negf %123 : vector<2x32xf32>
    %125 = math.exp %124 : vector<2x32xf32>
    %cst_42 = arith.constant 1.000000e+00 : f32
    %126 = vector.broadcast %cst_42 : f32 to vector<2x32xf32>
    %127 = arith.addf %126, %125 : vector<2x32xf32>
    %128 = arith.divf %126, %127 : vector<2x32xf32>
    %129 = arith.mulf %120, %99 : vector<2x32xf32>
    %130 = arith.mulf %114, %122 : vector<2x32xf32>
    %131 = arith.addf %129, %130 : vector<2x32xf32>
    %132 = math.tanh %131 : vector<2x32xf32>
    %133 = arith.mulf %128, %132 : vector<2x32xf32>
    %c0_43 = arith.constant 0 : index
    %c3_44 = arith.constant 3 : index
    %c0_45 = arith.constant 0 : index
    %134 = vector.load %arg14[%c0_43, %c3_44, %c0_45] : memref<2x7x32xf32, #tpu.memory_space<vmem>>, vector<2x1x32xf32>
    %135 = vector.shape_cast %134 : vector<2x1x32xf32> to vector<2x32xf32>
    %136 = vector.shape_cast %133 : vector<2x32xf32> to vector<2x1x32xf32>
    tpu.vector_store %arg14[%c0_43, %c3_44, %c0_45], %136 {strides = array<i32>} : memref<2x7x32xf32, #tpu.memory_space<vmem>>, vector<2x1x32xf32>,
    %c4 = arith.constant 4 : index
    %c0_46 = arith.constant 0 : index
    %c0_47 = arith.constant 0 : index
    %137 = vector.load %arg1[%c4, %c0_46, %c0_47] : memref<7x2x128xf32, #tpu.memory_space<vmem>>, vector<1x2x128xf32>
    %138 = vector.shape_cast %137 : vector<1x2x128xf32> to vector<2x128xf32>
    %cst_48 = arith.constant dense<0.000000e+00> : vector<2x128xf32>
    %139 = tpu.matmul %133, %0, %cst_48 {dimension_numbers = #tpu.dot_dimension_numbers<[1], [0], [0], [1], [0, 0, 1, 1], [], []>} : vector<2x32xf32>, vector<32x128xf32>, vector<2x128xf32> -> vector<2x128xf32>
    %140 = arith.addf %138, %139 : vector<2x128xf32>
    %141 = vector.extract_strided_slice %140 {offsets = [0, 0], sizes = [2, 32], strides = [1, 1]} : vector<2x128xf32> to vector<2x32xf32>
    %142 = arith.negf %141 : vector<2x32xf32>
    %143 = math.exp %142 : vector<2x32xf32>
    %cst_49 = arith.constant 1.000000e+00 : f32
    %144 = vector.broadcast %cst_49 : f32 to vector<2x32xf32>
    %145 = arith.addf %144, %143 : vector<2x32xf32>
    %146 = arith.divf %144, %145 : vector<2x32xf32>
    %147 = vector.extract_strided_slice %140 {offsets = [0, 32], sizes = [2, 32], strides = [1, 1]} : vector<2x128xf32> to vector<2x32xf32>
    %148 = arith.negf %147 : vector<2x32xf32>
    %149 = math.exp %148 : vector<2x32xf32>
    %cst_50 = arith.constant 1.000000e+00 : f32
    %150 = vector.broadcast %cst_50 : f32 to vector<2x32xf32>
    %151 = arith.addf %150, %149 : vector<2x32xf32>
    %152 = arith.divf %150, %151 : vector<2x32xf32>
    %153 = vector.extract_strided_slice %140 {offsets = [0, 64], sizes = [2, 32], strides = [1, 1]} : vector<2x128xf32> to vector<2x32xf32>
    %154 = math.tanh %153 : vector<2x32xf32>
    %155 = vector.extract_strided_slice %140 {offsets = [0, 96], sizes = [2, 32], strides = [1, 1]} : vector<2x128xf32> to vector<2x32xf32>
    %156 = arith.negf %155 : vector<2x32xf32>
    %157 = math.exp %156 : vector<2x32xf32>
    %cst_51 = arith.constant 1.000000e+00 : f32
    %158 = vector.broadcast %cst_51 : f32 to vector<2x32xf32>
    %159 = arith.addf %158, %157 : vector<2x32xf32>
    %160 = arith.divf %158, %159 : vector<2x32xf32>
    %161 = arith.mulf %152, %131 : vector<2x32xf32>
    %162 = arith.mulf %146, %154 : vector<2x32xf32>
    %163 = arith.addf %161, %162 : vector<2x32xf32>
    %164 = math.tanh %163 : vector<2x32xf32>
    %165 = arith.mulf %160, %164 : vector<2x32xf32>
    %c0_52 = arith.constant 0 : index
    %c4_53 = arith.constant 4 : index
    %c0_54 = arith.constant 0 : index
    %166 = vector.load %arg14[%c0_52, %c4_53, %c0_54] : memref<2x7x32xf32, #tpu.memory_space<vmem>>, vector<2x1x32xf32>
    %167 = vector.shape_cast %166 : vector<2x1x32xf32> to vector<2x32xf32>
    %168 = vector.shape_cast %165 : vector<2x32xf32> to vector<2x1x32xf32>
    tpu.vector_store %arg14[%c0_52, %c4_53, %c0_54], %168 {strides = array<i32>} : memref<2x7x32xf32, #tpu.memory_space<vmem>>, vector<2x1x32xf32>,
    %c5 = arith.constant 5 : index
    %c0_55 = arith.constant 0 : index
    %c0_56 = arith.constant 0 : index
    %169 = vector.load %arg1[%c5, %c0_55, %c0_56] : memref<7x2x128xf32, #tpu.memory_space<vmem>>, vector<1x2x128xf32>
    %170 = vector.shape_cast %169 : vector<1x2x128xf32> to vector<2x128xf32>
    %cst_57 = arith.constant dense<0.000000e+00> : vector<2x128xf32>
    %171 = tpu.matmul %165, %0, %cst_57 {dimension_numbers = #tpu.dot_dimension_numbers<[1], [0], [0], [1], [0, 0, 1, 1], [], []>} : vector<2x32xf32>, vector<32x128xf32>, vector<2x128xf32> -> vector<2x128xf32>
    %172 = arith.addf %170, %171 : vector<2x128xf32>
    %173 = vector.extract_strided_slice %172 {offsets = [0, 0], sizes = [2, 32], strides = [1, 1]} : vector<2x128xf32> to vector<2x32xf32>
    %174 = arith.negf %173 : vector<2x32xf32>
    %175 = math.exp %174 : vector<2x32xf32>
    %cst_58 = arith.constant 1.000000e+00 : f32
    %176 = vector.broadcast %cst_58 : f32 to vector<2x32xf32>
    %177 = arith.addf %176, %175 : vector<2x32xf32>
    %178 = arith.divf %176, %177 : vector<2x32xf32>
    %179 = vector.extract_strided_slice %172 {offsets = [0, 32], sizes = [2, 32], strides = [1, 1]} : vector<2x128xf32> to vector<2x32xf32>
    %180 = arith.negf %179 : vector<2x32xf32>
    %181 = math.exp %180 : vector<2x32xf32>
    %cst_59 = arith.constant 1.000000e+00 : f32
    %182 = vector.broadcast %cst_59 : f32 to vector<2x32xf32>
    %183 = arith.addf %182, %181 : vector<2x32xf32>
    %184 = arith.divf %182, %183 : vector<2x32xf32>
    %185 = vector.extract_strided_slice %172 {offsets = [0, 64], sizes = [2, 32], strides = [1, 1]} : vector<2x128xf32> to vector<2x32xf32>
    %186 = math.tanh %185 : vector<2x32xf32>
    %187 = vector.extract_strided_slice %172 {offsets = [0, 96], sizes = [2, 32], strides = [1, 1]} : vector<2x128xf32> to vector<2x32xf32>
    %188 = arith.negf %187 : vector<2x32xf32>
    %189 = math.exp %188 : vector<2x32xf32>
    %cst_60 = arith.constant 1.000000e+00 : f32
    %190 = vector.broadcast %cst_60 : f32 to vector<2x32xf32>
    %191 = arith.addf %190, %189 : vector<2x32xf32>
    %192 = arith.divf %190, %191 : vector<2x32xf32>
    %193 = arith.mulf %184, %163 : vector<2x32xf32>
    %194 = arith.mulf %178, %186 : vector<2x32xf32>
    %195 = arith.addf %193, %194 : vector<2x32xf32>
    %196 = math.tanh %195 : vector<2x32xf32>
    %197 = arith.mulf %192, %196 : vector<2x32xf32>
    %c0_61 = arith.constant 0 : index
    %c5_62 = arith.constant 5 : index
    %c0_63 = arith.constant 0 : index
    %198 = vector.load %arg14[%c0_61, %c5_62, %c0_63] : memref<2x7x32xf32, #tpu.memory_space<vmem>>, vector<2x1x32xf32>
    %199 = vector.shape_cast %198 : vector<2x1x32xf32> to vector<2x32xf32>
    %200 = vector.shape_cast %197 : vector<2x32xf32> to vector<2x1x32xf32>
    tpu.vector_store %arg14[%c0_61, %c5_62, %c0_63], %200 {strides = array<i32>} : memref<2x7x32xf32, #tpu.memory_space<vmem>>, vector<2x1x32xf32>,
    %c6 = arith.constant 6 : index
    %c0_64 = arith.constant 0 : index
    %c0_65 = arith.constant 0 : index
    %201 = vector.load %arg1[%c6, %c0_64, %c0_65] : memref<7x2x128xf32, #tpu.memory_space<vmem>>, vector<1x2x128xf32>
    %202 = vector.shape_cast %201 : vector<1x2x128xf32> to vector<2x128xf32>
    %cst_66 = arith.constant dense<0.000000e+00> : vector<2x128xf32>
    %203 = tpu.matmul %197, %0, %cst_66 {dimension_numbers = #tpu.dot_dimension_numbers<[1], [0], [0], [1], [0, 0, 1, 1], [], []>} : vector<2x32xf32>, vector<32x128xf32>, vector<2x128xf32> -> vector<2x128xf32>
    %204 = arith.addf %202, %203 : vector<2x128xf32>
    %205 = vector.extract_strided_slice %204 {offsets = [0, 0], sizes = [2, 32], strides = [1, 1]} : vector<2x128xf32> to vector<2x32xf32>
    %206 = arith.negf %205 : vector<2x32xf32>
    %207 = math.exp %206 : vector<2x32xf32>
    %cst_67 = arith.constant 1.000000e+00 : f32
    %208 = vector.broadcast %cst_67 : f32 to vector<2x32xf32>
    %209 = arith.addf %208, %207 : vector<2x32xf32>
    %210 = arith.divf %208, %209 : vector<2x32xf32>
    %211 = vector.extract_strided_slice %204 {offsets = [0, 32], sizes = [2, 32], strides = [1, 1]} : vector<2x128xf32> to vector<2x32xf32>
    %212 = arith.negf %211 : vector<2x32xf32>
    %213 = math.exp %212 : vector<2x32xf32>
    %cst_68 = arith.constant 1.000000e+00 : f32
    %214 = vector.broadcast %cst_68 : f32 to vector<2x32xf32>
    %215 = arith.addf %214, %213 : vector<2x32xf32>
    %216 = arith.divf %214, %215 : vector<2x32xf32>
    %217 = vector.extract_strided_slice %204 {offsets = [0, 64], sizes = [2, 32], strides = [1, 1]} : vector<2x128xf32> to vector<2x32xf32>
    %218 = math.tanh %217 : vector<2x32xf32>
    %219 = vector.extract_strided_slice %204 {offsets = [0, 96], sizes = [2, 32], strides = [1, 1]} : vector<2x128xf32> to vector<2x32xf32>
    %220 = arith.negf %219 : vector<2x32xf32>
    %221 = math.exp %220 : vector<2x32xf32>
    %cst_69 = arith.constant 1.000000e+00 : f32
    %222 = vector.broadcast %cst_69 : f32 to vector<2x32xf32>
    %223 = arith.addf %222, %221 : vector<2x32xf32>
    %224 = arith.divf %222, %223 : vector<2x32xf32>
    %225 = arith.mulf %216, %195 : vector<2x32xf32>
    %226 = arith.mulf %210, %218 : vector<2x32xf32>
    %227 = arith.addf %225, %226 : vector<2x32xf32>
    %228 = math.tanh %227 : vector<2x32xf32>
    %229 = arith.mulf %224, %228 : vector<2x32xf32>
    %c0_70 = arith.constant 0 : index
    %c6_71 = arith.constant 6 : index
    %c0_72 = arith.constant 0 : index
    %230 = vector.load %arg14[%c0_70, %c6_71, %c0_72] : memref<2x7x32xf32, #tpu.memory_space<vmem>>, vector<2x1x32xf32>
    %231 = vector.shape_cast %230 : vector<2x1x32xf32> to vector<2x32xf32>
    %232 = vector.shape_cast %229 : vector<2x32xf32> to vector<2x1x32xf32>
    tpu.vector_store %arg14[%c0_70, %c6_71, %c0_72], %232 {strides = array<i32>} : memref<2x7x32xf32, #tpu.memory_space<vmem>>, vector<2x1x32xf32>,
    %c0_73 = arith.constant 0 : index
    %c0_74 = arith.constant 0 : index
    %c0_75 = arith.constant 0 : index
    %233 = vector.load %arg12[%c0_73, %c0_74, %c0_75] : memref<1x2x32xf32, #tpu.memory_space<vmem>>, vector<1x2x32xf32>
    %234 = vector.shape_cast %233 : vector<1x2x32xf32> to vector<2x32xf32>
    %235 = vector.shape_cast %229 : vector<2x32xf32> to vector<1x2x32xf32>
    tpu.vector_store %arg12[%c0_73, %c0_74, %c0_75], %235 {strides = array<i32>} : memref<1x2x32xf32, #tpu.memory_space<vmem>>, vector<1x2x32xf32>,
    %c0_76 = arith.constant 0 : index
    %c0_77 = arith.constant 0 : index
    %c0_78 = arith.constant 0 : index
    %236 = vector.load %arg13[%c0_76, %c0_77, %c0_78] : memref<1x2x32xf32, #tpu.memory_space<vmem>>, vector<1x2x32xf32>
    %237 = vector.shape_cast %236 : vector<1x2x32xf32> to vector<2x32xf32>
    %238 = vector.shape_cast %227 : vector<2x32xf32> to vector<1x2x32xf32>
    tpu.vector_store %arg13[%c0_76, %c0_77, %c0_78], %238 {strides = array<i32>} : memref<1x2x32xf32, #tpu.memory_space<vmem>>, vector<1x2x32xf32>,
    %c0_79 = arith.constant 0 : index
    %c0_80 = arith.constant 0 : index
    %c0_81 = arith.constant 0 : index
    %239 = vector.load %arg6[%c0_79, %c0_80, %c0_81] : memref<2x8x32xf32, #tpu.memory_space<vmem>>, vector<2x8x32xf32>
    %c0_82 = arith.constant 0 : index
    %c0_83 = arith.constant 0 : index
    %c0_84 = arith.constant 0 : index
    %240 = vector.load %arg14[%c0_82, %c0_83, %c0_84] : memref<2x7x32xf32, #tpu.memory_space<vmem>>, vector<2x7x32xf32>
    %c0_85 = arith.constant 0 : index
    %c0_86 = arith.constant 0 : index
    %241 = vector.load %arg3[%c0_85, %c0_86] : memref<32x32xf32, #tpu.memory_space<vmem>>, vector<32x32xf32>
    %242 = vector.shape_cast %241 : vector<32x32xf32> to vector<1x32x32xf32>
    %243 = vector.broadcast %242 : vector<1x32x32xf32> to vector<2x32x32xf32>
    %c0_87 = arith.constant 0 : index
    %c0_88 = arith.constant 0 : index
    %244 = vector.load %arg4[%c0_87, %c0_88] : memref<32x32xf32, #tpu.memory_space<vmem>>, vector<32x32xf32>
    %245 = vector.shape_cast %244 : vector<32x32xf32> to vector<1x32x32xf32>
    %246 = vector.broadcast %245 : vector<1x32x32xf32> to vector<2x32x32xf32>
    %c0_89 = arith.constant 0 : index
    %c0_90 = arith.constant 0 : index
    %247 = vector.load %arg5[%c0_89, %c0_90] : memref<32x32xf32, #tpu.memory_space<vmem>>, vector<32x32xf32>
    %248 = vector.shape_cast %247 : vector<32x32xf32> to vector<1x32x32xf32>
    %249 = vector.broadcast %248 : vector<1x32x32xf32> to vector<2x32x32xf32>
    "tpu.trace_start"() <{level = 10 : i32, message = "bth,bhk->btk"}> : () -> ()
    %cst_91 = arith.constant dense<0.000000e+00> : vector<2x7x32xf32>
    %250 = tpu.matmul %240, %243, %cst_91 {dimension_numbers = #tpu.dot_dimension_numbers<[2], [1], [1], [2], [0, 0, 0, 1, 1, 2], [0], [0]>} : vector<2x7x32xf32>, vector<2x32x32xf32>, vector<2x7x32xf32> -> vector<2x7x32xf32>
    "tpu.trace_stop"() : () -> ()
    "tpu.trace_start"() <{level = 10 : i32, message = "btk,bsk->bts"}> : () -> ()
    %cst_92 = arith.constant dense<0.000000e+00> : vector<2x7x8xf32>
    %251 = tpu.matmul %250, %239, %cst_92 {dimension_numbers = #tpu.dot_dimension_numbers<[2], [2], [1], [1], [0, 0, 0, 1, 1, 1], [0], [0]>} : vector<2x7x32xf32>, vector<2x8x32xf32>, vector<2x7x8xf32> -> vector<2x7x8xf32>
    "tpu.trace_stop"() : () -> ()
    %cst_93 = arith.constant dense<0xFF800000> : vector<2x7xf32>
    %252 = vector.multi_reduction <maximumf>, %251, %cst_93 [2] : vector<2x7x8xf32> to vector<2x7xf32>
    %253 = vector.shape_cast %252 : vector<2x7xf32> to vector<2x7x1xf32>
    %254 = vector.broadcast %253 : vector<2x7x1xf32> to vector<2x7x8xf32>
    %255 = arith.subf %251, %254 : vector<2x7x8xf32>
    %256 = math.exp %255 : vector<2x7x8xf32>
    %cst_94 = arith.constant dense<0.000000e+00> : vector<2x7xf32>
    %257 = vector.multi_reduction <add>, %256, %cst_94 [2] : vector<2x7x8xf32> to vector<2x7xf32>
    %258 = vector.shape_cast %257 : vector<2x7xf32> to vector<2x7x1xf32>
    %259 = tpu.reciprocal %258 {approx = true} : vector<2x7x1xf32> -> vector<2x7x1xf32>
    %260 = vector.broadcast %259 : vector<2x7x1xf32> to vector<2x7x8xf32>
    %261 = arith.mulf %256, %260 : vector<2x7x8xf32>
    "tpu.trace_start"() <{level = 10 : i32, message = "bts,bsh->bth"}> : () -> ()
    %cst_95 = arith.constant dense<0.000000e+00> : vector<2x7x32xf32>
    %262 = tpu.matmul %261, %239, %cst_95 {dimension_numbers = #tpu.dot_dimension_numbers<[2], [1], [1], [2], [0, 0, 0, 1, 1, 2], [0], [0]>} : vector<2x7x8xf32>, vector<2x8x32xf32>, vector<2x7x32xf32> -> vector<2x7x32xf32>
    "tpu.trace_stop"() : () -> ()
    "tpu.trace_start"() <{level = 10 : i32, message = "bth,bhk->btk"}> : () -> ()
    %cst_96 = arith.constant dense<0.000000e+00> : vector<2x7x32xf32>
    %263 = tpu.matmul %262, %246, %cst_96 {dimension_numbers = #tpu.dot_dimension_numbers<[2], [1], [1], [2], [0, 0, 0, 1, 1, 2], [0], [0]>} : vector<2x7x32xf32>, vector<2x32x32xf32>, vector<2x7x32xf32> -> vector<2x7x32xf32>
    %cst_97 = arith.constant dense<0.000000e+00> : vector<2x7x32xf32>
    %264 = tpu.matmul %240, %249, %cst_97 {dimension_numbers = #tpu.dot_dimension_numbers<[2], [1], [1], [2], [0, 0, 0, 1, 1, 2], [0], [0]>} : vector<2x7x32xf32>, vector<2x32x32xf32>, vector<2x7x32xf32> -> vector<2x7x32xf32>
    "tpu.trace_stop"() : () -> ()
    %265 = arith.addf %263, %264 : vector<2x7x32xf32>
    %266 = math.tanh %265 : vector<2x7x32xf32>
    %c0_98 = arith.constant 0 : index
    %c0_99 = arith.constant 0 : index
    %c0_100 = arith.constant 0 : index
    %267 = vector.load %arg10[%c0_98, %c0_99, %c0_100] : memref<2x7x32xf32, #tpu.memory_space<vmem>>, vector<2x7x32xf32>
    tpu.vector_store %arg10[%c0_98, %c0_99, %c0_100], %266 {strides = array<i32>} : memref<2x7x32xf32, #tpu.memory_space<vmem>>, vector<2x7x32xf32>,
    %c0_101 = arith.constant 0 : index
    %c0_102 = arith.constant 0 : index
    %c0_103 = arith.constant 0 : index
    %268 = vector.load %arg11[%c0_101, %c0_102, %c0_103] : memref<2x7x8xf32, #tpu.memory_space<vmem>>, vector<2x7x8xf32>
    tpu.vector_store %arg11[%c0_101, %c0_102, %c0_103], %261 {strides = array<i32>} : memref<2x7x8xf32, #tpu.memory_space<vmem>>, vector<2x7x8xf32>,
    return
  }
  func.func @transform_0(%arg0: i32) -> (i32, i32, i32) {
    %c0_i32 = arith.constant 0 : i32
    %c0_i32_0 = arith.constant 0 : i32
    %c0_i32_1 = arith.constant 0 : i32
    %c0_i32_2 = arith.constant 0 : i32
    return %c0_i32, %c0_i32_0, %c0_i32_1 : i32, i32, i32
  }
  func.func @transform_1(%arg0: i32) -> (i32, i32) {
    %c0_i32 = arith.constant 0 : i32
    %c0_i32_0 = arith.constant 0 : i32
    %c0_i32_1 = arith.constant 0 : i32
    return %c0_i32, %c0_i32_0 : i32, i32
  }
  func.func @transform_2(%arg0: i32) -> (i32, i32) {
    %c0_i32 = arith.constant 0 : i32
    %c0_i32_0 = arith.constant 0 : i32
    %c0_i32_1 = arith.constant 0 : i32
    return %c0_i32, %c0_i32_0 : i32, i32
  }
  func.func @transform_3(%arg0: i32) -> (i32, i32) {
    %c0_i32 = arith.constant 0 : i32
    %c0_i32_0 = arith.constant 0 : i32
    %c0_i32_1 = arith.constant 0 : i32
    return %c0_i32, %c0_i32_0 : i32, i32
  }
  func.func @transform_4(%arg0: i32) -> (i32, i32) {
    %c0_i32 = arith.constant 0 : i32
    %c0_i32_0 = arith.constant 0 : i32
    %c0_i32_1 = arith.constant 0 : i32
    return %c0_i32, %c0_i32_0 : i32, i32
  }
  func.func @transform_5(%arg0: i32) -> (i32, i32, i32) {
    %c0_i32 = arith.constant 0 : i32
    %c0_i32_0 = arith.constant 0 : i32
    %c0_i32_1 = arith.constant 0 : i32
    %c0_i32_2 = arith.constant 0 : i32
    return %c0_i32, %c0_i32_0, %c0_i32_1 : i32, i32, i32
  }
  func.func @transform_6(%arg0: i32) -> (i32, i32, i32) {
    %c0_i32 = arith.constant 0 : i32
    %c0_i32_0 = arith.constant 0 : i32
    %c0_i32_1 = arith.constant 0 : i32
    %c0_i32_2 = arith.constant 0 : i32
    return %c0_i32, %c0_i32_0, %c0_i32_1 : i32, i32, i32
  }
  func.func @transform_7(%arg0: i32) -> (i32, i32, i32) {
    %c0_i32 = arith.constant 0 : i32
    %c0_i32_0 = arith.constant 0 : i32
    %c0_i32_1 = arith.constant 0 : i32
    %c0_i32_2 = arith.constant 0 : i32
    return %c0_i32, %c0_i32_0, %c0_i32_1 : i32, i32, i32
  }
  func.func @transform_8(%arg0: i32) -> (i32, i32, i32) {
    %c0_i32 = arith.constant 0 : i32
    %c0_i32_0 = arith.constant 0 : i32
    %c0_i32_1 = arith.constant 0 : i32
    %c0_i32_2 = arith.constant 0 : i32
    return %c0_i32, %c0_i32_0, %c0_i32_1 : i32, i32, i32
  }
  func.func @transform_9(%arg0: i32) -> (i32, i32, i32) {
    %c0_i32 = arith.constant 0 : i32
    %c0_i32_0 = arith.constant 0 : i32
    %c0_i32_1 = arith.constant 0 : i32
    %c0_i32_2 = arith.constant 0 : i32
    return %c0_i32, %c0_i32_0, %c0_i32_1 : i32, i32, i32
  }
  func.func @transform_10(%arg0: i32) -> (i32, i32, i32) {
    %c0_i32 = arith.constant 0 : i32
    %c0_i32_0 = arith.constant 0 : i32
    %c0_i32_1 = arith.constant 0 : i32
    %c0_i32_2 = arith.constant 0 : i32
    return %c0_i32, %c0_i32_0, %c0_i32_1 : i32, i32, i32
  }
  func.func @transform_11(%arg0: i32) -> (i32, i32, i32) {
    %c0_i32 = arith.constant 0 : i32
    %c0_i32_0 = arith.constant 0 : i32
    %c0_i32_1 = arith.constant 0 : i32
    %c0_i32_2 = arith.constant 0 : i32
    return %c0_i32, %c0_i32_0, %c0_i32_1 : i32, i32, i32
  }
  func.func @transform_12(%arg0: i32) -> (i32, i32, i32) {
    %c0_i32 = arith.constant 0 : i32
    %c0_i32_0 = arith.constant 0 : i32
    %c0_i32_1 = arith.constant 0 : i32
    %c0_i32_2 = arith.constant 0 : i32
    return %c0_i32, %c0_i32_0, %c0_i32_1 : i32, i32, i32
  }
}

</mosaic_0001>

<llo_original>
// kernel: _forward_core.2
$region0: #{_forward_core.2}
  #allocation0 [shape = 'u32[]', space=smem, size = 0x4, offset = 0x4, fixed_abs, tag = 'smem constant byte address 0x4 - core index']
  #allocation1 [shape = 'u32[144,128]{1,0:T(1,128)}', space=vmem, size = 0x12000, scoped, tag = 'internal scratch']
  %s0 = inlined_call_operand.vmem [shape: f32[8,2,128], index: 0, kind: input, shape index: {}]
  %s1 = inlined_call_operand.vmem [shape: f32[32,128], index: 1, kind: input, shape index: {}]
  %s2 = inlined_call_operand.vmem [shape: f32[2,8,32], index: 2, kind: output, shape index: {0}]
  %s3 = inlined_call_operand.vmem [shape: f32[1,2,32], index: 3, kind: output, shape index: {1}]
  %s4 = inlined_call_operand.vmem [shape: f32[1,2,32], index: 4, kind: output, shape index: {2}]
  %5 = xla_tuple %s2, %s3, %s4
  %s6 = sld [smem:[#allocation0]]
  $region34: #{_forward_core.2} parent=0
    _
  %s8 = ssub.s32 1, %s6
  %s9 = scalar_select 0, %s8, %s6
  // Predicated region
  $region2: #{_forward_core.2} parent=0 // pred_check
    _
  $region3: #{_forward_core.2} parent=0 // pred_check_branch
    %11 = sbr.rel (0) target = $region5
  $region4: #{_forward_core.2} parent=0 // pred_region
    _
  $region5: #{_forward_core.2} parent=0 // pred_fallthru
    _
  // Predicated region
  $region6: #{_forward_core.2} parent=0 // pred_check
    _
  $region7: #{_forward_core.2} parent=0 // pred_check_branch
    %13 = sbr.rel (0) target = $region9
  $region8: #{_forward_core.2} parent=0 // pred_region
    _
  $region9: #{_forward_core.2} parent=0 // pred_fallthru
    _
  %v14 = vld [vmem:[%s1] sm:$0xff]
  %v15 = vld [vmem:[%s1 + $0x8] sm:$0xff]
  %v16 = vld [vmem:[%s1 + $0x10] sm:$0xff]
  %v17 = vld [vmem:[%s1 + $0x18] sm:$0xff]
  %v18 = vld [vmem:[%s0] sm:$0x3]
  %vm19 = vcmask 261120
  %v21 = vsel %vm19, 0.0, 0
  %23 = vmatprep.subr.mxu0 0.0
  %24 = vmatpush1.msra.mxu0 %v14
  %25 = vmatprep.subr.mxu0 0.0
  %26 = vmatpush1.msra.mxu0 %v15
  %27 = vmatprep.subr.mxu0 0.0
  %28 = vmatpush1.msra.mxu0 %v16
  %29 = vmatprep.subr.mxu0 0.0
  %30 = vmatpush1.msra.mxu0 %v17
  %31 = vmatprep.subr.mxu0 0.0
  %32 = vmatpush1.msra.mxu0 0.0
  %33 = vmatprep.subr.mxu0 0.0
  %34 = vmatpush1.msra.mxu0 0.0
  %35 = vmatprep.subr.mxu0 0.0
  %36 = vmatpush1.msra.mxu0 0.0
  %37 = vmatprep.subr.mxu0 0.0
  %38 = vmatpush1.msra.mxu0 0.0
  %39 = vmatprep.subr.mxu0 0.0
  %40 = vmatpush1.msra.mxu0 0.0
  %41 = vmatprep.subr.mxu0 0.0
  %42 = vmatpush1.msra.mxu0 0.0
  %43 = vmatprep.subr.mxu0 0.0
  %44 = vmatpush1.msra.mxu0 0.0
  %45 = vmatprep.subr.mxu0 0.0
  %46 = vmatpush1.msra.mxu0 0.0
  %47 = vmatprep.subr.mxu0 0.0
  %48 = vmatpush1.msra.mxu0 0.0
  %49 = vmatprep.subr.mxu0 0.0
  %50 = vmatpush1.msra.mxu0 0.0
  %51 = vmatprep.subr.mxu0 0.0
  %52 = vmatpush1.msra.mxu0 0.0
  %53 = vmatprep.subr.mxu0 0.0
  %54 = vmatpush1.msra.mxu0 0.0
  %55 = vmatprep.subr.mxu0 0.0
  %56 = vmatpush1.msra.mxu0 0.0
  %57 = vmatprep.subr.mxu0 0.0
  %58 = vmatpush1.msra.mxu0 0.0
  %59 = vmatprep.subr.mxu0 0.0
  %60 = vmatpush1.msra.mxu0 0.0
  %61 = vmatprep.subr.mxu0 0.0
  %62 = vmatpush1.msra.mxu0 0.0
  %63 = vmatprep.subr.mxu0 0.0
  %64 = vmatpush1.msra.mxu0 0.0
  %65 = vmatprep.subr.mxu0 0.0
  %66 = vmatpush1.msra.mxu0 0.0
  %67 = vmatprep.subr.mxu0 0.0
  %68 = vmatpush1.msra.mxu0 0.0
  %69 = vmatprep.subr.mxu0 0.0
  %70 = vmatpush1.msra.mxu0 0.0
  %71 = vmatprep.subr.mxu0 0.0
  %72 = vmatpush1.msra.mxu0 0.0
  %73 = vmatprep.subr.mxu0 0.0
  %74 = vmatpush1.msra.mxu0 0.0
  %75 = vmatprep.subr.mxu0 0.0
  %76 = vmatpush1.msra.mxu0 0.0
  %77 = vmatprep.subr.mxu0 0.0
  %78 = vmatpush1.msra.mxu0 0.0
  %79 = vmatprep.subr.mxu0 0.0
  %80 = vmatpush1.msra.mxu0 0.0
  %81 = vmatprep.subr.mxu0 0.0
  %82 = vmatpush1.msra.mxu0 0.0
  %83 = vmatprep.subr.mxu0 0.0
  %84 = vmatpush1.msra.mxu0 0.0
  %85 = vmatprep.subr.mxu0 0.0
  %86 = vmatpush1.msra.mxu0 0.0
  %87 = vmatprep.mubr.f32.mxu0 0.0
  %88 = vmatmul.mubr.f32.gmra.mrb[0].mxu0 %v21
  %v89 = vpop.f32.mrb[0].mxu0
  %v90 = vadd.f32 0.0, %v89
  %v91 = vpop.f32.mrb[0].mxu0
  %92 = vdwg.mxu0
  %v93 = vadd.f32 %v18, %v90
  %v94 = vxor.u32 %v93, 2147483648
  %v95 = vmul.f32 %v94, 1.442695
  %v96 = vpow.pop %v95
  %v97 = vadd.f32 %v96, 1.0
  %v98 = vrcp.pop %v97
  %v99 = vmul.f32 1.0, %v98
  %v100 = vtanh.pop %v93
  %v101 = vmul.f32 %v99, 0.0
  %103 = vrot.lane.b32.xlu0 %v100, 64
  %v104 = vpop.permute.xlu0 %103
  %v106 = vmul.f32 %v99, %v104
  %108 = vrot.lane.b32.xlu0 %v106, 32
  %v109 = vpop.permute.xlu0 %108
  %v111 = vadd.f32 %v101, %v109
  %v112 = vtanh.pop %v111
  %114 = vrot.lane.b32.xlu0 %v112, 64
  %v115 = vpop.permute.xlu0 %114
  %v117 = vmul.f32 %v99, %v115
  %v120 = vunpack.c.l.s4 1966171168
  %v121 = vunpack.c.0.s8 %v120
  %v122 = vlaneseq
  %v123 = vshrl.u32 %v122, 7
  %v124 = vsub.s32 %v121, %v123
  %v125 = vrot.slane %v117, %v124
  %v126 = vcombine.high %v125, %v125
  %v128 = vunpack.c.l.s4 1966171168
  %v129 = vunpack.c.0.s8 %v128
  %v130 = vlaneseq
  %v131 = vshrl.u32 %v130, 7
  %v132 = vsub.s32 %v129, %v131
  %v133 = vrot.slane %v125, %v132
  %v135 = vunpack.c.l.s4 1966171168
  %v136 = vunpack.c.0.s8 %v135
  %v137 = vlaneseq
  %v138 = vshrl.u32 %v137, 7
  %v139 = vsub.s32 %v136, %v138
  %v140 = vrot.slane %v126, %v139
  %v141 = vlaneseq
  %v142 = vshrl.u32 %v141, 7
  %v143 = vsub.s32 0, %v142
  %v144 = vrot.slane %v133, %v143
  %v145 = vlaneseq
  %v146 = vshrl.u32 %v145, 7
  %v147 = vsub.s32 0, %v146
  %v148 = vrot.slane %v140, %v147
  %149 = vrot.lane.b32.xlu0 %v144, 32
  %v150 = vpop.permute.xlu0 %149
  %151 = vrot.lane.b32.xlu0 %v148, 32
  %v152 = vpop.permute.xlu0 %151
  %vm155 = vcmask 253952
  %156 = vst.msk [vmem:[%s2] sm:$0x1] %vm155, %v150
  %157 = vst.msk [vmem:[%s2 + $0x8] sm:$0x1] %vm155, %v152
  %s158 = scalar_lea.vmem %s0, 2
  %v159 = vld [vmem:[%s158] sm:$0x3]
  %160 = vrot.lane.b32.xlu0 %v117, 32
  %v161 = vpop.permute.xlu0 %160
  %v162 = vsel %vm19, %v161, 0
  %164 = vmatprep.subr.mxu0 0.0
  %165 = vmatpush1.msra.mxu0 %v14
  %166 = vmatprep.subr.mxu0 0.0
  %167 = vmatpush1.msra.mxu0 %v15
  %168 = vmatprep.subr.mxu0 0.0
  %169 = vmatpush1.msra.mxu0 %v16
  %170 = vmatprep.subr.mxu0 0.0
  %171 = vmatpush1.msra.mxu0 %v17
  %172 = vmatprep.subr.mxu0 0.0
  %173 = vmatpush1.msra.mxu0 0.0
  %174 = vmatprep.subr.mxu0 0.0
  %175 = vmatpush1.msra.mxu0 0.0
  %176 = vmatprep.subr.mxu0 0.0
  %177 = vmatpush1.msra.mxu0 0.0
  %178 = vmatprep.subr.mxu0 0.0
  %179 = vmatpush1.msra.mxu0 0.0
  %180 = vmatprep.subr.mxu0 0.0
  %181 = vmatpush1.msra.mxu0 0.0
  %182 = vmatprep.subr.mxu0 0.0
  %183 = vmatpush1.msra.mxu0 0.0
  %184 = vmatprep.subr.mxu0 0.0
  %185 = vmatpush1.msra.mxu0 0.0
  %186 = vmatprep.subr.mxu0 0.0
  %187 = vmatpush1.msra.mxu0 0.0
  %188 = vmatprep.subr.mxu0 0.0
  %189 = vmatpush1.msra.mxu0 0.0
  %190 = vmatprep.subr.mxu0 0.0
  %191 = vmatpush1.msra.mxu0 0.0
  %192 = vmatprep.subr.mxu0 0.0
  %193 = vmatpush1.msra.mxu0 0.0
  %194 = vmatprep.subr.mxu0 0.0
  %195 = vmatpush1.msra.mxu0 0.0
  %196 = vmatprep.subr.mxu0 0.0
  %197 = vmatpush1.msra.mxu0 0.0
  %198 = vmatprep.subr.mxu0 0.0
  %199 = vmatpush1.msra.mxu0 0.0
  %200 = vmatprep.subr.mxu0 0.0
  %201 = vmatpush1.msra.mxu0 0.0
  %202 = vmatprep.subr.mxu0 0.0
  %203 = vmatpush1.msra.mxu0 0.0
  %204 = vmatprep.subr.mxu0 0.0
  %205 = vmatpush1.msra.mxu0 0.0
  %206 = vmatprep.subr.mxu0 0.0
  %207 = vmatpush1.msra.mxu0 0.0
  %208 = vmatprep.subr.mxu0 0.0
  %209 = vmatpush1.msra.mxu0 0.0
  %210 = vmatprep.subr.mxu0 0.0
  %211 = vmatpush1.msra.mxu0 0.0
  %212 = vmatprep.subr.mxu0 0.0
  %213 = vmatpush1.msra.mxu0 0.0
  %214 = vmatprep.subr.mxu0 0.0
  %215 = vmatpush1.msra.mxu0 0.0
  %216 = vmatprep.subr.mxu0 0.0
  %217 = vmatpush1.msra.mxu0 0.0
  %218 = vmatprep.subr.mxu0 0.0
  %219 = vmatpush1.msra.mxu0 0.0
  %220 = vmatprep.subr.mxu0 0.0
  %221 = vmatpush1.msra.mxu0 0.0
  %222 = vmatprep.subr.mxu0 0.0
  %223 = vmatpush1.msra.mxu0 0.0
  %224 = vmatprep.subr.mxu0 0.0
  %225 = vmatpush1.msra.mxu0 0.0
  %226 = vmatprep.subr.mxu0 0.0
  %227 = vmatpush1.msra.mxu0 0.0
  %228 = vmatprep.mubr.f32.mxu0 0.0
  %229 = vmatmul.mubr.f32.gmra.mrb[0].mxu0 %v162
  %v230 = vpop.f32.mrb[0].mxu0
  %v231 = vadd.f32 0.0, %v230
  %v232 = vpop.f32.mrb[0].mxu0
  %233 = vdwg.mxu0
  %v234 = vadd.f32 %v159, %v231
  %v235 = vxor.u32 %v234, 2147483648
  %v236 = vmul.f32 %v235, 1.442695
  %v237 = vpow.pop %v236
  %v238 = vadd.f32 %v237, 1.0
  %v239 = vrcp.pop %v238
  %v240 = vmul.f32 1.0, %v239
  %v241 = vtanh.pop %v234
  %v242 = vmul.f32 %v240, %v111
  %244 = vrot.lane.b32.xlu0 %v241, 64
  %v245 = vpop.permute.xlu0 %244
  %v247 = vmul.f32 %v240, %v245
  %249 = vrot.lane.b32.xlu0 %v247, 32
  %v250 = vpop.permute.xlu0 %249
  %v252 = vadd.f32 %v242, %v250
  %v253 = vtanh.pop %v252
  %255 = vrot.lane.b32.xlu0 %v253, 64
  %v256 = vpop.permute.xlu0 %255
  %v258 = vmul.f32 %v240, %v256
  %v261 = vunpack.c.l.s4 1966171168
  %v262 = vunpack.c.0.s8 %v261
  %v263 = vlaneseq
  %v264 = vshrl.u32 %v263, 7
  %v265 = vsub.s32 %v262, %v264
  %v266 = vrot.slane %v258, %v265
  %v267 = vcombine.high %v266, %v266
  %v269 = vunpack.c.l.s4 1966171168
  %v270 = vunpack.c.0.s8 %v269
  %v271 = vlaneseq
  %v272 = vshrl.u32 %v271, 7
  %v273 = vsub.s32 %v270, %v272
  %v274 = vrot.slane %v266, %v273
  %v276 = vunpack.c.l.s4 1966171168
  %v277 = vunpack.c.0.s8 %v276
  %v278 = vlaneseq
  %v279 = vshrl.u32 %v278, 7
  %v280 = vsub.s32 %v277, %v279
  %v281 = vrot.slane %v267, %v280
  %v282 = vlaneseq
  %v283 = vshrl.u32 %v282, 7
  %v284 = vsub.s32 0, %v283
  %v285 = vrot.slane %v274, %v284
  %v286 = vlaneseq
  %v287 = vshrl.u32 %v286, 7
  %v288 = vsub.s32 0, %v287
  %v289 = vrot.slane %v281, %v288
  %290 = vrot.lane.b32.xlu0 %v285, 32
  %v291 = vpop.permute.xlu0 %290
  %292 = vrot.lane.b32.xlu0 %v289, 32
  %v293 = vpop.permute.xlu0 %292
  %296 = vst.msk [vmem:[%s2 + $0x1] sm:$0x1] %vm155, %v291
  %297 = vst.msk [vmem:[%s2 + $0x9] sm:$0x1] %vm155, %v293
  %s298 = scalar_lea.vmem %s0, 4
  %v299 = vld [vmem:[%s298] sm:$0x3]
  %300 = vrot.lane.b32.xlu0 %v258, 32
  %v301 = vpop.permute.xlu0 %300
  %v302 = vsel %vm19, %v301, 0
  %304 = vmatprep.subr.mxu0 0.0
  %305 = vmatpush1.msra.mxu0 %v14
  %306 = vmatprep.subr.mxu0 0.0
  %307 = vmatpush1.msra.mxu0 %v15
  %308 = vmatprep.subr.mxu0 0.0
  %309 = vmatpush1.msra.mxu0 %v16
  %310 = vmatprep.subr.mxu0 0.0
  %311 = vmatpush1.msra.mxu0 %v17
  %312 = vmatprep.subr.mxu0 0.0
  %313 = vmatpush1.msra.mxu0 0.0
  %314 = vmatprep.subr.mxu0 0.0
  %315 = vmatpush1.msra.mxu0 0.0
  %316 = vmatprep.subr.mxu0 0.0
  %317 = vmatpush1.msra.mxu0 0.0
  %318 = vmatprep.subr.mxu0 0.0
  %319 = vmatpush1.msra.mxu0 0.0
  %320 = vmatprep.subr.mxu0 0.0
  %321 = vmatpush1.msra.mxu0 0.0
  %322 = vmatprep.subr.mxu0 0.0
  %323 = vmatpush1.msra.mxu0 0.0
  %324 = vmatprep.subr.mxu0 0.0
  %325 = vmatpush1.msra.mxu0 0.0
  %326 = vmatprep.subr.mxu0 0.0
  %327 = vmatpush1.msra.mxu0 0.0
  %328 = vmatprep.subr.mxu0 0.0
  %329 = vmatpush1.msra.mxu0 0.0
  %330 = vmatprep.subr.mxu0 0.0
  %331 = vmatpush1.msra.mxu0 0.0
  %332 = vmatprep.subr.mxu0 0.0
  %333 = vmatpush1.msra.mxu0 0.0
  %334 = vmatprep.subr.mxu0 0.0
  %335 = vmatpush1.msra.mxu0 0.0
  %336 = vmatprep.subr.mxu0 0.0
  %337 = vmatpush1.msra.mxu0 0.0
  %338 = vmatprep.subr.mxu0 0.0
  %339 = vmatpush1.msra.mxu0 0.0
  %340 = vmatprep.subr.mxu0 0.0
  %341 = vmatpush1.msra.mxu0 0.0
  %342 = vmatprep.subr.mxu0 0.0
  %343 = vmatpush1.msra.mxu0 0.0
  %344 = vmatprep.subr.mxu0 0.0
  %345 = vmatpush1.msra.mxu0 0.0
  %346 = vmatprep.subr.mxu0 0.0
  %347 = vmatpush1.msra.mxu0 0.0
  %348 = vmatprep.subr.mxu0 0.0
  %349 = vmatpush1.msra.mxu0 0.0
  %350 = vmatprep.subr.mxu0 0.0
  %351 = vmatpush1.msra.mxu0 0.0
  %352 = vmatprep.subr.mxu0 0.0
  %353 = vmatpush1.msra.mxu0 0.0
  %354 = vmatprep.subr.mxu0 0.0
  %355 = vmatpush1.msra.mxu0 0.0
  %356 = vmatprep.subr.mxu0 0.0
  %357 = vmatpush1.msra.mxu0 0.0
  %358 = vmatprep.subr.mxu0 0.0
  %359 = vmatpush1.msra.mxu0 0.0
  %360 = vmatprep.subr.mxu0 0.0
  %361 = vmatpush1.msra.mxu0 0.0
  %362 = vmatprep.subr.mxu0 0.0
  %363 = vmatpush1.msra.mxu0 0.0
  %364 = vmatprep.subr.mxu0 0.0
  %365 = vmatpush1.msra.mxu0 0.0
  %366 = vmatprep.subr.mxu0 0.0
  %367 = vmatpush1.msra.mxu0 0.0
  %368 = vmatprep.mubr.f32.mxu0 0.0
  %369 = vmatmul.mubr.f32.gmra.mrb[0].mxu0 %v302
  %v370 = vpop.f32.mrb[0].mxu0
  %v371 = vadd.f32 0.0, %v370
  %v372 = vpop.f32.mrb[0].mxu0
  %373 = vdwg.mxu0
  %v374 = vadd.f32 %v299, %v371
  %v375 = vxor.u32 %v374, 2147483648
  %v376 = vmul.f32 %v375, 1.442695
  %v377 = vpow.pop %v376
  %v378 = vadd.f32 %v377, 1.0
  %v379 = vrcp.pop %v378
  %v380 = vmul.f32 1.0, %v379
  %v381 = vtanh.pop %v374
  %v382 = vmul.f32 %v380, %v252
  %384 = vrot.lane.b32.xlu0 %v381, 64
  %v385 = vpop.permute.xlu0 %384
  %v387 = vmul.f32 %v380, %v385
  %389 = vrot.lane.b32.xlu0 %v387, 32
  %v390 = vpop.permute.xlu0 %389
  %v392 = vadd.f32 %v382, %v390
  %v393 = vtanh.pop %v392
  %395 = vrot.lane.b32.xlu0 %v393, 64
  %v396 = vpop.permute.xlu0 %395
  %v398 = vmul.f32 %v380, %v396
  %v401 = vunpack.c.l.s4 1966171168
  %v402 = vunpack.c.0.s8 %v401
  %v403 = vlaneseq
  %v404 = vshrl.u32 %v403, 7
  %v405 = vsub.s32 %v402, %v404
  %v406 = vrot.slane %v398, %v405
  %v407 = vcombine.high %v406, %v406
  %v409 = vunpack.c.l.s4 1966171168
  %v410 = vunpack.c.0.s8 %v409
  %v411 = vlaneseq
  %v412 = vshrl.u32 %v411, 7
  %v413 = vsub.s32 %v410, %v412
  %v414 = vrot.slane %v406, %v413
  %v416 = vunpack.c.l.s4 1966171168
  %v417 = vunpack.c.0.s8 %v416
  %v418 = vlaneseq
  %v419 = vshrl.u32 %v418, 7
  %v420 = vsub.s32 %v417, %v419
  %v421 = vrot.slane %v407, %v420
  %v422 = vlaneseq
  %v423 = vshrl.u32 %v422, 7
  %v424 = vsub.s32 0, %v423
  %v425 = vrot.slane %v414, %v424
  %v426 = vlaneseq
  %v427 = vshrl.u32 %v426, 7
  %v428 = vsub.s32 0, %v427
  %v429 = vrot.slane %v421, %v428
  %430 = vrot.lane.b32.xlu0 %v425, 32
  %v431 = vpop.permute.xlu0 %430
  %432 = vrot.lane.b32.xlu0 %v429, 32
  %v433 = vpop.permute.xlu0 %432
  %436 = vst.msk [vmem:[%s2 + $0x2] sm:$0x1] %vm155, %v431
  %437 = vst.msk [vmem:[%s2 + $0xa] sm:$0x1] %vm155, %v433
  %s438 = scalar_lea.vmem %s0, 6
  %v439 = vld [vmem:[%s438] sm:$0x3]
  %440 = vrot.lane.b32.xlu0 %v398, 32
  %v441 = vpop.permute.xlu0 %440
  %v442 = vsel %vm19, %v441, 0
  %444 = vmatprep.subr.mxu0 0.0
  %445 = vmatpush1.msra.mxu0 %v14
  %446 = vmatprep.subr.mxu0 0.0
  %447 = vmatpush1.msra.mxu0 %v15
  %448 = vmatprep.subr.mxu0 0.0
  %449 = vmatpush1.msra.mxu0 %v16
  %450 = vmatprep.subr.mxu0 0.0
  %451 = vmatpush1.msra.mxu0 %v17
  %452 = vmatprep.subr.mxu0 0.0
  %453 = vmatpush1.msra.mxu0 0.0
  %454 = vmatprep.subr.mxu0 0.0
  %455 = vmatpush1.msra.mxu0 0.0
  %456 = vmatprep.subr.mxu0 0.0
  %457 = vmatpush1.msra.mxu0 0.0
  %458 = vmatprep.subr.mxu0 0.0
  %459 = vmatpush1.msra.mxu0 0.0
  %460 = vmatprep.subr.mxu0 0.0
  %461 = vmatpush1.msra.mxu0 0.0
  %462 = vmatprep.subr.mxu0 0.0
  %463 = vmatpush1.msra.mxu0 0.0
  %464 = vmatprep.subr.mxu0 0.0
  %465 = vmatpush1.msra.mxu0 0.0
  %466 = vmatprep.subr.mxu0 0.0
  %467 = vmatpush1.msra.mxu0 0.0
  %468 = vmatprep.subr.mxu0 0.0
  %469 = vmatpush1.msra.mxu0 0.0
  %470 = vmatprep.subr.mxu0 0.0
  %471 = vmatpush1.msra.mxu0 0.0
  %472 = vmatprep.subr.mxu0 0.0
  %473 = vmatpush1.msra.mxu0 0.0
  %474 = vmatprep.subr.mxu0 0.0
  %475 = vmatpush1.msra.mxu0 0.0
  %476 = vmatprep.subr.mxu0 0.0
  %477 = vmatpush1.msra.mxu0 0.0
  %478 = vmatprep.subr.mxu0 0.0
  %479 = vmatpush1.msra.mxu0 0.0
  %480 = vmatprep.subr.mxu0 0.0
  %481 = vmatpush1.msra.mxu0 0.0
  %482 = vmatprep.subr.mxu0 0.0
  %483 = vmatpush1.msra.mxu0 0.0
  %484 = vmatprep.subr.mxu0 0.0
  %485 = vmatpush1.msra.mxu0 0.0
  %486 = vmatprep.subr.mxu0 0.0
  %487 = vmatpush1.msra.mxu0 0.0
  %488 = vmatprep.subr.mxu0 0.0
  %489 = vmatpush1.msra.mxu0 0.0
  %490 = vmatprep.subr.mxu0 0.0
  %491 = vmatpush1.msra.mxu0 0.0
  %492 = vmatprep.subr.mxu0 0.0
  %493 = vmatpush1.msra.mxu0 0.0
  %494 = vmatprep.subr.mxu0 0.0
  %495 = vmatpush1.msra.mxu0 0.0
  %496 = vmatprep.subr.mxu0 0.0
  %497 = vmatpush1.msra.mxu0 0.0
  %498 = vmatprep.subr.mxu0 0.0
  %499 = vmatpush1.msra.mxu0 0.0
  %500 = vmatprep.subr.mxu0 0.0
  %501 = vmatpush1.msra.mxu0 0.0
  %502 = vmatprep.subr.mxu0 0.0
  %503 = vmatpush1.msra.mxu0 0.0
  %504 = vmatprep.subr.mxu0 0.0
  %505 = vmatpush1.msra.mxu0 0.0
  %506 = vmatprep.subr.mxu0 0.0
  %507 = vmatpush1.msra.mxu0 0.0
  %508 = vmatprep.mubr.f32.mxu0 0.0
  %509 = vmatmul.mubr.f32.gmra.mrb[0].mxu0 %v442
  %v510 = vpop.f32.mrb[0].mxu0
  %v511 = vadd.f32 0.0, %v510
  %v512 = vpop.f32.mrb[0].mxu0
  %513 = vdwg.mxu0
  %v514 = vadd.f32 %v439, %v511
  %v515 = vxor.u32 %v514, 2147483648
  %v516 = vmul.f32 %v515, 1.442695
  %v517 = vpow.pop %v516
  %v518 = vadd.f32 %v517, 1.0
  %v519 = vrcp.pop %v518
  %v520 = vmul.f32 1.0, %v519
  %v521 = vtanh.pop %v514
  %v522 = vmul.f32 %v520, %v392
  %524 = vrot.lane.b32.xlu0 %v521, 64
  %v525 = vpop.permute.xlu0 %524
  %v527 = vmul.f32 %v520, %v525
  %529 = vrot.lane.b32.xlu0 %v527, 32
  %v530 = vpop.permute.xlu0 %529
  %v532 = vadd.f32 %v522, %v530
  %v533 = vtanh.pop %v532
  %535 = vrot.lane.b32.xlu0 %v533, 64
  %v536 = vpop.permute.xlu0 %535
  %v538 = vmul.f32 %v520, %v536
  %v541 = vunpack.c.l.s4 1966171168
  %v542 = vunpack.c.0.s8 %v541
  %v543 = vlaneseq
  %v544 = vshrl.u32 %v543, 7
  %v545 = vsub.s32 %v542, %v544
  %v546 = vrot.slane %v538, %v545
  %v547 = vcombine.high %v546, %v546
  %v549 = vunpack.c.l.s4 1966171168
  %v550 = vunpack.c.0.s8 %v549
  %v551 = vlaneseq
  %v552 = vshrl.u32 %v551, 7
  %v553 = vsub.s32 %v550, %v552
  %v554 = vrot.slane %v546, %v553
  %v556 = vunpack.c.l.s4 1966171168
  %v557 = vunpack.c.0.s8 %v556
  %v558 = vlaneseq
  %v559 = vshrl.u32 %v558, 7
  %v560 = vsub.s32 %v557, %v559
  %v561 = vrot.slane %v547, %v560
  %v562 = vlaneseq
  %v563 = vshrl.u32 %v562, 7
  %v564 = vsub.s32 0, %v563
  %v565 = vrot.slane %v554, %v564
  %v566 = vlaneseq
  %v567 = vshrl.u32 %v566, 7
  %v568 = vsub.s32 0, %v567
  %v569 = vrot.slane %v561, %v568
  %570 = vrot.lane.b32.xlu0 %v565, 32
  %v571 = vpop.permute.xlu0 %570
  %572 = vrot.lane.b32.xlu0 %v569, 32
  %v573 = vpop.permute.xlu0 %572
  %576 = vst.msk [vmem:[%s2 + $0x3] sm:$0x1] %vm155, %v571
  %577 = vst.msk [vmem:[%s2 + $0xb] sm:$0x1] %vm155, %v573
  %s578 = scalar_lea.vmem %s0, 8
  %v579 = vld [vmem:[%s578] sm:$0x3]
  %580 = vrot.lane.b32.xlu0 %v538, 32
  %v581 = vpop.permute.xlu0 %580
  %v582 = vsel %vm19, %v581, 0
  %584 = vmatprep.subr.mxu0 0.0
  %585 = vmatpush1.msra.mxu0 %v14
  %586 = vmatprep.subr.mxu0 0.0
  %587 = vmatpush1.msra.mxu0 %v15
  %588 = vmatprep.subr.mxu0 0.0
  %589 = vmatpush1.msra.mxu0 %v16
  %590 = vmatprep.subr.mxu0 0.0
  %591 = vmatpush1.msra.mxu0 %v17
  %592 = vmatprep.subr.mxu0 0.0
  %593 = vmatpush1.msra.mxu0 0.0
  %594 = vmatprep.subr.mxu0 0.0
  %595 = vmatpush1.msra.mxu0 0.0
  %596 = vmatprep.subr.mxu0 0.0
  %597 = vmatpush1.msra.mxu0 0.0
  %598 = vmatprep.subr.mxu0 0.0
  %599 = vmatpush1.msra.mxu0 0.0
  %600 = vmatprep.subr.mxu0 0.0
  %601 = vmatpush1.msra.mxu0 0.0
  %602 = vmatprep.subr.mxu0 0.0
  %603 = vmatpush1.msra.mxu0 0.0
  %604 = vmatprep.subr.mxu0 0.0
  %605 = vmatpush1.msra.mxu0 0.0
  %606 = vmatprep.subr.mxu0 0.0
  %607 = vmatpush1.msra.mxu0 0.0
  %608 = vmatprep.subr.mxu0 0.0
  %609 = vmatpush1.msra.mxu0 0.0
  %610 = vmatprep.subr.mxu0 0.0
  %611 = vmatpush1.msra.mxu0 0.0
  %612 = vmatprep.subr.mxu0 0.0
  %613 = vmatpush1.msra.mxu0 0.0
  %614 = vmatprep.subr.mxu0 0.0
  %615 = vmatpush1.msra.mxu0 0.0
  %616 = vmatprep.subr.mxu0 0.0
  %617 = vmatpush1.msra.mxu0 0.0
  %618 = vmatprep.subr.mxu0 0.0
  %619 = vmatpush1.msra.mxu0 0.0
  %620 = vmatprep.subr.mxu0 0.0
  %621 = vmatpush1.msra.mxu0 0.0
  %622 = vmatprep.subr.mxu0 0.0
  %623 = vmatpush1.msra.mxu0 0.0
  %624 = vmatprep.subr.mxu0 0.0
  %625 = vmatpush1.msra.mxu0 0.0
  %626 = vmatprep.subr.mxu0 0.0
  %627 = vmatpush1.msra.mxu0 0.0
  %628 = vmatprep.subr.mxu0 0.0
  %629 = vmatpush1.msra.mxu0 0.0
  %630 = vmatprep.subr.mxu0 0.0
  %631 = vmatpush1.msra.mxu0 0.0
  %632 = vmatprep.subr.mxu0 0.0
  %633 = vmatpush1.msra.mxu0 0.0
  %634 = vmatprep.subr.mxu0 0.0
  %635 = vmatpush1.msra.mxu0 0.0
  %636 = vmatprep.subr.mxu0 0.0
  %637 = vmatpush1.msra.mxu0 0.0
  %638 = vmatprep.subr.mxu0 0.0
  %639 = vmatpush1.msra.mxu0 0.0
  %640 = vmatprep.subr.mxu0 0.0
  %641 = vmatpush1.msra.mxu0 0.0
  %642 = vmatprep.subr.mxu0 0.0
  %643 = vmatpush1.msra.mxu0 0.0
  %644 = vmatprep.subr.mxu0 0.0
  %645 = vmatpush1.msra.mxu0 0.0
  %646 = vmatprep.subr.mxu0 0.0
  %647 = vmatpush1.msra.mxu0 0.0
  %648 = vmatprep.mubr.f32.mxu0 0.0
  %649 = vmatmul.mubr.f32.gmra.mrb[0].mxu0 %v582
  %v650 = vpop.f32.mrb[0].mxu0
  %v651 = vadd.f32 0.0, %v650
  %v652 = vpop.f32.mrb[0].mxu0
  %653 = vdwg.mxu0
  %v654 = vadd.f32 %v579, %v651
  %v655 = vxor.u32 %v654, 2147483648
  %v656 = vmul.f32 %v655, 1.442695
  %v657 = vpow.pop %v656
  %v658 = vadd.f32 %v657, 1.0
  %v659 = vrcp.pop %v658
  %v660 = vmul.f32 1.0, %v659
  %v661 = vtanh.pop %v654
  %v662 = vmul.f32 %v660, %v532
  %664 = vrot.lane.b32.xlu0 %v661, 64
  %v665 = vpop.permute.xlu0 %664
  %v667 = vmul.f32 %v660, %v665
  %669 = vrot.lane.b32.xlu0 %v667, 32
  %v670 = vpop.permute.xlu0 %669
  %v672 = vadd.f32 %v662, %v670
  %v673 = vtanh.pop %v672
  %675 = vrot.lane.b32.xlu0 %v673, 64
  %v676 = vpop.permute.xlu0 %675
  %v678 = vmul.f32 %v660, %v676
  %v681 = vunpack.c.l.s4 1966171168
  %v682 = vunpack.c.0.s8 %v681
  %v683 = vlaneseq
  %v684 = vshrl.u32 %v683, 7
  %v685 = vsub.s32 %v682, %v684
  %v686 = vrot.slane %v678, %v685
  %v687 = vcombine.high %v686, %v686
  %v689 = vunpack.c.l.s4 1966171168
  %v690 = vunpack.c.0.s8 %v689
  %v691 = vlaneseq
  %v692 = vshrl.u32 %v691, 7
  %v693 = vsub.s32 %v690, %v692
  %v694 = vrot.slane %v686, %v693
  %v696 = vunpack.c.l.s4 1966171168
  %v697 = vunpack.c.0.s8 %v696
  %v698 = vlaneseq
  %v699 = vshrl.u32 %v698, 7
  %v700 = vsub.s32 %v697, %v699
  %v701 = vrot.slane %v687, %v700
  %v702 = vlaneseq
  %v703 = vshrl.u32 %v702, 7
  %v704 = vsub.s32 0, %v703
  %v705 = vrot.slane %v694, %v704
  %v706 = vlaneseq
  %v707 = vshrl.u32 %v706, 7
  %v708 = vsub.s32 0, %v707
  %v709 = vrot.slane %v701, %v708
  %710 = vrot.lane.b32.xlu0 %v705, 32
  %v711 = vpop.permute.xlu0 %710
  %712 = vrot.lane.b32.xlu0 %v709, 32
  %v713 = vpop.permute.xlu0 %712
  %716 = vst.msk [vmem:[%s2 + $0x4] sm:$0x1] %vm155, %v711
  %717 = vst.msk [vmem:[%s2 + $0xc] sm:$0x1] %vm155, %v713
  %s718 = scalar_lea.vmem %s0, 10
  %v719 = vld [vmem:[%s718] sm:$0x3]
  %720 = vrot.lane.b32.xlu0 %v678, 32
  %v721 = vpop.permute.xlu0 %720
  %v722 = vsel %vm19, %v721, 0
  %724 = vmatprep.subr.mxu0 0.0
  %725 = vmatpush1.msra.mxu0 %v14
  %726 = vmatprep.subr.mxu0 0.0
  %727 = vmatpush1.msra.mxu0 %v15
  %728 = vmatprep.subr.mxu0 0.0
  %729 = vmatpush1.msra.mxu0 %v16
  %730 = vmatprep.subr.mxu0 0.0
  %731 = vmatpush1.msra.mxu0 %v17
  %732 = vmatprep.subr.mxu0 0.0
  %733 = vmatpush1.msra.mxu0 0.0
  %734 = vmatprep.subr.mxu0 0.0
  %735 = vmatpush1.msra.mxu0 0.0
  %736 = vmatprep.subr.mxu0 0.0
  %737 = vmatpush1.msra.mxu0 0.0
  %738 = vmatprep.subr.mxu0 0.0
  %739 = vmatpush1.msra.mxu0 0.0
  %740 = vmatprep.subr.mxu0 0.0
  %741 = vmatpush1.msra.mxu0 0.0
  %742 = vmatprep.subr.mxu0 0.0
  %743 = vmatpush1.msra.mxu0 0.0
  %744 = vmatprep.subr.mxu0 0.0
  %745 = vmatpush1.msra.mxu0 0.0
  %746 = vmatprep.subr.mxu0 0.0
  %747 = vmatpush1.msra.mxu0 0.0
  %748 = vmatprep.subr.mxu0 0.0
  %749 = vmatpush1.msra.mxu0 0.0
  %750 = vmatprep.subr.mxu0 0.0
  %751 = vmatpush1.msra.mxu0 0.0
  %752 = vmatprep.subr.mxu0 0.0
  %753 = vmatpush1.msra.mxu0 0.0
  %754 = vmatprep.subr.mxu0 0.0
  %755 = vmatpush1.msra.mxu0 0.0
  %756 = vmatprep.subr.mxu0 0.0
  %757 = vmatpush1.msra.mxu0 0.0
  %758 = vmatprep.subr.mxu0 0.0
  %759 = vmatpush1.msra.mxu0 0.0
  %760 = vmatprep.subr.mxu0 0.0
  %761 = vmatpush1.msra.mxu0 0.0
  %762 = vmatprep.subr.mxu0 0.0
  %763 = vmatpush1.msra.mxu0 0.0
  %764 = vmatprep.subr.mxu0 0.0
  %765 = vmatpush1.msra.mxu0 0.0
  %766 = vmatprep.subr.mxu0 0.0
  %767 = vmatpush1.msra.mxu0 0.0
  %768 = vmatprep.subr.mxu0 0.0
  %769 = vmatpush1.msra.mxu0 0.0
  %770 = vmatprep.subr.mxu0 0.0
  %771 = vmatpush1.msra.mxu0 0.0
  %772 = vmatprep.subr.mxu0 0.0
  %773 = vmatpush1.msra.mxu0 0.0
  %774 = vmatprep.subr.mxu0 0.0
  %775 = vmatpush1.msra.mxu0 0.0
  %776 = vmatprep.subr.mxu0 0.0
  %777 = vmatpush1.msra.mxu0 0.0
  %778 = vmatprep.subr.mxu0 0.0
  %779 = vmatpush1.msra.mxu0 0.0
  %780 = vmatprep.subr.mxu0 0.0
  %781 = vmatpush1.msra.mxu0 0.0
  %782 = vmatprep.subr.mxu0 0.0
  %783 = vmatpush1.msra.mxu0 0.0
  %784 = vmatprep.subr.mxu0 0.0
  %785 = vmatpush1.msra.mxu0 0.0
  %786 = vmatprep.subr.mxu0 0.0
  %787 = vmatpush1.msra.mxu0 0.0
  %788 = vmatprep.mubr.f32.mxu0 0.0
  %789 = vmatmul.mubr.f32.gmra.mrb[0].mxu0 %v722
  %v790 = vpop.f32.mrb[0].mxu0
  %v791 = vadd.f32 0.0, %v790
  %v792 = vpop.f32.mrb[0].mxu0
  %793 = vdwg.mxu0
  %v794 = vadd.f32 %v719, %v791
  %v795 = vxor.u32 %v794, 2147483648
  %v796 = vmul.f32 %v795, 1.442695
  %v797 = vpow.pop %v796
  %v798 = vadd.f32 %v797, 1.0
  %v799 = vrcp.pop %v798
  %v800 = vmul.f32 1.0, %v799
  %v801 = vtanh.pop %v794
  %v802 = vmul.f32 %v800, %v672
  %804 = vrot.lane.b32.xlu0 %v801, 64
  %v805 = vpop.permute.xlu0 %804
  %v807 = vmul.f32 %v800, %v805
  %809 = vrot.lane.b32.xlu0 %v807, 32
  %v810 = vpop.permute.xlu0 %809
  %v812 = vadd.f32 %v802, %v810
  %v813 = vtanh.pop %v812
  %815 = vrot.lane.b32.xlu0 %v813, 64
  %v816 = vpop.permute.xlu0 %815
  %v818 = vmul.f32 %v800, %v816
  %v821 = vunpack.c.l.s4 1966171168
  %v822 = vunpack.c.0.s8 %v821
  %v823 = vlaneseq
  %v824 = vshrl.u32 %v823, 7
  %v825 = vsub.s32 %v822, %v824
  %v826 = vrot.slane %v818, %v825
  %v827 = vcombine.high %v826, %v826
  %v829 = vunpack.c.l.s4 1966171168
  %v830 = vunpack.c.0.s8 %v829
  %v831 = vlaneseq
  %v832 = vshrl.u32 %v831, 7
  %v833 = vsub.s32 %v830, %v832
  %v834 = vrot.slane %v826, %v833
  %v836 = vunpack.c.l.s4 1966171168
  %v837 = vunpack.c.0.s8 %v836
  %v838 = vlaneseq
  %v839 = vshrl.u32 %v838, 7
  %v840 = vsub.s32 %v837, %v839
  %v841 = vrot.slane %v827, %v840
  %v842 = vlaneseq
  %v843 = vshrl.u32 %v842, 7
  %v844 = vsub.s32 0, %v843
  %v845 = vrot.slane %v834, %v844
  %v846 = vlaneseq
  %v847 = vshrl.u32 %v846, 7
  %v848 = vsub.s32 0, %v847
  %v849 = vrot.slane %v841, %v848
  %850 = vrot.lane.b32.xlu0 %v845, 32
  %v851 = vpop.permute.xlu0 %850
  %852 = vrot.lane.b32.xlu0 %v849, 32
  %v853 = vpop.permute.xlu0 %852
  %856 = vst.msk [vmem:[%s2 + $0x5] sm:$0x1] %vm155, %v851
  %857 = vst.msk [vmem:[%s2 + $0xd] sm:$0x1] %vm155, %v853
  %s858 = scalar_lea.vmem %s0, 12
  %v859 = vld [vmem:[%s858] sm:$0x3]
  %860 = vrot.lane.b32.xlu0 %v818, 32
  %v861 = vpop.permute.xlu0 %860
  %v862 = vsel %vm19, %v861, 0
  %864 = vmatprep.subr.mxu0 0.0
  %865 = vmatpush1.msra.mxu0 %v14
  %866 = vmatprep.subr.mxu0 0.0
  %867 = vmatpush1.msra.mxu0 %v15
  %868 = vmatprep.subr.mxu0 0.0
  %869 = vmatpush1.msra.mxu0 %v16
  %870 = vmatprep.subr.mxu0 0.0
  %871 = vmatpush1.msra.mxu0 %v17
  %872 = vmatprep.subr.mxu0 0.0
  %873 = vmatpush1.msra.mxu0 0.0
  %874 = vmatprep.subr.mxu0 0.0
  %875 = vmatpush1.msra.mxu0 0.0
  %876 = vmatprep.subr.mxu0 0.0
  %877 = vmatpush1.msra.mxu0 0.0
  %878 = vmatprep.subr.mxu0 0.0
  %879 = vmatpush1.msra.mxu0 0.0
  %880 = vmatprep.subr.mxu0 0.0
  %881 = vmatpush1.msra.mxu0 0.0
  %882 = vmatprep.subr.mxu0 0.0
  %883 = vmatpush1.msra.mxu0 0.0
  %884 = vmatprep.subr.mxu0 0.0
  %885 = vmatpush1.msra.mxu0 0.0
  %886 = vmatprep.subr.mxu0 0.0
  %887 = vmatpush1.msra.mxu0 0.0
  %888 = vmatprep.subr.mxu0 0.0
  %889 = vmatpush1.msra.mxu0 0.0
  %890 = vmatprep.subr.mxu0 0.0
  %891 = vmatpush1.msra.mxu0 0.0
  %892 = vmatprep.subr.mxu0 0.0
  %893 = vmatpush1.msra.mxu0 0.0
  %894 = vmatprep.subr.mxu0 0.0
  %895 = vmatpush1.msra.mxu0 0.0
  %896 = vmatprep.subr.mxu0 0.0
  %897 = vmatpush1.msra.mxu0 0.0
  %898 = vmatprep.subr.mxu0 0.0
  %899 = vmatpush1.msra.mxu0 0.0
  %900 = vmatprep.subr.mxu0 0.0
  %901 = vmatpush1.msra.mxu0 0.0
  %902 = vmatprep.subr.mxu0 0.0
  %903 = vmatpush1.msra.mxu0 0.0
  %904 = vmatprep.subr.mxu0 0.0
  %905 = vmatpush1.msra.mxu0 0.0
  %906 = vmatprep.subr.mxu0 0.0
  %907 = vmatpush1.msra.mxu0 0.0
  %908 = vmatprep.subr.mxu0 0.0
  %909 = vmatpush1.msra.mxu0 0.0
  %910 = vmatprep.subr.mxu0 0.0
  %911 = vmatpush1.msra.mxu0 0.0
  %912 = vmatprep.subr.mxu0 0.0
  %913 = vmatpush1.msra.mxu0 0.0
  %914 = vmatprep.subr.mxu0 0.0
  %915 = vmatpush1.msra.mxu0 0.0
  %916 = vmatprep.subr.mxu0 0.0
  %917 = vmatpush1.msra.mxu0 0.0
  %918 = vmatprep.subr.mxu0 0.0
  %919 = vmatpush1.msra.mxu0 0.0
  %920 = vmatprep.subr.mxu0 0.0
  %921 = vmatpush1.msra.mxu0 0.0
  %922 = vmatprep.subr.mxu0 0.0
  %923 = vmatpush1.msra.mxu0 0.0
  %924 = vmatprep.subr.mxu0 0.0
  %925 = vmatpush1.msra.mxu0 0.0
  %926 = vmatprep.subr.mxu0 0.0
  %927 = vmatpush1.msra.mxu0 0.0
  %928 = vmatprep.mubr.f32.mxu0 0.0
  %929 = vmatmul.mubr.f32.gmra.mrb[0].mxu0 %v862
  %v930 = vpop.f32.mrb[0].mxu0
  %v931 = vadd.f32 0.0, %v930
  %v932 = vpop.f32.mrb[0].mxu0
  %933 = vdwg.mxu0
  %v934 = vadd.f32 %v859, %v931
  %v935 = vxor.u32 %v934, 2147483648
  %v936 = vmul.f32 %v935, 1.442695
  %v937 = vpow.pop %v936
  %v938 = vadd.f32 %v937, 1.0
  %v939 = vrcp.pop %v938
  %v940 = vmul.f32 1.0, %v939
  %v941 = vtanh.pop %v934
  %v942 = vmul.f32 %v940, %v812
  %944 = vrot.lane.b32.xlu0 %v941, 64
  %v945 = vpop.permute.xlu0 %944
  %v947 = vmul.f32 %v940, %v945
  %949 = vrot.lane.b32.xlu0 %v947, 32
  %v950 = vpop.permute.xlu0 %949
  %v952 = vadd.f32 %v942, %v950
  %v953 = vtanh.pop %v952
  %955 = vrot.lane.b32.xlu0 %v953, 64
  %v956 = vpop.permute.xlu0 %955
  %v958 = vmul.f32 %v940, %v956
  %v961 = vunpack.c.l.s4 1966171168
  %v962 = vunpack.c.0.s8 %v961
  %v963 = vlaneseq
  %v964 = vshrl.u32 %v963, 7
  %v965 = vsub.s32 %v962, %v964
  %v966 = vrot.slane %v958, %v965
  %v967 = vcombine.high %v966, %v966
  %v969 = vunpack.c.l.s4 1966171168
  %v970 = vunpack.c.0.s8 %v969
  %v971 = vlaneseq
  %v972 = vshrl.u32 %v971, 7
  %v973 = vsub.s32 %v970, %v972
  %v974 = vrot.slane %v966, %v973
  %v976 = vunpack.c.l.s4 1966171168
  %v977 = vunpack.c.0.s8 %v976
  %v978 = vlaneseq
  %v979 = vshrl.u32 %v978, 7
  %v980 = vsub.s32 %v977, %v979
  %v981 = vrot.slane %v967, %v980
  %v982 = vlaneseq
  %v983 = vshrl.u32 %v982, 7
  %v984 = vsub.s32 0, %v983
  %v985 = vrot.slane %v974, %v984
  %v986 = vlaneseq
  %v987 = vshrl.u32 %v986, 7
  %v988 = vsub.s32 0, %v987
  %v989 = vrot.slane %v981, %v988
  %990 = vrot.lane.b32.xlu0 %v985, 32
  %v991 = vpop.permute.xlu0 %990
  %992 = vrot.lane.b32.xlu0 %v989, 32
  %v993 = vpop.permute.xlu0 %992
  %996 = vst.msk [vmem:[%s2 + $0x6] sm:$0x1] %vm155, %v991
  %997 = vst.msk [vmem:[%s2 + $0xe] sm:$0x1] %vm155, %v993
  %s998 = scalar_lea.vmem %s0, 14
  %v999 = vld [vmem:[%s998] sm:$0x3]
  %1000 = vrot.lane.b32.xlu0 %v958, 32
  %v1001 = vpop.permute.xlu0 %1000
  %v1002 = vsel %vm19, %v1001, 0
  %1004 = vmatprep.subr.mxu0 0.0
  %1005 = vmatpush1.msra.mxu0 %v14
  %1006 = vmatprep.subr.mxu0 0.0
  %1007 = vmatpush1.msra.mxu0 %v15
  %1008 = vmatprep.subr.mxu0 0.0
  %1009 = vmatpush1.msra.mxu0 %v16
  %1010 = vmatprep.subr.mxu0 0.0
  %1011 = vmatpush1.msra.mxu0 %v17
  %1012 = vmatprep.subr.mxu0 0.0
  %1013 = vmatpush1.msra.mxu0 0.0
  %1014 = vmatprep.subr.mxu0 0.0
  %1015 = vmatpush1.msra.mxu0 0.0
  %1016 = vmatprep.subr.mxu0 0.0
  %1017 = vmatpush1.msra.mxu0 0.0
  %1018 = vmatprep.subr.mxu0 0.0
  %1019 = vmatpush1.msra.mxu0 0.0
  %1020 = vmatprep.subr.mxu0 0.0
  %1021 = vmatpush1.msra.mxu0 0.0
  %1022 = vmatprep.subr.mxu0 0.0
  %1023 = vmatpush1.msra.mxu0 0.0
  %1024 = vmatprep.subr.mxu0 0.0
  %1025 = vmatpush1.msra.mxu0 0.0
  %1026 = vmatprep.subr.mxu0 0.0
  %1027 = vmatpush1.msra.mxu0 0.0
  %1028 = vmatprep.subr.mxu0 0.0
  %1029 = vmatpush1.msra.mxu0 0.0
  %1030 = vmatprep.subr.mxu0 0.0
  %1031 = vmatpush1.msra.mxu0 0.0
  %1032 = vmatprep.subr.mxu0 0.0
  %1033 = vmatpush1.msra.mxu0 0.0
  %1034 = vmatprep.subr.mxu0 0.0
  %1035 = vmatpush1.msra.mxu0 0.0
  %1036 = vmatprep.subr.mxu0 0.0
  %1037 = vmatpush1.msra.mxu0 0.0
  %1038 = vmatprep.subr.mxu0 0.0
  %1039 = vmatpush1.msra.mxu0 0.0
  %1040 = vmatprep.subr.mxu0 0.0
  %1041 = vmatpush1.msra.mxu0 0.0
  %1042 = vmatprep.subr.mxu0 0.0
  %1043 = vmatpush1.msra.mxu0 0.0
  %1044 = vmatprep.subr.mxu0 0.0
  %1045 = vmatpush1.msra.mxu0 0.0
  %1046 = vmatprep.subr.mxu0 0.0
  %1047 = vmatpush1.msra.mxu0 0.0
  %1048 = vmatprep.subr.mxu0 0.0
  %1049 = vmatpush1.msra.mxu0 0.0
  %1050 = vmatprep.subr.mxu0 0.0
  %1051 = vmatpush1.msra.mxu0 0.0
  %1052 = vmatprep.subr.mxu0 0.0
  %1053 = vmatpush1.msra.mxu0 0.0
  %1054 = vmatprep.subr.mxu0 0.0
  %1055 = vmatpush1.msra.mxu0 0.0
  %1056 = vmatprep.subr.mxu0 0.0
  %1057 = vmatpush1.msra.mxu0 0.0
  %1058 = vmatprep.subr.mxu0 0.0
  %1059 = vmatpush1.msra.mxu0 0.0
  %1060 = vmatprep.subr.mxu0 0.0
  %1061 = vmatpush1.msra.mxu0 0.0
  %1062 = vmatprep.subr.mxu0 0.0
  %1063 = vmatpush1.msra.mxu0 0.0
  %1064 = vmatprep.subr.mxu0 0.0
  %1065 = vmatpush1.msra.mxu0 0.0
  %1066 = vmatprep.subr.mxu0 0.0
  %1067 = vmatpush1.msra.mxu0 0.0
  %1068 = vmatprep.mubr.f32.mxu0 0.0
  %1069 = vmatmul.mubr.f32.gmra.mrb[0].mxu0 %v1002
  %v1070 = vpop.f32.mrb[0].mxu0
  %v1071 = vadd.f32 0.0, %v1070
  %v1072 = vpop.f32.mrb[0].mxu0
  %1073 = vdwg.mxu0
  %v1074 = vadd.f32 %v999, %v1071
  %v1075 = vxor.u32 %v1074, 2147483648
  %v1076 = vmul.f32 %v1075, 1.442695
  %v1077 = vpow.pop %v1076
  %v1078 = vadd.f32 %v1077, 1.0
  %v1079 = vrcp.pop %v1078
  %v1080 = vmul.f32 1.0, %v1079
  %v1081 = vtanh.pop %v1074
  %v1082 = vmul.f32 %v1080, %v952
  %1084 = vrot.lane.b32.xlu0 %v1081, 64
  %v1085 = vpop.permute.xlu0 %1084
  %v1087 = vmul.f32 %v1080, %v1085
  %1089 = vrot.lane.b32.xlu0 %v1087, 32
  %v1090 = vpop.permute.xlu0 %1089
  %v1092 = vadd.f32 %v1082, %v1090
  %v1093 = vtanh.pop %v1092
  %1095 = vrot.lane.b32.xlu0 %v1093, 64
  %v1096 = vpop.permute.xlu0 %1095
  %v1098 = vmul.f32 %v1080, %v1096
  %v1101 = vunpack.c.l.s4 1966171168
  %v1102 = vunpack.c.0.s8 %v1101
  %v1103 = vlaneseq
  %v1104 = vshrl.u32 %v1103, 7
  %v1105 = vsub.s32 %v1102, %v1104
  %v1106 = vrot.slane %v1098, %v1105
  %v1107 = vcombine.high %v1106, %v1106
  %v1109 = vunpack.c.l.s4 1966171168
  %v1110 = vunpack.c.0.s8 %v1109
  %v1111 = vlaneseq
  %v1112 = vshrl.u32 %v1111, 7
  %v1113 = vsub.s32 %v1110, %v1112
  %v1114 = vrot.slane %v1106, %v1113
  %v1116 = vunpack.c.l.s4 1966171168
  %v1117 = vunpack.c.0.s8 %v1116
  %v1118 = vlaneseq
  %v1119 = vshrl.u32 %v1118, 7
  %v1120 = vsub.s32 %v1117, %v1119
  %v1121 = vrot.slane %v1107, %v1120
  %v1122 = vlaneseq
  %v1123 = vshrl.u32 %v1122, 7
  %v1124 = vsub.s32 0, %v1123
  %v1125 = vrot.slane %v1114, %v1124
  %v1126 = vlaneseq
  %v1127 = vshrl.u32 %v1126, 7
  %v1128 = vsub.s32 0, %v1127
  %v1129 = vrot.slane %v1121, %v1128
  %1130 = vrot.lane.b32.xlu0 %v1125, 32
  %v1131 = vpop.permute.xlu0 %1130
  %1132 = vrot.lane.b32.xlu0 %v1129, 32
  %v1133 = vpop.permute.xlu0 %1132
  %1136 = vst.msk [vmem:[%s2 + $0x7] sm:$0x1] %vm155, %v1131
  %1137 = vst.msk [vmem:[%s2 + $0xf] sm:$0x1] %vm155, %v1133
  %1138 = vrot.lane.b32.xlu0 %v1098, 32
  %v1139 = vpop.permute.xlu0 %1138
  %vm1141 = vcmask 254976
  %1142 = vst.msk [vmem:[%s3] sm:$0x3] %vm1141, %v1139
  %1144 = vrot.lane.b32.xlu0 %v1092, 96
  %v1145 = vpop.permute.xlu0 %1144
  %1147 = vst.msk [vmem:[%s4] sm:$0x3] %vm1141, %v1145
  // Predicated region
  $region10: #{_forward_core.2} parent=0 // pred_check
    _
  $region11: #{_forward_core.2} parent=0 // pred_check_branch
    %1149 = sbr.rel (0) target = $region13
  $region12: #{_forward_core.2} parent=0 // pred_region
    _
  $region13: #{_forward_core.2} parent=0 // pred_fallthru
    _
  // Predicated region
  $region14: #{_forward_core.2} parent=0 // pred_check
    _
  $region15: #{_forward_core.2} parent=0 // pred_check_branch
    %1151 = sbr.rel (0) target = $region17
  $region16: #{_forward_core.2} parent=0 // pred_region
    _
  $region17: #{_forward_core.2} parent=0 // pred_fallthru
    _
  // Predicated region
  $region18: #{_forward_core.2} parent=0 // pred_check
    _
  $region19: #{_forward_core.2} parent=0 // pred_check_branch
    %1153 = sbr.rel (0) target = $region21
  $region20: #{_forward_core.2} parent=0 // pred_region
    _
  $region21: #{_forward_core.2} parent=0 // pred_fallthru
    _
  // Predicated region
  $region22: #{_forward_core.2} parent=0 // pred_check
    _
  $region23: #{_forward_core.2} parent=0 // pred_check_branch
    %1155 = sbr.rel (0) target = $region25
  $region24: #{_forward_core.2} parent=0 // pred_region
    _
  $region25: #{_forward_core.2} parent=0 // pred_fallthru
    _
  // Predicated region
  $region26: #{_forward_core.2} parent=0 // pred_check
    _
  $region27: #{_forward_core.2} parent=0 // pred_check_branch
    %1157 = sbr.rel (0) target = $region29
  $region28: #{_forward_core.2} parent=0 // pred_region
    _
  $region29: #{_forward_core.2} parent=0 // pred_fallthru
    _
  // Predicated region
  $region30: #{_forward_core.2} parent=0 // pred_check
    _
  $region31: #{_forward_core.2} parent=0 // pred_check_branch
    %1159 = sbr.rel (0) target = $region33
  $region32: #{_forward_core.2} parent=0 // pred_region
    _
  $region33: #{_forward_core.2} parent=0 // pred_fallthru
    _

// kernel: _forward_core.3
$region0: #{_forward_core.3}
  #allocation0 [shape = 'u32[]', space=smem, size = 0x4, offset = 0x4, fixed_abs, tag = 'smem constant byte address 0x4 - core index']
  #allocation1 [shape = 'u32[144,128]{1,0:T(1,128)}', space=vmem, size = 0x12000, scoped, tag = 'internal scratch']
  #allocation2 [shape = 'f32[2,7,32]{2,1,0:T(8,128)}', space=vmem, size = 0x2000, scoped, tag = 'scratch operand']
  %s0 = inlined_call_operand.vmem [shape: f32[7,2,128], index: 0, kind: input, shape index: {}]
  %s1 = inlined_call_operand.vmem [shape: f32[32,128], index: 1, kind: input, shape index: {}]
  %s2 = inlined_call_operand.vmem [shape: f32[32,32], index: 2, kind: input, shape index: {}]
  %s3 = inlined_call_operand.vmem [shape: f32[32,32], index: 3, kind: input, shape index: {}]
  %s4 = inlined_call_operand.vmem [shape: f32[32,32], index: 4, kind: input, shape index: {}]
  %s5 = inlined_call_operand.vmem [shape: f32[2,8,32], index: 5, kind: input, shape index: {}]
  %s6 = inlined_call_operand.vmem [shape: f32[1,2,32], index: 6, kind: input, shape index: {}]
  %s7 = inlined_call_operand.vmem [shape: f32[1,2,32], index: 7, kind: input, shape index: {}]
  %s8 = inlined_call_operand.vmem [shape: f32[1,2,32], index: 8, kind: input, shape index: {}]
  %s9 = inlined_call_operand.vmem [shape: f32[2,7,32], index: 9, kind: output, shape index: {0}]
  %s10 = inlined_call_operand.vmem [shape: f32[2,7,8], index: 10, kind: output, shape index: {1}]
  %s11 = inlined_call_operand.hbm [shape: f32[1,2,32], index: 11, kind: output, shape index: {2}]
  %s12 = inlined_call_operand.hbm [shape: f32[1,2,32], index: 12, kind: output, shape index: {3}]
  %13 = xla_tuple %s9, %s10, %s11, %s12
  %s14 = sld [smem:[#allocation0]]
  $region70: #{_forward_core.3} parent=0
    _
  %s16 = ssub.s32 1, %s14
  %s17 = scalar_select 0, %s16, %s14
  $region1: #{_forward_core.3} parent=0
    #allocation3 [shape = 'u8[1024]{0}', space=vmem, size = 0x400, scoped, tag = 'output window, operand 2, single buffered']
    #allocation4 [shape = 's32[1]{0}', space=sflag, size = 0x4, scoped, tag = 'scoped memory for _forward_core.3']
    #allocation5 [shape = 'u8[1024]{0}', space=vmem, size = 0x400, scoped, tag = 'output window, operand 3, single buffered']
    #allocation6 [shape = 's32[1]{0}', space=sflag, size = 0x4, scoped, tag = 'scoped memory for _forward_core.3']
    %18 = vsyncpa [#allocation4], 0
    %19 = vsyncpa [#allocation6], 0
    // Predicated region
    $region2: #{_forward_core.3} parent=1 // pred_check
      _
    $region3: #{_forward_core.3} parent=1 // pred_check_branch
      %21 = sbr.rel (0) target = $region5
    $region4: #{_forward_core.3} parent=1 // pred_region
      _
    $region5: #{_forward_core.3} parent=1 // pred_fallthru
      _
    // Predicated region
    $region6: #{_forward_core.3} parent=1 // pred_check
      _
    $region7: #{_forward_core.3} parent=1 // pred_check_branch
      %23 = sbr.rel (0) target = $region9
    $region8: #{_forward_core.3} parent=1 // pred_region
      _
    $region9: #{_forward_core.3} parent=1 // pred_fallthru
      _
    // Predicated region
    $region10: #{_forward_core.3} parent=1 // pred_check
      _
    $region11: #{_forward_core.3} parent=1 // pred_check_branch
      %25 = sbr.rel (0) target = $region13
    $region12: #{_forward_core.3} parent=1 // pred_region
      _
    $region13: #{_forward_core.3} parent=1 // pred_fallthru
      _
    // Predicated region
    $region14: #{_forward_core.3} parent=1 // pred_check
      _
    $region15: #{_forward_core.3} parent=1 // pred_check_branch
      %27 = sbr.rel (0) target = $region17
    $region16: #{_forward_core.3} parent=1 // pred_region
      _
    $region17: #{_forward_core.3} parent=1 // pred_fallthru
      _
    // Predicated region
    $region18: #{_forward_core.3} parent=1 // pred_check
      _
    $region19: #{_forward_core.3} parent=1 // pred_check_branch
      %29 = sbr.rel (0) target = $region21
    $region20: #{_forward_core.3} parent=1 // pred_region
      _
    $region21: #{_forward_core.3} parent=1 // pred_fallthru
      _
    // Predicated region
    $region22: #{_forward_core.3} parent=1 // pred_check
      _
    $region23: #{_forward_core.3} parent=1 // pred_check_branch
      %31 = sbr.rel (0) target = $region25
    $region24: #{_forward_core.3} parent=1 // pred_region
      _
    $region25: #{_forward_core.3} parent=1 // pred_fallthru
      _
    // Predicated region
    $region26: #{_forward_core.3} parent=1 // pred_check
      _
    $region27: #{_forward_core.3} parent=1 // pred_check_branch
      %33 = sbr.rel (0) target = $region29
    $region28: #{_forward_core.3} parent=1 // pred_region
      _
    $region29: #{_forward_core.3} parent=1 // pred_fallthru
      _
    // Predicated region
    $region30: #{_forward_core.3} parent=1 // pred_check
      _
    $region31: #{_forward_core.3} parent=1 // pred_check_branch
      %35 = sbr.rel (0) target = $region33
    $region32: #{_forward_core.3} parent=1 // pred_region
      _
    $region33: #{_forward_core.3} parent=1 // pred_fallthru
      _
    // Predicated region
    $region34: #{_forward_core.3} parent=1 // pred_check
      _
    $region35: #{_forward_core.3} parent=1 // pred_check_branch
      %37 = sbr.rel (0) target = $region37
    $region36: #{_forward_core.3} parent=1 // pred_region
      _
    $region37: #{_forward_core.3} parent=1 // pred_fallthru
      _
    %v38 = vld [vmem:[%s1] sm:$0xff]
    %v39 = vld [vmem:[%s1 + $0x8] sm:$0xff]
    %v40 = vld [vmem:[%s1 + $0x10] sm:$0xff]
    %v41 = vld [vmem:[%s1 + $0x18] sm:$0xff]
    %v42 = vld [vmem:[%s8] sm:$0x3]
    %v43 = vld [vmem:[%s6] sm:$0x3]
    %v44 = vadd.f32 %v43, %v42
    %v45 = vld [vmem:[%s7] sm:$0x3]
    %v46 = vadd.f32 %v45, %v42
    %v47 = vld [vmem:[%s0] sm:$0x3]
    %vm48 = vcmask 261120
    %v50 = vsel %vm48, %v44, 0
    %52 = vmatprep.subr.mxu0 0.0
    %53 = vmatpush1.msra.mxu0 %v38
    %54 = vmatprep.subr.mxu0 0.0
    %55 = vmatpush1.msra.mxu0 %v39
    %56 = vmatprep.subr.mxu0 0.0
    %57 = vmatpush1.msra.mxu0 %v40
    %58 = vmatprep.subr.mxu0 0.0
    %59 = vmatpush1.msra.mxu0 %v41
    %60 = vmatprep.subr.mxu0 0.0
    %61 = vmatpush1.msra.mxu0 0.0
    %62 = vmatprep.subr.mxu0 0.0
    %63 = vmatpush1.msra.mxu0 0.0
    %64 = vmatprep.subr.mxu0 0.0
    %65 = vmatpush1.msra.mxu0 0.0
    %66 = vmatprep.subr.mxu0 0.0
    %67 = vmatpush1.msra.mxu0 0.0
    %68 = vmatprep.subr.mxu0 0.0
    %69 = vmatpush1.msra.mxu0 0.0
    %70 = vmatprep.subr.mxu0 0.0
    %71 = vmatpush1.msra.mxu0 0.0
    %72 = vmatprep.subr.mxu0 0.0
    %73 = vmatpush1.msra.mxu0 0.0
    %74 = vmatprep.subr.mxu0 0.0
    %75 = vmatpush1.msra.mxu0 0.0
    %76 = vmatprep.subr.mxu0 0.0
    %77 = vmatpush1.msra.mxu0 0.0
    %78 = vmatprep.subr.mxu0 0.0
    %79 = vmatpush1.msra.mxu0 0.0
    %80 = vmatprep.subr.mxu0 0.0
    %81 = vmatpush1.msra.mxu0 0.0
    %82 = vmatprep.subr.mxu0 0.0
    %83 = vmatpush1.msra.mxu0 0.0
    %84 = vmatprep.subr.mxu0 0.0
    %85 = vmatpush1.msra.mxu0 0.0
    %86 = vmatprep.subr.mxu0 0.0
    %87 = vmatpush1.msra.mxu0 0.0
    %88 = vmatprep.subr.mxu0 0.0
    %89 = vmatpush1.msra.mxu0 0.0
    %90 = vmatprep.subr.mxu0 0.0
    %91 = vmatpush1.msra.mxu0 0.0
    %92 = vmatprep.subr.mxu0 0.0
    %93 = vmatpush1.msra.mxu0 0.0
    %94 = vmatprep.subr.mxu0 0.0
    %95 = vmatpush1.msra.mxu0 0.0
    %96 = vmatprep.subr.mxu0 0.0
    %97 = vmatpush1.msra.mxu0 0.0
    %98 = vmatprep.subr.mxu0 0.0
    %99 = vmatpush1.msra.mxu0 0.0
    %100 = vmatprep.subr.mxu0 0.0
    %101 = vmatpush1.msra.mxu0 0.0
    %102 = vmatprep.subr.mxu0 0.0
    %103 = vmatpush1.msra.mxu0 0.0
    %104 = vmatprep.subr.mxu0 0.0
    %105 = vmatpush1.msra.mxu0 0.0
    %106 = vmatprep.subr.mxu0 0.0
    %107 = vmatpush1.msra.mxu0 0.0
    %108 = vmatprep.subr.mxu0 0.0
    %109 = vmatpush1.msra.mxu0 0.0
    %110 = vmatprep.subr.mxu0 0.0
    %111 = vmatpush1.msra.mxu0 0.0
    %112 = vmatprep.subr.mxu0 0.0
    %113 = vmatpush1.msra.mxu0 0.0
    %114 = vmatprep.subr.mxu0 0.0
    %115 = vmatpush1.msra.mxu0 0.0
    %116 = vmatprep.mubr.f32.mxu0 0.0
    %117 = vmatmul.mubr.f32.gmra.mrb[0].mxu0 %v50
    %v118 = vpop.f32.mrb[0].mxu0
    %v119 = vadd.f32 0.0, %v118
    %v120 = vpop.f32.mrb[0].mxu0
    %121 = vdwg.mxu0
    %v122 = vadd.f32 %v47, %v119
    %v123 = vxor.u32 %v122, 2147483648
    %v124 = vmul.f32 %v123, 1.442695
    %v125 = vpow.pop %v124
    %v126 = vadd.f32 %v125, 1.0
    %v127 = vrcp.pop %v126
    %v128 = vmul.f32 1.0, %v127
    %v129 = vtanh.pop %v122
    %131 = vrot.lane.b32.xlu0 %v46, 32
    %v132 = vpop.permute.xlu0 %131
    %v134 = vmul.f32 %v128, %v132
    %136 = vrot.lane.b32.xlu0 %v129, 64
    %v137 = vpop.permute.xlu0 %136
    %v139 = vmul.f32 %v128, %v137
    %141 = vrot.lane.b32.xlu0 %v139, 32
    %v142 = vpop.permute.xlu0 %141
    %v144 = vadd.f32 %v134, %v142
    %v145 = vtanh.pop %v144
    %147 = vrot.lane.b32.xlu0 %v145, 64
    %v148 = vpop.permute.xlu0 %147
    %v150 = vmul.f32 %v128, %v148
    %v153 = vunpack.c.l.s4 1966171168
    %v154 = vunpack.c.0.s8 %v153
    %v155 = vlaneseq
    %v156 = vshrl.u32 %v155, 7
    %v157 = vsub.s32 %v154, %v156
    %v158 = vrot.slane %v150, %v157
    %v159 = vcombine.high %v158, %v158
    %v161 = vunpack.c.l.s4 1966171168
    %v162 = vunpack.c.0.s8 %v161
    %v163 = vlaneseq
    %v164 = vshrl.u32 %v163, 7
    %v165 = vsub.s32 %v162, %v164
    %v166 = vrot.slane %v158, %v165
    %v168 = vunpack.c.l.s4 1966171168
    %v169 = vunpack.c.0.s8 %v168
    %v170 = vlaneseq
    %v171 = vshrl.u32 %v170, 7
    %v172 = vsub.s32 %v169, %v171
    %v173 = vrot.slane %v159, %v172
    %v174 = vlaneseq
    %v175 = vshrl.u32 %v174, 7
    %v176 = vsub.s32 0, %v175
    %v177 = vrot.slane %v166, %v176
    %v178 = vlaneseq
    %v179 = vshrl.u32 %v178, 7
    %v180 = vsub.s32 0, %v179
    %v181 = vrot.slane %v173, %v180
    %182 = vrot.lane.b32.xlu0 %v177, 32
    %v183 = vpop.permute.xlu0 %182
    %184 = vrot.lane.b32.xlu0 %v181, 32
    %v185 = vpop.permute.xlu0 %184
    %vm188 = vcmask 253952
    %189 = vst.msk [vmem:[#allocation2] sm:$0x1] %vm188, %v183
    %190 = vst.msk [vmem:[#allocation2 + $0x8] sm:$0x1] %vm188, %v185
    %s191 = scalar_lea.vmem %s0, 2
    %v192 = vld [vmem:[%s191] sm:$0x3]
    %193 = vrot.lane.b32.xlu0 %v150, 32
    %v194 = vpop.permute.xlu0 %193
    %v195 = vsel %vm48, %v194, 0
    %197 = vmatprep.subr.mxu0 0.0
    %198 = vmatpush1.msra.mxu0 %v38
    %199 = vmatprep.subr.mxu0 0.0
    %200 = vmatpush1.msra.mxu0 %v39
    %201 = vmatprep.subr.mxu0 0.0
    %202 = vmatpush1.msra.mxu0 %v40
    %203 = vmatprep.subr.mxu0 0.0
    %204 = vmatpush1.msra.mxu0 %v41
    %205 = vmatprep.subr.mxu0 0.0
    %206 = vmatpush1.msra.mxu0 0.0
    %207 = vmatprep.subr.mxu0 0.0
    %208 = vmatpush1.msra.mxu0 0.0
    %209 = vmatprep.subr.mxu0 0.0
    %210 = vmatpush1.msra.mxu0 0.0
    %211 = vmatprep.subr.mxu0 0.0
    %212 = vmatpush1.msra.mxu0 0.0
    %213 = vmatprep.subr.mxu0 0.0
    %214 = vmatpush1.msra.mxu0 0.0
    %215 = vmatprep.subr.mxu0 0.0
    %216 = vmatpush1.msra.mxu0 0.0
    %217 = vmatprep.subr.mxu0 0.0
    %218 = vmatpush1.msra.mxu0 0.0
    %219 = vmatprep.subr.mxu0 0.0
    %220 = vmatpush1.msra.mxu0 0.0
    %221 = vmatprep.subr.mxu0 0.0
    %222 = vmatpush1.msra.mxu0 0.0
    %223 = vmatprep.subr.mxu0 0.0
    %224 = vmatpush1.msra.mxu0 0.0
    %225 = vmatprep.subr.mxu0 0.0
    %226 = vmatpush1.msra.mxu0 0.0
    %227 = vmatprep.subr.mxu0 0.0
    %228 = vmatpush1.msra.mxu0 0.0
    %229 = vmatprep.subr.mxu0 0.0
    %230 = vmatpush1.msra.mxu0 0.0
    %231 = vmatprep.subr.mxu0 0.0
    %232 = vmatpush1.msra.mxu0 0.0
    %233 = vmatprep.subr.mxu0 0.0
    %234 = vmatpush1.msra.mxu0 0.0
    %235 = vmatprep.subr.mxu0 0.0
    %236 = vmatpush1.msra.mxu0 0.0
    %237 = vmatprep.subr.mxu0 0.0
    %238 = vmatpush1.msra.mxu0 0.0
    %239 = vmatprep.subr.mxu0 0.0
    %240 = vmatpush1.msra.mxu0 0.0
    %241 = vmatprep.subr.mxu0 0.0
    %242 = vmatpush1.msra.mxu0 0.0
    %243 = vmatprep.subr.mxu0 0.0
    %244 = vmatpush1.msra.mxu0 0.0
    %245 = vmatprep.subr.mxu0 0.0
    %246 = vmatpush1.msra.mxu0 0.0
    %247 = vmatprep.subr.mxu0 0.0
    %248 = vmatpush1.msra.mxu0 0.0
    %249 = vmatprep.subr.mxu0 0.0
    %250 = vmatpush1.msra.mxu0 0.0
    %251 = vmatprep.subr.mxu0 0.0
    %252 = vmatpush1.msra.mxu0 0.0
    %253 = vmatprep.subr.mxu0 0.0
    %254 = vmatpush1.msra.mxu0 0.0
    %255 = vmatprep.subr.mxu0 0.0
    %256 = vmatpush1.msra.mxu0 0.0
    %257 = vmatprep.subr.mxu0 0.0
    %258 = vmatpush1.msra.mxu0 0.0
    %259 = vmatprep.subr.mxu0 0.0
    %260 = vmatpush1.msra.mxu0 0.0
    %261 = vmatprep.mubr.f32.mxu0 0.0
    %262 = vmatmul.mubr.f32.gmra.mrb[0].mxu0 %v195
    %v263 = vpop.f32.mrb[0].mxu0
    %v264 = vadd.f32 0.0, %v263
    %v265 = vpop.f32.mrb[0].mxu0
    %266 = vdwg.mxu0
    %v267 = vadd.f32 %v192, %v264
    %v268 = vxor.u32 %v267, 2147483648
    %v269 = vmul.f32 %v268, 1.442695
    %v270 = vpow.pop %v269
    %v271 = vadd.f32 %v270, 1.0
    %v272 = vrcp.pop %v271
    %v273 = vmul.f32 1.0, %v272
    %v274 = vtanh.pop %v267
    %v275 = vmul.f32 %v273, %v144
    %277 = vrot.lane.b32.xlu0 %v274, 64
    %v278 = vpop.permute.xlu0 %277
    %v280 = vmul.f32 %v273, %v278
    %282 = vrot.lane.b32.xlu0 %v280, 32
    %v283 = vpop.permute.xlu0 %282
    %v285 = vadd.f32 %v275, %v283
    %v286 = vtanh.pop %v285
    %288 = vrot.lane.b32.xlu0 %v286, 64
    %v289 = vpop.permute.xlu0 %288
    %v291 = vmul.f32 %v273, %v289
    %v294 = vunpack.c.l.s4 1966171168
    %v295 = vunpack.c.0.s8 %v294
    %v296 = vlaneseq
    %v297 = vshrl.u32 %v296, 7
    %v298 = vsub.s32 %v295, %v297
    %v299 = vrot.slane %v291, %v298
    %v300 = vcombine.high %v299, %v299
    %v302 = vunpack.c.l.s4 1966171168
    %v303 = vunpack.c.0.s8 %v302
    %v304 = vlaneseq
    %v305 = vshrl.u32 %v304, 7
    %v306 = vsub.s32 %v303, %v305
    %v307 = vrot.slane %v299, %v306
    %v309 = vunpack.c.l.s4 1966171168
    %v310 = vunpack.c.0.s8 %v309
    %v311 = vlaneseq
    %v312 = vshrl.u32 %v311, 7
    %v313 = vsub.s32 %v310, %v312
    %v314 = vrot.slane %v300, %v313
    %v315 = vlaneseq
    %v316 = vshrl.u32 %v315, 7
    %v317 = vsub.s32 0, %v316
    %v318 = vrot.slane %v307, %v317
    %v319 = vlaneseq
    %v320 = vshrl.u32 %v319, 7
    %v321 = vsub.s32 0, %v320
    %v322 = vrot.slane %v314, %v321
    %323 = vrot.lane.b32.xlu0 %v318, 32
    %v324 = vpop.permute.xlu0 %323
    %325 = vrot.lane.b32.xlu0 %v322, 32
    %v326 = vpop.permute.xlu0 %325
    %329 = vst.msk [vmem:[#allocation2 + $0x1] sm:$0x1] %vm188, %v324
    %330 = vst.msk [vmem:[#allocation2 + $0x9] sm:$0x1] %vm188, %v326
    %s331 = scalar_lea.vmem %s0, 4
    %v332 = vld [vmem:[%s331] sm:$0x3]
    %333 = vrot.lane.b32.xlu0 %v291, 32
    %v334 = vpop.permute.xlu0 %333
    %v335 = vsel %vm48, %v334, 0
    %337 = vmatprep.subr.mxu0 0.0
    %338 = vmatpush1.msra.mxu0 %v38
    %339 = vmatprep.subr.mxu0 0.0
    %340 = vmatpush1.msra.mxu0 %v39
    %341 = vmatprep.subr.mxu0 0.0
    %342 = vmatpush1.msra.mxu0 %v40
    %343 = vmatprep.subr.mxu0 0.0
    %344 = vmatpush1.msra.mxu0 %v41
    %345 = vmatprep.subr.mxu0 0.0
    %346 = vmatpush1.msra.mxu0 0.0
    %347 = vmatprep.subr.mxu0 0.0
    %348 = vmatpush1.msra.mxu0 0.0
    %349 = vmatprep.subr.mxu0 0.0
    %350 = vmatpush1.msra.mxu0 0.0
    %351 = vmatprep.subr.mxu0 0.0
    %352 = vmatpush1.msra.mxu0 0.0
    %353 = vmatprep.subr.mxu0 0.0
    %354 = vmatpush1.msra.mxu0 0.0
    %355 = vmatprep.subr.mxu0 0.0
    %356 = vmatpush1.msra.mxu0 0.0
    %357 = vmatprep.subr.mxu0 0.0
    %358 = vmatpush1.msra.mxu0 0.0
    %359 = vmatprep.subr.mxu0 0.0
    %360 = vmatpush1.msra.mxu0 0.0
    %361 = vmatprep.subr.mxu0 0.0
    %362 = vmatpush1.msra.mxu0 0.0
    %363 = vmatprep.subr.mxu0 0.0
    %364 = vmatpush1.msra.mxu0 0.0
    %365 = vmatprep.subr.mxu0 0.0
    %366 = vmatpush1.msra.mxu0 0.0
    %367 = vmatprep.subr.mxu0 0.0
    %368 = vmatpush1.msra.mxu0 0.0
    %369 = vmatprep.subr.mxu0 0.0
    %370 = vmatpush1.msra.mxu0 0.0
    %371 = vmatprep.subr.mxu0 0.0
    %372 = vmatpush1.msra.mxu0 0.0
    %373 = vmatprep.subr.mxu0 0.0
    %374 = vmatpush1.msra.mxu0 0.0
    %375 = vmatprep.subr.mxu0 0.0
    %376 = vmatpush1.msra.mxu0 0.0
    %377 = vmatprep.subr.mxu0 0.0
    %378 = vmatpush1.msra.mxu0 0.0
    %379 = vmatprep.subr.mxu0 0.0
    %380 = vmatpush1.msra.mxu0 0.0
    %381 = vmatprep.subr.mxu0 0.0
    %382 = vmatpush1.msra.mxu0 0.0
    %383 = vmatprep.subr.mxu0 0.0
    %384 = vmatpush1.msra.mxu0 0.0
    %385 = vmatprep.subr.mxu0 0.0
    %386 = vmatpush1.msra.mxu0 0.0
    %387 = vmatprep.subr.mxu0 0.0
    %388 = vmatpush1.msra.mxu0 0.0
    %389 = vmatprep.subr.mxu0 0.0
    %390 = vmatpush1.msra.mxu0 0.0
    %391 = vmatprep.subr.mxu0 0.0
    %392 = vmatpush1.msra.mxu0 0.0
    %393 = vmatprep.subr.mxu0 0.0
    %394 = vmatpush1.msra.mxu0 0.0
    %395 = vmatprep.subr.mxu0 0.0
    %396 = vmatpush1.msra.mxu0 0.0
    %397 = vmatprep.subr.mxu0 0.0
    %398 = vmatpush1.msra.mxu0 0.0
    %399 = vmatprep.subr.mxu0 0.0
    %400 = vmatpush1.msra.mxu0 0.0
    %401 = vmatprep.mubr.f32.mxu0 0.0
    %402 = vmatmul.mubr.f32.gmra.mrb[0].mxu0 %v335
    %v403 = vpop.f32.mrb[0].mxu0
    %v404 = vadd.f32 0.0, %v403
    %v405 = vpop.f32.mrb[0].mxu0
    %406 = vdwg.mxu0
    %v407 = vadd.f32 %v332, %v404
    %v408 = vxor.u32 %v407, 2147483648
    %v409 = vmul.f32 %v408, 1.442695
    %v410 = vpow.pop %v409
    %v411 = vadd.f32 %v410, 1.0
    %v412 = vrcp.pop %v411
    %v413 = vmul.f32 1.0, %v412
    %v414 = vtanh.pop %v407
    %v415 = vmul.f32 %v413, %v285
    %417 = vrot.lane.b32.xlu0 %v414, 64
    %v418 = vpop.permute.xlu0 %417
    %v420 = vmul.f32 %v413, %v418
    %422 = vrot.lane.b32.xlu0 %v420, 32
    %v423 = vpop.permute.xlu0 %422
    %v425 = vadd.f32 %v415, %v423
    %v426 = vtanh.pop %v425
    %428 = vrot.lane.b32.xlu0 %v426, 64
    %v429 = vpop.permute.xlu0 %428
    %v431 = vmul.f32 %v413, %v429
    %v434 = vunpack.c.l.s4 1966171168
    %v435 = vunpack.c.0.s8 %v434
    %v436 = vlaneseq
    %v437 = vshrl.u32 %v436, 7
    %v438 = vsub.s32 %v435, %v437
    %v439 = vrot.slane %v431, %v438
    %v440 = vcombine.high %v439, %v439
    %v442 = vunpack.c.l.s4 1966171168
    %v443 = vunpack.c.0.s8 %v442
    %v444 = vlaneseq
    %v445 = vshrl.u32 %v444, 7
    %v446 = vsub.s32 %v443, %v445
    %v447 = vrot.slane %v439, %v446
    %v449 = vunpack.c.l.s4 1966171168
    %v450 = vunpack.c.0.s8 %v449
    %v451 = vlaneseq
    %v452 = vshrl.u32 %v451, 7
    %v453 = vsub.s32 %v450, %v452
    %v454 = vrot.slane %v440, %v453
    %v455 = vlaneseq
    %v456 = vshrl.u32 %v455, 7
    %v457 = vsub.s32 0, %v456
    %v458 = vrot.slane %v447, %v457
    %v459 = vlaneseq
    %v460 = vshrl.u32 %v459, 7
    %v461 = vsub.s32 0, %v460
    %v462 = vrot.slane %v454, %v461
    %463 = vrot.lane.b32.xlu0 %v458, 32
    %v464 = vpop.permute.xlu0 %463
    %465 = vrot.lane.b32.xlu0 %v462, 32
    %v466 = vpop.permute.xlu0 %465
    %469 = vst.msk [vmem:[#allocation2 + $0x2] sm:$0x1] %vm188, %v464
    %470 = vst.msk [vmem:[#allocation2 + $0xa] sm:$0x1] %vm188, %v466
    %s471 = scalar_lea.vmem %s0, 6
    %v472 = vld [vmem:[%s471] sm:$0x3]
    %473 = vrot.lane.b32.xlu0 %v431, 32
    %v474 = vpop.permute.xlu0 %473
    %v475 = vsel %vm48, %v474, 0
    %477 = vmatprep.subr.mxu0 0.0
    %478 = vmatpush1.msra.mxu0 %v38
    %479 = vmatprep.subr.mxu0 0.0
    %480 = vmatpush1.msra.mxu0 %v39
    %481 = vmatprep.subr.mxu0 0.0
    %482 = vmatpush1.msra.mxu0 %v40
    %483 = vmatprep.subr.mxu0 0.0
    %484 = vmatpush1.msra.mxu0 %v41
    %485 = vmatprep.subr.mxu0 0.0
    %486 = vmatpush1.msra.mxu0 0.0
    %487 = vmatprep.subr.mxu0 0.0
    %488 = vmatpush1.msra.mxu0 0.0
    %489 = vmatprep.subr.mxu0 0.0
    %490 = vmatpush1.msra.mxu0 0.0
    %491 = vmatprep.subr.mxu0 0.0
    %492 = vmatpush1.msra.mxu0 0.0
    %493 = vmatprep.subr.mxu0 0.0
    %494 = vmatpush1.msra.mxu0 0.0
    %495 = vmatprep.subr.mxu0 0.0
    %496 = vmatpush1.msra.mxu0 0.0
    %497 = vmatprep.subr.mxu0 0.0
    %498 = vmatpush1.msra.mxu0 0.0
    %499 = vmatprep.subr.mxu0 0.0
    %500 = vmatpush1.msra.mxu0 0.0
    %501 = vmatprep.subr.mxu0 0.0
    %502 = vmatpush1.msra.mxu0 0.0
    %503 = vmatprep.subr.mxu0 0.0
    %504 = vmatpush1.msra.mxu0 0.0
    %505 = vmatprep.subr.mxu0 0.0
    %506 = vmatpush1.msra.mxu0 0.0
    %507 = vmatprep.subr.mxu0 0.0
    %508 = vmatpush1.msra.mxu0 0.0
    %509 = vmatprep.subr.mxu0 0.0
    %510 = vmatpush1.msra.mxu0 0.0
    %511 = vmatprep.subr.mxu0 0.0
    %512 = vmatpush1.msra.mxu0 0.0
    %513 = vmatprep.subr.mxu0 0.0
    %514 = vmatpush1.msra.mxu0 0.0
    %515 = vmatprep.subr.mxu0 0.0
    %516 = vmatpush1.msra.mxu0 0.0
    %517 = vmatprep.subr.mxu0 0.0
    %518 = vmatpush1.msra.mxu0 0.0
    %519 = vmatprep.subr.mxu0 0.0
    %520 = vmatpush1.msra.mxu0 0.0
    %521 = vmatprep.subr.mxu0 0.0
    %522 = vmatpush1.msra.mxu0 0.0
    %523 = vmatprep.subr.mxu0 0.0
    %524 = vmatpush1.msra.mxu0 0.0
    %525 = vmatprep.subr.mxu0 0.0
    %526 = vmatpush1.msra.mxu0 0.0
    %527 = vmatprep.subr.mxu0 0.0
    %528 = vmatpush1.msra.mxu0 0.0
    %529 = vmatprep.subr.mxu0 0.0
    %530 = vmatpush1.msra.mxu0 0.0
    %531 = vmatprep.subr.mxu0 0.0
    %532 = vmatpush1.msra.mxu0 0.0
    %533 = vmatprep.subr.mxu0 0.0
    %534 = vmatpush1.msra.mxu0 0.0
    %535 = vmatprep.subr.mxu0 0.0
    %536 = vmatpush1.msra.mxu0 0.0
    %537 = vmatprep.subr.mxu0 0.0
    %538 = vmatpush1.msra.mxu0 0.0
    %539 = vmatprep.subr.mxu0 0.0
    %540 = vmatpush1.msra.mxu0 0.0
    %541 = vmatprep.mubr.f32.mxu0 0.0
    %542 = vmatmul.mubr.f32.gmra.mrb[0].mxu0 %v475
    %v543 = vpop.f32.mrb[0].mxu0
    %v544 = vadd.f32 0.0, %v543
    %v545 = vpop.f32.mrb[0].mxu0
    %546 = vdwg.mxu0
    %v547 = vadd.f32 %v472, %v544
    %v548 = vxor.u32 %v547, 2147483648
    %v549 = vmul.f32 %v548, 1.442695
    %v550 = vpow.pop %v549
    %v551 = vadd.f32 %v550, 1.0
    %v552 = vrcp.pop %v551
    %v553 = vmul.f32 1.0, %v552
    %v554 = vtanh.pop %v547
    %v555 = vmul.f32 %v553, %v425
    %557 = vrot.lane.b32.xlu0 %v554, 64
    %v558 = vpop.permute.xlu0 %557
    %v560 = vmul.f32 %v553, %v558
    %562 = vrot.lane.b32.xlu0 %v560, 32
    %v563 = vpop.permute.xlu0 %562
    %v565 = vadd.f32 %v555, %v563
    %v566 = vtanh.pop %v565
    %568 = vrot.lane.b32.xlu0 %v566, 64
    %v569 = vpop.permute.xlu0 %568
    %v571 = vmul.f32 %v553, %v569
    %v574 = vunpack.c.l.s4 1966171168
    %v575 = vunpack.c.0.s8 %v574
    %v576 = vlaneseq
    %v577 = vshrl.u32 %v576, 7
    %v578 = vsub.s32 %v575, %v577
    %v579 = vrot.slane %v571, %v578
    %v580 = vcombine.high %v579, %v579
    %v582 = vunpack.c.l.s4 1966171168
    %v583 = vunpack.c.0.s8 %v582
    %v584 = vlaneseq
    %v585 = vshrl.u32 %v584, 7
    %v586 = vsub.s32 %v583, %v585
    %v587 = vrot.slane %v579, %v586
    %v589 = vunpack.c.l.s4 1966171168
    %v590 = vunpack.c.0.s8 %v589
    %v591 = vlaneseq
    %v592 = vshrl.u32 %v591, 7
    %v593 = vsub.s32 %v590, %v592
    %v594 = vrot.slane %v580, %v593
    %v595 = vlaneseq
    %v596 = vshrl.u32 %v595, 7
    %v597 = vsub.s32 0, %v596
    %v598 = vrot.slane %v587, %v597
    %v599 = vlaneseq
    %v600 = vshrl.u32 %v599, 7
    %v601 = vsub.s32 0, %v600
    %v602 = vrot.slane %v594, %v601
    %603 = vrot.lane.b32.xlu0 %v598, 32
    %v604 = vpop.permute.xlu0 %603
    %605 = vrot.lane.b32.xlu0 %v602, 32
    %v606 = vpop.permute.xlu0 %605
    %609 = vst.msk [vmem:[#allocation2 + $0x3] sm:$0x1] %vm188, %v604
    %610 = vst.msk [vmem:[#allocation2 + $0xb] sm:$0x1] %vm188, %v606
    %s611 = scalar_lea.vmem %s0, 8
    %v612 = vld [vmem:[%s611] sm:$0x3]
    %613 = vrot.lane.b32.xlu0 %v571, 32
    %v614 = vpop.permute.xlu0 %613
    %v615 = vsel %vm48, %v614, 0
    %617 = vmatprep.subr.mxu0 0.0
    %618 = vmatpush1.msra.mxu0 %v38
    %619 = vmatprep.subr.mxu0 0.0
    %620 = vmatpush1.msra.mxu0 %v39
    %621 = vmatprep.subr.mxu0 0.0
    %622 = vmatpush1.msra.mxu0 %v40
    %623 = vmatprep.subr.mxu0 0.0
    %624 = vmatpush1.msra.mxu0 %v41
    %625 = vmatprep.subr.mxu0 0.0
    %626 = vmatpush1.msra.mxu0 0.0
    %627 = vmatprep.subr.mxu0 0.0
    %628 = vmatpush1.msra.mxu0 0.0
    %629 = vmatprep.subr.mxu0 0.0
    %630 = vmatpush1.msra.mxu0 0.0
    %631 = vmatprep.subr.mxu0 0.0
    %632 = vmatpush1.msra.mxu0 0.0
    %633 = vmatprep.subr.mxu0 0.0
    %634 = vmatpush1.msra.mxu0 0.0
    %635 = vmatprep.subr.mxu0 0.0
    %636 = vmatpush1.msra.mxu0 0.0
    %637 = vmatprep.subr.mxu0 0.0
    %638 = vmatpush1.msra.mxu0 0.0
    %639 = vmatprep.subr.mxu0 0.0
    %640 = vmatpush1.msra.mxu0 0.0
    %641 = vmatprep.subr.mxu0 0.0
    %642 = vmatpush1.msra.mxu0 0.0
    %643 = vmatprep.subr.mxu0 0.0
    %644 = vmatpush1.msra.mxu0 0.0
    %645 = vmatprep.subr.mxu0 0.0
    %646 = vmatpush1.msra.mxu0 0.0
    %647 = vmatprep.subr.mxu0 0.0
    %648 = vmatpush1.msra.mxu0 0.0
    %649 = vmatprep.subr.mxu0 0.0
    %650 = vmatpush1.msra.mxu0 0.0
    %651 = vmatprep.subr.mxu0 0.0
    %652 = vmatpush1.msra.mxu0 0.0
    %653 = vmatprep.subr.mxu0 0.0
    %654 = vmatpush1.msra.mxu0 0.0
    %655 = vmatprep.subr.mxu0 0.0
    %656 = vmatpush1.msra.mxu0 0.0
    %657 = vmatprep.subr.mxu0 0.0
    %658 = vmatpush1.msra.mxu0 0.0
    %659 = vmatprep.subr.mxu0 0.0
    %660 = vmatpush1.msra.mxu0 0.0
    %661 = vmatprep.subr.mxu0 0.0
    %662 = vmatpush1.msra.mxu0 0.0
    %663 = vmatprep.subr.mxu0 0.0
    %664 = vmatpush1.msra.mxu0 0.0
    %665 = vmatprep.subr.mxu0 0.0
    %666 = vmatpush1.msra.mxu0 0.0
    %667 = vmatprep.subr.mxu0 0.0
    %668 = vmatpush1.msra.mxu0 0.0
    %669 = vmatprep.subr.mxu0 0.0
    %670 = vmatpush1.msra.mxu0 0.0
    %671 = vmatprep.subr.mxu0 0.0
    %672 = vmatpush1.msra.mxu0 0.0
    %673 = vmatprep.subr.mxu0 0.0
    %674 = vmatpush1.msra.mxu0 0.0
    %675 = vmatprep.subr.mxu0 0.0
    %676 = vmatpush1.msra.mxu0 0.0
    %677 = vmatprep.subr.mxu0 0.0
    %678 = vmatpush1.msra.mxu0 0.0
    %679 = vmatprep.subr.mxu0 0.0
    %680 = vmatpush1.msra.mxu0 0.0
    %681 = vmatprep.mubr.f32.mxu0 0.0
    %682 = vmatmul.mubr.f32.gmra.mrb[0].mxu0 %v615
    %v683 = vpop.f32.mrb[0].mxu0
    %v684 = vadd.f32 0.0, %v683
    %v685 = vpop.f32.mrb[0].mxu0
    %686 = vdwg.mxu0
    %v687 = vadd.f32 %v612, %v684
    %v688 = vxor.u32 %v687, 2147483648
    %v689 = vmul.f32 %v688, 1.442695
    %v690 = vpow.pop %v689
    %v691 = vadd.f32 %v690, 1.0
    %v692 = vrcp.pop %v691
    %v693 = vmul.f32 1.0, %v692
    %v694 = vtanh.pop %v687
    %v695 = vmul.f32 %v693, %v565
    %697 = vrot.lane.b32.xlu0 %v694, 64
    %v698 = vpop.permute.xlu0 %697
    %v700 = vmul.f32 %v693, %v698
    %702 = vrot.lane.b32.xlu0 %v700, 32
    %v703 = vpop.permute.xlu0 %702
    %v705 = vadd.f32 %v695, %v703
    %v706 = vtanh.pop %v705
    %708 = vrot.lane.b32.xlu0 %v706, 64
    %v709 = vpop.permute.xlu0 %708
    %v711 = vmul.f32 %v693, %v709
    %v714 = vunpack.c.l.s4 1966171168
    %v715 = vunpack.c.0.s8 %v714
    %v716 = vlaneseq
    %v717 = vshrl.u32 %v716, 7
    %v718 = vsub.s32 %v715, %v717
    %v719 = vrot.slane %v711, %v718
    %v720 = vcombine.high %v719, %v719
    %v722 = vunpack.c.l.s4 1966171168
    %v723 = vunpack.c.0.s8 %v722
    %v724 = vlaneseq
    %v725 = vshrl.u32 %v724, 7
    %v726 = vsub.s32 %v723, %v725
    %v727 = vrot.slane %v719, %v726
    %v729 = vunpack.c.l.s4 1966171168
    %v730 = vunpack.c.0.s8 %v729
    %v731 = vlaneseq
    %v732 = vshrl.u32 %v731, 7
    %v733 = vsub.s32 %v730, %v732
    %v734 = vrot.slane %v720, %v733
    %v735 = vlaneseq
    %v736 = vshrl.u32 %v735, 7
    %v737 = vsub.s32 0, %v736
    %v738 = vrot.slane %v727, %v737
    %v739 = vlaneseq
    %v740 = vshrl.u32 %v739, 7
    %v741 = vsub.s32 0, %v740
    %v742 = vrot.slane %v734, %v741
    %743 = vrot.lane.b32.xlu0 %v738, 32
    %v744 = vpop.permute.xlu0 %743
    %745 = vrot.lane.b32.xlu0 %v742, 32
    %v746 = vpop.permute.xlu0 %745
    %749 = vst.msk [vmem:[#allocation2 + $0x4] sm:$0x1] %vm188, %v744
    %750 = vst.msk [vmem:[#allocation2 + $0xc] sm:$0x1] %vm188, %v746
    %s751 = scalar_lea.vmem %s0, 10
    %v752 = vld [vmem:[%s751] sm:$0x3]
    %753 = vrot.lane.b32.xlu0 %v711, 32
    %v754 = vpop.permute.xlu0 %753
    %v755 = vsel %vm48, %v754, 0
    %757 = vmatprep.subr.mxu0 0.0
    %758 = vmatpush1.msra.mxu0 %v38
    %759 = vmatprep.subr.mxu0 0.0
    %760 = vmatpush1.msra.mxu0 %v39
    %761 = vmatprep.subr.mxu0 0.0
    %762 = vmatpush1.msra.mxu0 %v40
    %763 = vmatprep.subr.mxu0 0.0
    %764 = vmatpush1.msra.mxu0 %v41
    %765 = vmatprep.subr.mxu0 0.0
    %766 = vmatpush1.msra.mxu0 0.0
    %767 = vmatprep.subr.mxu0 0.0
    %768 = vmatpush1.msra.mxu0 0.0
    %769 = vmatprep.subr.mxu0 0.0
    %770 = vmatpush1.msra.mxu0 0.0
    %771 = vmatprep.subr.mxu0 0.0
    %772 = vmatpush1.msra.mxu0 0.0
    %773 = vmatprep.subr.mxu0 0.0
    %774 = vmatpush1.msra.mxu0 0.0
    %775 = vmatprep.subr.mxu0 0.0
    %776 = vmatpush1.msra.mxu0 0.0
    %777 = vmatprep.subr.mxu0 0.0
    %778 = vmatpush1.msra.mxu0 0.0
    %779 = vmatprep.subr.mxu0 0.0
    %780 = vmatpush1.msra.mxu0 0.0
    %781 = vmatprep.subr.mxu0 0.0
    %782 = vmatpush1.msra.mxu0 0.0
    %783 = vmatprep.subr.mxu0 0.0
    %784 = vmatpush1.msra.mxu0 0.0
    %785 = vmatprep.subr.mxu0 0.0
    %786 = vmatpush1.msra.mxu0 0.0
    %787 = vmatprep.subr.mxu0 0.0
    %788 = vmatpush1.msra.mxu0 0.0
    %789 = vmatprep.subr.mxu0 0.0
    %790 = vmatpush1.msra.mxu0 0.0
    %791 = vmatprep.subr.mxu0 0.0
    %792 = vmatpush1.msra.mxu0 0.0
    %793 = vmatprep.subr.mxu0 0.0
    %794 = vmatpush1.msra.mxu0 0.0
    %795 = vmatprep.subr.mxu0 0.0
    %796 = vmatpush1.msra.mxu0 0.0
    %797 = vmatprep.subr.mxu0 0.0
    %798 = vmatpush1.msra.mxu0 0.0
    %799 = vmatprep.subr.mxu0 0.0
    %800 = vmatpush1.msra.mxu0 0.0
    %801 = vmatprep.subr.mxu0 0.0
    %802 = vmatpush1.msra.mxu0 0.0
    %803 = vmatprep.subr.mxu0 0.0
    %804 = vmatpush1.msra.mxu0 0.0
    %805 = vmatprep.subr.mxu0 0.0
    %806 = vmatpush1.msra.mxu0 0.0
    %807 = vmatprep.subr.mxu0 0.0
    %808 = vmatpush1.msra.mxu0 0.0
    %809 = vmatprep.subr.mxu0 0.0
    %810 = vmatpush1.msra.mxu0 0.0
    %811 = vmatprep.subr.mxu0 0.0
    %812 = vmatpush1.msra.mxu0 0.0
    %813 = vmatprep.subr.mxu0 0.0
    %814 = vmatpush1.msra.mxu0 0.0
    %815 = vmatprep.subr.mxu0 0.0
    %816 = vmatpush1.msra.mxu0 0.0
    %817 = vmatprep.subr.mxu0 0.0
    %818 = vmatpush1.msra.mxu0 0.0
    %819 = vmatprep.subr.mxu0 0.0
    %820 = vmatpush1.msra.mxu0 0.0
    %821 = vmatprep.mubr.f32.mxu0 0.0
    %822 = vmatmul.mubr.f32.gmra.mrb[0].mxu0 %v755
    %v823 = vpop.f32.mrb[0].mxu0
    %v824 = vadd.f32 0.0, %v823
    %v825 = vpop.f32.mrb[0].mxu0
    %826 = vdwg.mxu0
    %v827 = vadd.f32 %v752, %v824
    %v828 = vxor.u32 %v827, 2147483648
    %v829 = vmul.f32 %v828, 1.442695
    %v830 = vpow.pop %v829
    %v831 = vadd.f32 %v830, 1.0
    %v832 = vrcp.pop %v831
    %v833 = vmul.f32 1.0, %v832
    %v834 = vtanh.pop %v827
    %v835 = vmul.f32 %v833, %v705
    %837 = vrot.lane.b32.xlu0 %v834, 64
    %v838 = vpop.permute.xlu0 %837
    %v840 = vmul.f32 %v833, %v838
    %842 = vrot.lane.b32.xlu0 %v840, 32
    %v843 = vpop.permute.xlu0 %842
    %v845 = vadd.f32 %v835, %v843
    %v846 = vtanh.pop %v845
    %848 = vrot.lane.b32.xlu0 %v846, 64
    %v849 = vpop.permute.xlu0 %848
    %v851 = vmul.f32 %v833, %v849
    %v854 = vunpack.c.l.s4 1966171168
    %v855 = vunpack.c.0.s8 %v854
    %v856 = vlaneseq
    %v857 = vshrl.u32 %v856, 7
    %v858 = vsub.s32 %v855, %v857
    %v859 = vrot.slane %v851, %v858
    %v860 = vcombine.high %v859, %v859
    %v862 = vunpack.c.l.s4 1966171168
    %v863 = vunpack.c.0.s8 %v862
    %v864 = vlaneseq
    %v865 = vshrl.u32 %v864, 7
    %v866 = vsub.s32 %v863, %v865
    %v867 = vrot.slane %v859, %v866
    %v869 = vunpack.c.l.s4 1966171168
    %v870 = vunpack.c.0.s8 %v869
    %v871 = vlaneseq
    %v872 = vshrl.u32 %v871, 7
    %v873 = vsub.s32 %v870, %v872
    %v874 = vrot.slane %v860, %v873
    %v875 = vlaneseq
    %v876 = vshrl.u32 %v875, 7
    %v877 = vsub.s32 0, %v876
    %v878 = vrot.slane %v867, %v877
    %v879 = vlaneseq
    %v880 = vshrl.u32 %v879, 7
    %v881 = vsub.s32 0, %v880
    %v882 = vrot.slane %v874, %v881
    %883 = vrot.lane.b32.xlu0 %v878, 32
    %v884 = vpop.permute.xlu0 %883
    %885 = vrot.lane.b32.xlu0 %v882, 32
    %v886 = vpop.permute.xlu0 %885
    %889 = vst.msk [vmem:[#allocation2 + $0x5] sm:$0x1] %vm188, %v884
    %890 = vst.msk [vmem:[#allocation2 + $0xd] sm:$0x1] %vm188, %v886
    %s891 = scalar_lea.vmem %s0, 12
    %v892 = vld [vmem:[%s891] sm:$0x3]
    %893 = vrot.lane.b32.xlu0 %v851, 32
    %v894 = vpop.permute.xlu0 %893
    %v895 = vsel %vm48, %v894, 0
    %897 = vmatprep.subr.mxu0 0.0
    %898 = vmatpush1.msra.mxu0 %v38
    %899 = vmatprep.subr.mxu0 0.0
    %900 = vmatpush1.msra.mxu0 %v39
    %901 = vmatprep.subr.mxu0 0.0
    %902 = vmatpush1.msra.mxu0 %v40
    %903 = vmatprep.subr.mxu0 0.0
    %904 = vmatpush1.msra.mxu0 %v41
    %905 = vmatprep.subr.mxu0 0.0
    %906 = vmatpush1.msra.mxu0 0.0
    %907 = vmatprep.subr.mxu0 0.0
    %908 = vmatpush1.msra.mxu0 0.0
    %909 = vmatprep.subr.mxu0 0.0
    %910 = vmatpush1.msra.mxu0 0.0
    %911 = vmatprep.subr.mxu0 0.0
    %912 = vmatpush1.msra.mxu0 0.0
    %913 = vmatprep.subr.mxu0 0.0
    %914 = vmatpush1.msra.mxu0 0.0
    %915 = vmatprep.subr.mxu0 0.0
    %916 = vmatpush1.msra.mxu0 0.0
    %917 = vmatprep.subr.mxu0 0.0
    %918 = vmatpush1.msra.mxu0 0.0
    %919 = vmatprep.subr.mxu0 0.0
    %920 = vmatpush1.msra.mxu0 0.0
    %921 = vmatprep.subr.mxu0 0.0
    %922 = vmatpush1.msra.mxu0 0.0
    %923 = vmatprep.subr.mxu0 0.0
    %924 = vmatpush1.msra.mxu0 0.0
    %925 = vmatprep.subr.mxu0 0.0
    %926 = vmatpush1.msra.mxu0 0.0
    %927 = vmatprep.subr.mxu0 0.0
    %928 = vmatpush1.msra.mxu0 0.0
    %929 = vmatprep.subr.mxu0 0.0
    %930 = vmatpush1.msra.mxu0 0.0
    %931 = vmatprep.subr.mxu0 0.0
    %932 = vmatpush1.msra.mxu0 0.0
    %933 = vmatprep.subr.mxu0 0.0
    %934 = vmatpush1.msra.mxu0 0.0
    %935 = vmatprep.subr.mxu0 0.0
    %936 = vmatpush1.msra.mxu0 0.0
    %937 = vmatprep.subr.mxu0 0.0
    %938 = vmatpush1.msra.mxu0 0.0
    %939 = vmatprep.subr.mxu0 0.0
    %940 = vmatpush1.msra.mxu0 0.0
    %941 = vmatprep.subr.mxu0 0.0
    %942 = vmatpush1.msra.mxu0 0.0
    %943 = vmatprep.subr.mxu0 0.0
    %944 = vmatpush1.msra.mxu0 0.0
    %945 = vmatprep.subr.mxu0 0.0
    %946 = vmatpush1.msra.mxu0 0.0
    %947 = vmatprep.subr.mxu0 0.0
    %948 = vmatpush1.msra.mxu0 0.0
    %949 = vmatprep.subr.mxu0 0.0
    %950 = vmatpush1.msra.mxu0 0.0
    %951 = vmatprep.subr.mxu0 0.0
    %952 = vmatpush1.msra.mxu0 0.0
    %953 = vmatprep.subr.mxu0 0.0
    %954 = vmatpush1.msra.mxu0 0.0
    %955 = vmatprep.subr.mxu0 0.0
    %956 = vmatpush1.msra.mxu0 0.0
    %957 = vmatprep.subr.mxu0 0.0
    %958 = vmatpush1.msra.mxu0 0.0
    %959 = vmatprep.subr.mxu0 0.0
    %960 = vmatpush1.msra.mxu0 0.0
    %961 = vmatprep.mubr.f32.mxu0 0.0
    %962 = vmatmul.mubr.f32.gmra.mrb[0].mxu0 %v895
    %v963 = vpop.f32.mrb[0].mxu0
    %v964 = vadd.f32 0.0, %v963
    %v965 = vpop.f32.mrb[0].mxu0
    %966 = vdwg.mxu0
    %v967 = vadd.f32 %v892, %v964
    %v968 = vxor.u32 %v967, 2147483648
    %v969 = vmul.f32 %v968, 1.442695
    %v970 = vpow.pop %v969
    %v971 = vadd.f32 %v970, 1.0
    %v972 = vrcp.pop %v971
    %v973 = vmul.f32 1.0, %v972
    %v974 = vtanh.pop %v967
    %v975 = vmul.f32 %v973, %v845
    %977 = vrot.lane.b32.xlu0 %v974, 64
    %v978 = vpop.permute.xlu0 %977
    %v980 = vmul.f32 %v973, %v978
    %982 = vrot.lane.b32.xlu0 %v980, 32
    %v983 = vpop.permute.xlu0 %982
    %v985 = vadd.f32 %v975, %v983
    %v986 = vtanh.pop %v985
    %988 = vrot.lane.b32.xlu0 %v986, 64
    %v989 = vpop.permute.xlu0 %988
    %v991 = vmul.f32 %v973, %v989
    %v994 = vunpack.c.l.s4 1966171168
    %v995 = vunpack.c.0.s8 %v994
    %v996 = vlaneseq
    %v997 = vshrl.u32 %v996, 7
    %v998 = vsub.s32 %v995, %v997
    %v999 = vrot.slane %v991, %v998
    %v1000 = vcombine.high %v999, %v999
    %v1002 = vunpack.c.l.s4 1966171168
    %v1003 = vunpack.c.0.s8 %v1002
    %v1004 = vlaneseq
    %v1005 = vshrl.u32 %v1004, 7
    %v1006 = vsub.s32 %v1003, %v1005
    %v1007 = vrot.slane %v999, %v1006
    %v1009 = vunpack.c.l.s4 1966171168
    %v1010 = vunpack.c.0.s8 %v1009
    %v1011 = vlaneseq
    %v1012 = vshrl.u32 %v1011, 7
    %v1013 = vsub.s32 %v1010, %v1012
    %v1014 = vrot.slane %v1000, %v1013
    %v1015 = vlaneseq
    %v1016 = vshrl.u32 %v1015, 7
    %v1017 = vsub.s32 0, %v1016
    %v1018 = vrot.slane %v1007, %v1017
    %v1019 = vlaneseq
    %v1020 = vshrl.u32 %v1019, 7
    %v1021 = vsub.s32 0, %v1020
    %v1022 = vrot.slane %v1014, %v1021
    %1023 = vrot.lane.b32.xlu0 %v1018, 32
    %v1024 = vpop.permute.xlu0 %1023
    %1025 = vrot.lane.b32.xlu0 %v1022, 32
    %v1026 = vpop.permute.xlu0 %1025
    %1029 = vst.msk [vmem:[#allocation2 + $0x6] sm:$0x1] %vm188, %v1024
    %1030 = vst.msk [vmem:[#allocation2 + $0xe] sm:$0x1] %vm188, %v1026
    %1031 = vrot.lane.b32.xlu0 %v991, 32
    %v1032 = vpop.permute.xlu0 %1031
    %vm1034 = vcmask 254976
    %1035 = vst.msk [vmem:[#allocation3] sm:$0x3] %vm1034, %v1032
    %1037 = vrot.lane.b32.xlu0 %v985, 96
    %v1038 = vpop.permute.xlu0 %1037
    %1040 = vst.msk [vmem:[#allocation5] sm:$0x3] %vm1034, %v1038
    %v1041 = vld [vmem:[%s5] sm:$0xff]
    %v1042 = vld [vmem:[%s5 + $0x8] sm:$0xff]
    %v1043 = vld [vmem:[#allocation2] sm:$0x7f]
    %v1044 = vld [vmem:[#allocation2 + $0x8] sm:$0x7f]
    %v1045 = vld [vmem:[%s2] sm:$0xff]
    %v1046 = vld [vmem:[%s2 + $0x8] sm:$0xff]
    %v1047 = vld [vmem:[%s2 + $0x10] sm:$0xff]
    %v1048 = vld [vmem:[%s2 + $0x18] sm:$0xff]
    %v1049 = vld [vmem:[%s3] sm:$0xff]
    %v1050 = vld [vmem:[%s3 + $0x8] sm:$0xff]
    %v1051 = vld [vmem:[%s3 + $0x10] sm:$0xff]
    %v1052 = vld [vmem:[%s3 + $0x18] sm:$0xff]
    %v1053 = vld [vmem:[%s4] sm:$0xff]
    %v1054 = vld [vmem:[%s4 + $0x8] sm:$0xff]
    %v1055 = vld [vmem:[%s4 + $0x10] sm:$0xff]
    %v1056 = vld [vmem:[%s4 + $0x18] sm:$0xff]
    %v1058 = vsel %vm48, %v1043, 0
    %1060 = vmatprep.subr.mxu0 0.0
    %1061 = vmatpush1.msra.mxu0 %v1045
    %1062 = vmatprep.subr.mxu0 0.0
    %1063 = vmatpush1.msra.mxu0 %v1046
    %1064 = vmatprep.subr.mxu0 0.0
    %1065 = vmatpush1.msra.mxu0 %v1047
    %1066 = vmatprep.subr.mxu0 0.0
    %1067 = vmatpush1.msra.mxu0 %v1048
    %1068 = vmatprep.subr.mxu0 0.0
    %1069 = vmatpush1.msra.mxu0 0.0
    %1070 = vmatprep.subr.mxu0 0.0
    %1071 = vmatpush1.msra.mxu0 0.0
    %1072 = vmatprep.subr.mxu0 0.0
    %1073 = vmatpush1.msra.mxu0 0.0
    %1074 = vmatprep.subr.mxu0 0.0
    %1075 = vmatpush1.msra.mxu0 0.0
    %1076 = vmatprep.subr.mxu0 0.0
    %1077 = vmatpush1.msra.mxu0 0.0
    %1078 = vmatprep.subr.mxu0 0.0
    %1079 = vmatpush1.msra.mxu0 0.0
    %1080 = vmatprep.subr.mxu0 0.0
    %1081 = vmatpush1.msra.mxu0 0.0
    %1082 = vmatprep.subr.mxu0 0.0
    %1083 = vmatpush1.msra.mxu0 0.0
    %1084 = vmatprep.subr.mxu0 0.0
    %1085 = vmatpush1.msra.mxu0 0.0
    %1086 = vmatprep.subr.mxu0 0.0
    %1087 = vmatpush1.msra.mxu0 0.0
    %1088 = vmatprep.subr.mxu0 0.0
    %1089 = vmatpush1.msra.mxu0 0.0
    %1090 = vmatprep.subr.mxu0 0.0
    %1091 = vmatpush1.msra.mxu0 0.0
    %1092 = vmatprep.subr.mxu0 0.0
    %1093 = vmatpush1.msra.mxu0 0.0
    %1094 = vmatprep.subr.mxu0 0.0
    %1095 = vmatpush1.msra.mxu0 0.0
    %1096 = vmatprep.subr.mxu0 0.0
    %1097 = vmatpush1.msra.mxu0 0.0
    %1098 = vmatprep.subr.mxu0 0.0
    %1099 = vmatpush1.msra.mxu0 0.0
    %1100 = vmatprep.subr.mxu0 0.0
    %1101 = vmatpush1.msra.mxu0 0.0
    %1102 = vmatprep.subr.mxu0 0.0
    %1103 = vmatpush1.msra.mxu0 0.0
    %1104 = vmatprep.subr.mxu0 0.0
    %1105 = vmatpush1.msra.mxu0 0.0
    %1106 = vmatprep.subr.mxu0 0.0
    %1107 = vmatpush1.msra.mxu0 0.0
    %1108 = vmatprep.subr.mxu0 0.0
    %1109 = vmatpush1.msra.mxu0 0.0
    %1110 = vmatprep.subr.mxu0 0.0
    %1111 = vmatpush1.msra.mxu0 0.0
    %1112 = vmatprep.subr.mxu0 0.0
    %1113 = vmatpush1.msra.mxu0 0.0
    %1114 = vmatprep.subr.mxu0 0.0
    %1115 = vmatpush1.msra.mxu0 0.0
    %1116 = vmatprep.subr.mxu0 0.0
    %1117 = vmatpush1.msra.mxu0 0.0
    %1118 = vmatprep.subr.mxu0 0.0
    %1119 = vmatpush1.msra.mxu0 0.0
    %1120 = vmatprep.subr.mxu0 0.0
    %1121 = vmatpush1.msra.mxu0 0.0
    %1122 = vmatprep.subr.mxu0 0.0
    %1123 = vmatpush1.msra.mxu0 0.0
    %1124 = vmatprep.mubr.f32.mxu0 0.0
    %1125 = vmatmul.mubr.f32.gmra.mrb[0].mxu0 %v1058
    %v1126 = vpop.f32.mrb[0].mxu0
    %v1127 = vadd.f32 0.0, %v1126
    %v1128 = vpop.f32.mrb[0].mxu0
    %1129 = vdwg.mxu0
    %v1131 = vsel %vm48, %v1044, 0
    %1133 = vmatprep.subr.mxu0 0.0
    %1134 = vmatpush1.msra.mxu0 %v1045
    %1135 = vmatprep.subr.mxu0 0.0
    %1136 = vmatpush1.msra.mxu0 %v1046
    %1137 = vmatprep.subr.mxu0 0.0
    %1138 = vmatpush1.msra.mxu0 %v1047
    %1139 = vmatprep.subr.mxu0 0.0
    %1140 = vmatpush1.msra.mxu0 %v1048
    %1141 = vmatprep.subr.mxu0 0.0
    %1142 = vmatpush1.msra.mxu0 0.0
    %1143 = vmatprep.subr.mxu0 0.0
    %1144 = vmatpush1.msra.mxu0 0.0
    %1145 = vmatprep.subr.mxu0 0.0
    %1146 = vmatpush1.msra.mxu0 0.0
    %1147 = vmatprep.subr.mxu0 0.0
    %1148 = vmatpush1.msra.mxu0 0.0
    %1149 = vmatprep.subr.mxu0 0.0
    %1150 = vmatpush1.msra.mxu0 0.0
    %1151 = vmatprep.subr.mxu0 0.0
    %1152 = vmatpush1.msra.mxu0 0.0
    %1153 = vmatprep.subr.mxu0 0.0
    %1154 = vmatpush1.msra.mxu0 0.0
    %1155 = vmatprep.subr.mxu0 0.0
    %1156 = vmatpush1.msra.mxu0 0.0
    %1157 = vmatprep.subr.mxu0 0.0
    %1158 = vmatpush1.msra.mxu0 0.0
    %1159 = vmatprep.subr.mxu0 0.0
    %1160 = vmatpush1.msra.mxu0 0.0
    %1161 = vmatprep.subr.mxu0 0.0
    %1162 = vmatpush1.msra.mxu0 0.0
    %1163 = vmatprep.subr.mxu0 0.0
    %1164 = vmatpush1.msra.mxu0 0.0
    %1165 = vmatprep.subr.mxu0 0.0
    %1166 = vmatpush1.msra.mxu0 0.0
    %1167 = vmatprep.subr.mxu0 0.0
    %1168 = vmatpush1.msra.mxu0 0.0
    %1169 = vmatprep.subr.mxu0 0.0
    %1170 = vmatpush1.msra.mxu0 0.0
    %1171 = vmatprep.subr.mxu0 0.0
    %1172 = vmatpush1.msra.mxu0 0.0
    %1173 = vmatprep.subr.mxu0 0.0
    %1174 = vmatpush1.msra.mxu0 0.0
    %1175 = vmatprep.subr.mxu0 0.0
    %1176 = vmatpush1.msra.mxu0 0.0
    %1177 = vmatprep.subr.mxu0 0.0
    %1178 = vmatpush1.msra.mxu0 0.0
    %1179 = vmatprep.subr.mxu0 0.0
    %1180 = vmatpush1.msra.mxu0 0.0
    %1181 = vmatprep.subr.mxu0 0.0
    %1182 = vmatpush1.msra.mxu0 0.0
    %1183 = vmatprep.subr.mxu0 0.0
    %1184 = vmatpush1.msra.mxu0 0.0
    %1185 = vmatprep.subr.mxu0 0.0
    %1186 = vmatpush1.msra.mxu0 0.0
    %1187 = vmatprep.subr.mxu0 0.0
    %1188 = vmatpush1.msra.mxu0 0.0
    %1189 = vmatprep.subr.mxu0 0.0
    %1190 = vmatpush1.msra.mxu0 0.0
    %1191 = vmatprep.subr.mxu0 0.0
    %1192 = vmatpush1.msra.mxu0 0.0
    %1193 = vmatprep.subr.mxu0 0.0
    %1194 = vmatpush1.msra.mxu0 0.0
    %1195 = vmatprep.subr.mxu0 0.0
    %1196 = vmatpush1.msra.mxu0 0.0
    %1197 = vmatprep.mubr.f32.mxu0 0.0
    %1198 = vmatmul.mubr.f32.gmra.mrb[0].mxu0 %v1131
    %v1199 = vpop.f32.mrb[0].mxu0
    %v1200 = vadd.f32 0.0, %v1199
    %v1201 = vpop.f32.mrb[0].mxu0
    %1202 = vdwg.mxu0
    %v1204 = vsel %vm48, %v1127, 0
    %v1207 = vsel %vm48, %v1041, 0
    %1209 = vmatprep.subr.mxu0 0.0
    %1210 = vmatpush1.xpose.msra.mxu0 %v1207
    %1211 = vmatprep.subr.mxu0 0.0
    %1212 = vmatpush1.xpose.msra.mxu0 0.0
    %1213 = vmatprep.subr.mxu0 0.0
    %1214 = vmatpush1.xpose.msra.mxu0 0.0
    %1215 = vmatprep.subr.mxu0 0.0
    %1216 = vmatpush1.xpose.msra.mxu0 0.0
    %1217 = vmatprep.subr.mxu0 0.0
    %1218 = vmatpush1.xpose.msra.mxu0 0.0
    %1219 = vmatprep.subr.mxu0 0.0
    %1220 = vmatpush1.xpose.msra.mxu0 0.0
    %1221 = vmatprep.subr.mxu0 0.0
    %1222 = vmatpush1.xpose.msra.mxu0 0.0
    %1223 = vmatprep.subr.mxu0 0.0
    %1224 = vmatpush1.xpose.msra.mxu0 0.0
    %1225 = vmatprep.subr.mxu0 0.0
    %1226 = vmatpush1.xpose.msra.mxu0 0.0
    %1227 = vmatprep.subr.mxu0 0.0
    %1228 = vmatpush1.xpose.msra.mxu0 0.0
    %1229 = vmatprep.subr.mxu0 0.0
    %1230 = vmatpush1.xpose.msra.mxu0 0.0
    %1231 = vmatprep.subr.mxu0 0.0
    %1232 = vmatpush1.xpose.msra.mxu0 0.0
    %1233 = vmatprep.subr.mxu0 0.0
    %1234 = vmatpush1.xpose.msra.mxu0 0.0
    %1235 = vmatprep.subr.mxu0 0.0
    %1236 = vmatpush1.xpose.msra.mxu0 0.0
    %1237 = vmatprep.subr.mxu0 0.0
    %1238 = vmatpush1.xpose.msra.mxu0 0.0
    %1239 = vmatprep.subr.mxu0 0.0
    %1240 = vmatpush1.xpose.msra.mxu0 0.0
    %1241 = vmatprep.subr.mxu0 0.0
    %1242 = vmatpush1.xpose.msra.mxu0 0.0
    %1243 = vmatprep.subr.mxu0 0.0
    %1244 = vmatpush1.xpose.msra.mxu0 0.0
    %1245 = vmatprep.subr.mxu0 0.0
    %1246 = vmatpush1.xpose.msra.mxu0 0.0
    %1247 = vmatprep.subr.mxu0 0.0
    %1248 = vmatpush1.xpose.msra.mxu0 0.0
    %1249 = vmatprep.subr.mxu0 0.0
    %1250 = vmatpush1.xpose.msra.mxu0 0.0
    %1251 = vmatprep.subr.mxu0 0.0
    %1252 = vmatpush1.xpose.msra.mxu0 0.0
    %1253 = vmatprep.subr.mxu0 0.0
    %1254 = vmatpush1.xpose.msra.mxu0 0.0
    %1255 = vmatprep.subr.mxu0 0.0
    %1256 = vmatpush1.xpose.msra.mxu0 0.0
    %1257 = vmatprep.subr.mxu0 0.0
    %1258 = vmatpush1.xpose.msra.mxu0 0.0
    %1259 = vmatprep.subr.mxu0 0.0
    %1260 = vmatpush1.xpose.msra.mxu0 0.0
    %1261 = vmatprep.subr.mxu0 0.0
    %1262 = vmatpush1.xpose.msra.mxu0 0.0
    %1263 = vmatprep.subr.mxu0 0.0
    %1264 = vmatpush1.xpose.msra.mxu0 0.0
    %1265 = vmatprep.subr.mxu0 0.0
    %1266 = vmatpush1.xpose.msra.mxu0 0.0
    %1267 = vmatprep.subr.mxu0 0.0
    %1268 = vmatpush1.xpose.msra.mxu0 0.0
    %1269 = vmatprep.subr.mxu0 0.0
    %1270 = vmatpush1.xpose.msra.mxu0 0.0
    %1271 = vmatprep.subr.mxu0 0.0
    %1272 = vmatpush1.xpose.msra.mxu0 0.0
    %1273 = vmatprep.mubr.f32.mxu0 0.0
    %1274 = vmatmul.mubr.f32.gmra.mrb[0].mxu0 %v1204
    %v1275 = vpop.f32.mrb[0].mxu0
    %v1276 = vadd.f32 0.0, %v1275
    %v1277 = vpop.f32.mrb[0].mxu0
    %1278 = vdwg.mxu0
    %v1280 = vsel %vm48, %v1200, 0
    %v1283 = vsel %vm48, %v1042, 0
    %1285 = vmatprep.subr.mxu0 0.0
    %1286 = vmatpush1.xpose.msra.mxu0 %v1283
    %1287 = vmatprep.subr.mxu0 0.0
    %1288 = vmatpush1.xpose.msra.mxu0 0.0
    %1289 = vmatprep.subr.mxu0 0.0
    %1290 = vmatpush1.xpose.msra.mxu0 0.0
    %1291 = vmatprep.subr.mxu0 0.0
    %1292 = vmatpush1.xpose.msra.mxu0 0.0
    %1293 = vmatprep.subr.mxu0 0.0
    %1294 = vmatpush1.xpose.msra.mxu0 0.0
    %1295 = vmatprep.subr.mxu0 0.0
    %1296 = vmatpush1.xpose.msra.mxu0 0.0
    %1297 = vmatprep.subr.mxu0 0.0
    %1298 = vmatpush1.xpose.msra.mxu0 0.0
    %1299 = vmatprep.subr.mxu0 0.0
    %1300 = vmatpush1.xpose.msra.mxu0 0.0
    %1301 = vmatprep.subr.mxu0 0.0
    %1302 = vmatpush1.xpose.msra.mxu0 0.0
    %1303 = vmatprep.subr.mxu0 0.0
    %1304 = vmatpush1.xpose.msra.mxu0 0.0
    %1305 = vmatprep.subr.mxu0 0.0
    %1306 = vmatpush1.xpose.msra.mxu0 0.0
    %1307 = vmatprep.subr.mxu0 0.0
    %1308 = vmatpush1.xpose.msra.mxu0 0.0
    %1309 = vmatprep.subr.mxu0 0.0
    %1310 = vmatpush1.xpose.msra.mxu0 0.0
    %1311 = vmatprep.subr.mxu0 0.0
    %1312 = vmatpush1.xpose.msra.mxu0 0.0
    %1313 = vmatprep.subr.mxu0 0.0
    %1314 = vmatpush1.xpose.msra.mxu0 0.0
    %1315 = vmatprep.subr.mxu0 0.0
    %1316 = vmatpush1.xpose.msra.mxu0 0.0
    %1317 = vmatprep.subr.mxu0 0.0
    %1318 = vmatpush1.xpose.msra.mxu0 0.0
    %1319 = vmatprep.subr.mxu0 0.0
    %1320 = vmatpush1.xpose.msra.mxu0 0.0
    %1321 = vmatprep.subr.mxu0 0.0
    %1322 = vmatpush1.xpose.msra.mxu0 0.0
    %1323 = vmatprep.subr.mxu0 0.0
    %1324 = vmatpush1.xpose.msra.mxu0 0.0
    %1325 = vmatprep.subr.mxu0 0.0
    %1326 = vmatpush1.xpose.msra.mxu0 0.0
    %1327 = vmatprep.subr.mxu0 0.0
    %1328 = vmatpush1.xpose.msra.mxu0 0.0
    %1329 = vmatprep.subr.mxu0 0.0
    %1330 = vmatpush1.xpose.msra.mxu0 0.0
    %1331 = vmatprep.subr.mxu0 0.0
    %1332 = vmatpush1.xpose.msra.mxu0 0.0
    %1333 = vmatprep.subr.mxu0 0.0
    %1334 = vmatpush1.xpose.msra.mxu0 0.0
    %1335 = vmatprep.subr.mxu0 0.0
    %1336 = vmatpush1.xpose.msra.mxu0 0.0
    %1337 = vmatprep.subr.mxu0 0.0
    %1338 = vmatpush1.xpose.msra.mxu0 0.0
    %1339 = vmatprep.subr.mxu0 0.0
    %1340 = vmatpush1.xpose.msra.mxu0 0.0
    %1341 = vmatprep.subr.mxu0 0.0
    %1342 = vmatpush1.xpose.msra.mxu0 0.0
    %1343 = vmatprep.subr.mxu0 0.0
    %1344 = vmatpush1.xpose.msra.mxu0 0.0
    %1345 = vmatprep.subr.mxu0 0.0
    %1346 = vmatpush1.xpose.msra.mxu0 0.0
    %1347 = vmatprep.subr.mxu0 0.0
    %1348 = vmatpush1.xpose.msra.mxu0 0.0
    %1349 = vmatprep.mubr.f32.mxu0 0.0
    %1350 = vmatmul.mubr.f32.gmra.mrb[0].mxu0 %v1280
    %v1351 = vpop.f32.mrb[0].mxu0
    %v1352 = vadd.f32 0.0, %v1351
    %v1353 = vpop.f32.mrb[0].mxu0
    %1354 = vdwg.mxu0
    %vm1355 = vcmask 63488
    %v1356 = vsel %vm1355, %v1276, -inf
    %1357 = vmax.xlane.f32.xlu0 %v1356
    %v1358 = vpop.xlane.xlu0 %1357
    %v1359 = vsel %vm1355, %v1352, -inf
    %1360 = vmax.xlane.f32.xlu0 %v1359
    %v1361 = vpop.xlane.xlu0 %1360
    %v1362 = vsub.f32 %v1276, %v1358
    %v1363 = vsub.f32 %v1352, %v1361
    %v1364 = vmul.f32 %v1362, 1.442695
    %v1365 = vpow.pop %v1364
    %v1366 = vmul.f32 %v1363, 1.442695
    %v1367 = vpow.pop %v1366
    %v1368 = vsel %vm1355, %v1365, 0.0
    %1369 = vadd.xlane.f32.xlu0 %v1368
    %v1370 = vpop.xlane.xlu0 %1369
    %v1371 = vsel %vm1355, %v1367, 0.0
    %1372 = vadd.xlane.f32.xlu0 %v1371
    %v1373 = vpop.xlane.xlu0 %1372
    %v1374 = vrcp.pop %v1370
    %v1375 = vrcp.pop %v1373
    %v1376 = vmul.f32 %v1365, %v1374
    %v1377 = vmul.f32 %v1367, %v1375
    %vm1378 = vcmask 64512
    %v1380 = vsel %vm1378, %v1376, 0
    %1382 = vmatprep.subr.mxu0 0.0
    %1383 = vmatpush1.msra.mxu0 %v1041
    %1384 = vmatprep.subr.mxu0 0.0
    %1385 = vmatpush1.msra.mxu0 0.0
    %1386 = vmatprep.subr.mxu0 0.0
    %1387 = vmatpush1.msra.mxu0 0.0
    %1388 = vmatprep.subr.mxu0 0.0
    %1389 = vmatpush1.msra.mxu0 0.0
    %1390 = vmatprep.subr.mxu0 0.0
    %1391 = vmatpush1.msra.mxu0 0.0
    %1392 = vmatprep.subr.mxu0 0.0
    %1393 = vmatpush1.msra.mxu0 0.0
    %1394 = vmatprep.subr.mxu0 0.0
    %1395 = vmatpush1.msra.mxu0 0.0
    %1396 = vmatprep.subr.mxu0 0.0
    %1397 = vmatpush1.msra.mxu0 0.0
    %1398 = vmatprep.subr.mxu0 0.0
    %1399 = vmatpush1.msra.mxu0 0.0
    %1400 = vmatprep.subr.mxu0 0.0
    %1401 = vmatpush1.msra.mxu0 0.0
    %1402 = vmatprep.subr.mxu0 0.0
    %1403 = vmatpush1.msra.mxu0 0.0
    %1404 = vmatprep.subr.mxu0 0.0
    %1405 = vmatpush1.msra.mxu0 0.0
    %1406 = vmatprep.subr.mxu0 0.0
    %1407 = vmatpush1.msra.mxu0 0.0
    %1408 = vmatprep.subr.mxu0 0.0
    %1409 = vmatpush1.msra.mxu0 0.0
    %1410 = vmatprep.subr.mxu0 0.0
    %1411 = vmatpush1.msra.mxu0 0.0
    %1412 = vmatprep.subr.mxu0 0.0
    %1413 = vmatpush1.msra.mxu0 0.0
    %1414 = vmatprep.subr.mxu0 0.0
    %1415 = vmatpush1.msra.mxu0 0.0
    %1416 = vmatprep.subr.mxu0 0.0
    %1417 = vmatpush1.msra.mxu0 0.0
    %1418 = vmatprep.subr.mxu0 0.0
    %1419 = vmatpush1.msra.mxu0 0.0
    %1420 = vmatprep.subr.mxu0 0.0
    %1421 = vmatpush1.msra.mxu0 0.0
    %1422 = vmatprep.subr.mxu0 0.0
    %1423 = vmatpush1.msra.mxu0 0.0
    %1424 = vmatprep.subr.mxu0 0.0
    %1425 = vmatpush1.msra.mxu0 0.0
    %1426 = vmatprep.subr.mxu0 0.0
    %1427 = vmatpush1.msra.mxu0 0.0
    %1428 = vmatprep.subr.mxu0 0.0
    %1429 = vmatpush1.msra.mxu0 0.0
    %1430 = vmatprep.subr.mxu0 0.0
    %1431 = vmatpush1.msra.mxu0 0.0
    %1432 = vmatprep.subr.mxu0 0.0
    %1433 = vmatpush1.msra.mxu0 0.0
    %1434 = vmatprep.subr.mxu0 0.0
    %1435 = vmatpush1.msra.mxu0 0.0
    %1436 = vmatprep.subr.mxu0 0.0
    %1437 = vmatpush1.msra.mxu0 0.0
    %1438 = vmatprep.subr.mxu0 0.0
    %1439 = vmatpush1.msra.mxu0 0.0
    %1440 = vmatprep.subr.mxu0 0.0
    %1441 = vmatpush1.msra.mxu0 0.0
    %1442 = vmatprep.subr.mxu0 0.0
    %1443 = vmatpush1.msra.mxu0 0.0
    %1444 = vmatprep.subr.mxu0 0.0
    %1445 = vmatpush1.msra.mxu0 0.0
    %1446 = vmatprep.mubr.f32.mxu0 0.0
    %1447 = vmatmul.mubr.f32.gmra.mrb[0].mxu0 %v1380
    %v1448 = vpop.f32.mrb[0].mxu0
    %v1449 = vadd.f32 0.0, %v1448
    %v1450 = vpop.f32.mrb[0].mxu0
    %1451 = vdwg.mxu0
    %v1453 = vsel %vm1378, %v1377, 0
    %1455 = vmatprep.subr.mxu0 0.0
    %1456 = vmatpush1.msra.mxu0 %v1042
    %1457 = vmatprep.subr.mxu0 0.0
    %1458 = vmatpush1.msra.mxu0 0.0
    %1459 = vmatprep.subr.mxu0 0.0
    %1460 = vmatpush1.msra.mxu0 0.0
    %1461 = vmatprep.subr.mxu0 0.0
    %1462 = vmatpush1.msra.mxu0 0.0
    %1463 = vmatprep.subr.mxu0 0.0
    %1464 = vmatpush1.msra.mxu0 0.0
    %1465 = vmatprep.subr.mxu0 0.0
    %1466 = vmatpush1.msra.mxu0 0.0
    %1467 = vmatprep.subr.mxu0 0.0
    %1468 = vmatpush1.msra.mxu0 0.0
    %1469 = vmatprep.subr.mxu0 0.0
    %1470 = vmatpush1.msra.mxu0 0.0
    %1471 = vmatprep.subr.mxu0 0.0
    %1472 = vmatpush1.msra.mxu0 0.0
    %1473 = vmatprep.subr.mxu0 0.0
    %1474 = vmatpush1.msra.mxu0 0.0
    %1475 = vmatprep.subr.mxu0 0.0
    %1476 = vmatpush1.msra.mxu0 0.0
    %1477 = vmatprep.subr.mxu0 0.0
    %1478 = vmatpush1.msra.mxu0 0.0
    %1479 = vmatprep.subr.mxu0 0.0
    %1480 = vmatpush1.msra.mxu0 0.0
    %1481 = vmatprep.subr.mxu0 0.0
    %1482 = vmatpush1.msra.mxu0 0.0
    %1483 = vmatprep.subr.mxu0 0.0
    %1484 = vmatpush1.msra.mxu0 0.0
    %1485 = vmatprep.subr.mxu0 0.0
    %1486 = vmatpush1.msra.mxu0 0.0
    %1487 = vmatprep.subr.mxu0 0.0
    %1488 = vmatpush1.msra.mxu0 0.0
    %1489 = vmatprep.subr.mxu0 0.0
    %1490 = vmatpush1.msra.mxu0 0.0
    %1491 = vmatprep.subr.mxu0 0.0
    %1492 = vmatpush1.msra.mxu0 0.0
    %1493 = vmatprep.subr.mxu0 0.0
    %1494 = vmatpush1.msra.mxu0 0.0
    %1495 = vmatprep.subr.mxu0 0.0
    %1496 = vmatpush1.msra.mxu0 0.0
    %1497 = vmatprep.subr.mxu0 0.0
    %1498 = vmatpush1.msra.mxu0 0.0
    %1499 = vmatprep.subr.mxu0 0.0
    %1500 = vmatpush1.msra.mxu0 0.0
    %1501 = vmatprep.subr.mxu0 0.0
    %1502 = vmatpush1.msra.mxu0 0.0
    %1503 = vmatprep.subr.mxu0 0.0
    %1504 = vmatpush1.msra.mxu0 0.0
    %1505 = vmatprep.subr.mxu0 0.0
    %1506 = vmatpush1.msra.mxu0 0.0
    %1507 = vmatprep.subr.mxu0 0.0
    %1508 = vmatpush1.msra.mxu0 0.0
    %1509 = vmatprep.subr.mxu0 0.0
    %1510 = vmatpush1.msra.mxu0 0.0
    %1511 = vmatprep.subr.mxu0 0.0
    %1512 = vmatpush1.msra.mxu0 0.0
    %1513 = vmatprep.subr.mxu0 0.0
    %1514 = vmatpush1.msra.mxu0 0.0
    %1515 = vmatprep.subr.mxu0 0.0
    %1516 = vmatpush1.msra.mxu0 0.0
    %1517 = vmatprep.subr.mxu0 0.0
    %1518 = vmatpush1.msra.mxu0 0.0
    %1519 = vmatprep.mubr.f32.mxu0 0.0
    %1520 = vmatmul.mubr.f32.gmra.mrb[0].mxu0 %v1453
    %v1521 = vpop.f32.mrb[0].mxu0
    %v1522 = vadd.f32 0.0, %v1521
    %v1523 = vpop.f32.mrb[0].mxu0
    %1524 = vdwg.mxu0
    %1525 = vmatprep.subr.mxu0 0.0
    %1526 = vmatpush1.msra.mxu0 %v1053
    %1527 = vmatprep.subr.mxu0 0.0
    %1528 = vmatpush1.msra.mxu0 %v1054
    %1529 = vmatprep.subr.mxu0 0.0
    %1530 = vmatpush1.msra.mxu0 %v1055
    %1531 = vmatprep.subr.mxu0 0.0
    %1532 = vmatpush1.msra.mxu0 %v1056
    %1533 = vmatprep.subr.mxu0 0.0
    %1534 = vmatpush1.msra.mxu0 0.0
    %1535 = vmatprep.subr.mxu0 0.0
    %1536 = vmatpush1.msra.mxu0 0.0
    %1537 = vmatprep.subr.mxu0 0.0
    %1538 = vmatpush1.msra.mxu0 0.0
    %1539 = vmatprep.subr.mxu0 0.0
    %1540 = vmatpush1.msra.mxu0 0.0
    %1541 = vmatprep.subr.mxu0 0.0
    %1542 = vmatpush1.msra.mxu0 0.0
    %1543 = vmatprep.subr.mxu0 0.0
    %1544 = vmatpush1.msra.mxu0 0.0
    %1545 = vmatprep.subr.mxu0 0.0
    %1546 = vmatpush1.msra.mxu0 0.0
    %1547 = vmatprep.subr.mxu0 0.0
    %1548 = vmatpush1.msra.mxu0 0.0
    %1549 = vmatprep.subr.mxu0 0.0
    %1550 = vmatpush1.msra.mxu0 0.0
    %1551 = vmatprep.subr.mxu0 0.0
    %1552 = vmatpush1.msra.mxu0 0.0
    %1553 = vmatprep.subr.mxu0 0.0
    %1554 = vmatpush1.msra.mxu0 0.0
    %1555 = vmatprep.subr.mxu0 0.0
    %1556 = vmatpush1.msra.mxu0 0.0
    %1557 = vmatprep.subr.mxu0 0.0
    %1558 = vmatpush1.msra.mxu0 0.0
    %1559 = vmatprep.subr.mxu0 0.0
    %1560 = vmatpush1.msra.mxu0 0.0
    %1561 = vmatprep.subr.mxu0 0.0
    %1562 = vmatpush1.msra.mxu0 0.0
    %1563 = vmatprep.subr.mxu0 0.0
    %1564 = vmatpush1.msra.mxu0 0.0
    %1565 = vmatprep.subr.mxu0 0.0
    %1566 = vmatpush1.msra.mxu0 0.0
    %1567 = vmatprep.subr.mxu0 0.0
    %1568 = vmatpush1.msra.mxu0 0.0
    %1569 = vmatprep.subr.mxu0 0.0
    %1570 = vmatpush1.msra.mxu0 0.0
    %1571 = vmatprep.subr.mxu0 0.0
    %1572 = vmatpush1.msra.mxu0 0.0
    %1573 = vmatprep.subr.mxu0 0.0
    %1574 = vmatpush1.msra.mxu0 0.0
    %1575 = vmatprep.subr.mxu0 0.0
    %1576 = vmatpush1.msra.mxu0 0.0
    %1577 = vmatprep.subr.mxu0 0.0
    %1578 = vmatpush1.msra.mxu0 0.0
    %1579 = vmatprep.subr.mxu0 0.0
    %1580 = vmatpush1.msra.mxu0 0.0
    %1581 = vmatprep.subr.mxu0 0.0
    %1582 = vmatpush1.msra.mxu0 0.0
    %1583 = vmatprep.subr.mxu0 0.0
    %1584 = vmatpush1.msra.mxu0 0.0
    %1585 = vmatprep.subr.mxu0 0.0
    %1586 = vmatpush1.msra.mxu0 0.0
    %1587 = vmatprep.subr.mxu0 0.0
    %1588 = vmatpush1.msra.mxu0 0.0
    %1589 = vmatprep.mubr.f32.mxu0 0.0
    %1590 = vmatmul.mubr.f32.gmra.mrb[0].mxu0 %v1058
    %v1591 = vpop.f32.mrb[0].mxu0
    %v1592 = vadd.f32 0.0, %v1591
    %v1593 = vpop.f32.mrb[0].mxu0
    %1594 = vdwg.mxu0
    %1595 = vmatprep.subr.mxu0 0.0
    %1596 = vmatpush1.msra.mxu0 %v1053
    %1597 = vmatprep.subr.mxu0 0.0
    %1598 = vmatpush1.msra.mxu0 %v1054
    %1599 = vmatprep.subr.mxu0 0.0
    %1600 = vmatpush1.msra.mxu0 %v1055
    %1601 = vmatprep.subr.mxu0 0.0
    %1602 = vmatpush1.msra.mxu0 %v1056
    %1603 = vmatprep.subr.mxu0 0.0
    %1604 = vmatpush1.msra.mxu0 0.0
    %1605 = vmatprep.subr.mxu0 0.0
    %1606 = vmatpush1.msra.mxu0 0.0
    %1607 = vmatprep.subr.mxu0 0.0
    %1608 = vmatpush1.msra.mxu0 0.0
    %1609 = vmatprep.subr.mxu0 0.0
    %1610 = vmatpush1.msra.mxu0 0.0
    %1611 = vmatprep.subr.mxu0 0.0
    %1612 = vmatpush1.msra.mxu0 0.0
    %1613 = vmatprep.subr.mxu0 0.0
    %1614 = vmatpush1.msra.mxu0 0.0
    %1615 = vmatprep.subr.mxu0 0.0
    %1616 = vmatpush1.msra.mxu0 0.0
    %1617 = vmatprep.subr.mxu0 0.0
    %1618 = vmatpush1.msra.mxu0 0.0
    %1619 = vmatprep.subr.mxu0 0.0
    %1620 = vmatpush1.msra.mxu0 0.0
    %1621 = vmatprep.subr.mxu0 0.0
    %1622 = vmatpush1.msra.mxu0 0.0
    %1623 = vmatprep.subr.mxu0 0.0
    %1624 = vmatpush1.msra.mxu0 0.0
    %1625 = vmatprep.subr.mxu0 0.0
    %1626 = vmatpush1.msra.mxu0 0.0
    %1627 = vmatprep.subr.mxu0 0.0
    %1628 = vmatpush1.msra.mxu0 0.0
    %1629 = vmatprep.subr.mxu0 0.0
    %1630 = vmatpush1.msra.mxu0 0.0
    %1631 = vmatprep.subr.mxu0 0.0
    %1632 = vmatpush1.msra.mxu0 0.0
    %1633 = vmatprep.subr.mxu0 0.0
    %1634 = vmatpush1.msra.mxu0 0.0
    %1635 = vmatprep.subr.mxu0 0.0
    %1636 = vmatpush1.msra.mxu0 0.0
    %1637 = vmatprep.subr.mxu0 0.0
    %1638 = vmatpush1.msra.mxu0 0.0
    %1639 = vmatprep.subr.mxu0 0.0
    %1640 = vmatpush1.msra.mxu0 0.0
    %1641 = vmatprep.subr.mxu0 0.0
    %1642 = vmatpush1.msra.mxu0 0.0
    %1643 = vmatprep.subr.mxu0 0.0
    %1644 = vmatpush1.msra.mxu0 0.0
    %1645 = vmatprep.subr.mxu0 0.0
    %1646 = vmatpush1.msra.mxu0 0.0
    %1647 = vmatprep.subr.mxu0 0.0
    %1648 = vmatpush1.msra.mxu0 0.0
    %1649 = vmatprep.subr.mxu0 0.0
    %1650 = vmatpush1.msra.mxu0 0.0
    %1651 = vmatprep.subr.mxu0 0.0
    %1652 = vmatpush1.msra.mxu0 0.0
    %1653 = vmatprep.subr.mxu0 0.0
    %1654 = vmatpush1.msra.mxu0 0.0
    %1655 = vmatprep.subr.mxu0 0.0
    %1656 = vmatpush1.msra.mxu0 0.0
    %1657 = vmatprep.subr.mxu0 0.0
    %1658 = vmatpush1.msra.mxu0 0.0
    %1659 = vmatprep.mubr.f32.mxu0 0.0
    %1660 = vmatmul.mubr.f32.gmra.mrb[0].mxu0 %v1131
    %v1661 = vpop.f32.mrb[0].mxu0
    %v1662 = vadd.f32 0.0, %v1661
    %v1663 = vpop.f32.mrb[0].mxu0
    %1664 = vdwg.mxu0
    %v1666 = vsel %vm48, %v1449, 0
    %1668 = vmatprep.subr.mxu0 0.0
    %1669 = vmatpush1.msra.mxu0 %v1049
    %1670 = vmatprep.subr.mxu0 0.0
    %1671 = vmatpush1.msra.mxu0 %v1050
    %1672 = vmatprep.subr.mxu0 0.0
    %1673 = vmatpush1.msra.mxu0 %v1051
    %1674 = vmatprep.subr.mxu0 0.0
    %1675 = vmatpush1.msra.mxu0 %v1052
    %1676 = vmatprep.subr.mxu0 0.0
    %1677 = vmatpush1.msra.mxu0 0.0
    %1678 = vmatprep.subr.mxu0 0.0
    %1679 = vmatpush1.msra.mxu0 0.0
    %1680 = vmatprep.subr.mxu0 0.0
    %1681 = vmatpush1.msra.mxu0 0.0
    %1682 = vmatprep.subr.mxu0 0.0
    %1683 = vmatpush1.msra.mxu0 0.0
    %1684 = vmatprep.subr.mxu0 0.0
    %1685 = vmatpush1.msra.mxu0 0.0
    %1686 = vmatprep.subr.mxu0 0.0
    %1687 = vmatpush1.msra.mxu0 0.0
    %1688 = vmatprep.subr.mxu0 0.0
    %1689 = vmatpush1.msra.mxu0 0.0
    %1690 = vmatprep.subr.mxu0 0.0
    %1691 = vmatpush1.msra.mxu0 0.0
    %1692 = vmatprep.subr.mxu0 0.0
    %1693 = vmatpush1.msra.mxu0 0.0
    %1694 = vmatprep.subr.mxu0 0.0
    %1695 = vmatpush1.msra.mxu0 0.0
    %1696 = vmatprep.subr.mxu0 0.0
    %1697 = vmatpush1.msra.mxu0 0.0
    %1698 = vmatprep.subr.mxu0 0.0
    %1699 = vmatpush1.msra.mxu0 0.0
    %1700 = vmatprep.subr.mxu0 0.0
    %1701 = vmatpush1.msra.mxu0 0.0
    %1702 = vmatprep.subr.mxu0 0.0
    %1703 = vmatpush1.msra.mxu0 0.0
    %1704 = vmatprep.subr.mxu0 0.0
    %1705 = vmatpush1.msra.mxu0 0.0
    %1706 = vmatprep.subr.mxu0 0.0
    %1707 = vmatpush1.msra.mxu0 0.0
    %1708 = vmatprep.subr.mxu0 0.0
    %1709 = vmatpush1.msra.mxu0 0.0
    %1710 = vmatprep.subr.mxu0 0.0
    %1711 = vmatpush1.msra.mxu0 0.0
    %1712 = vmatprep.subr.mxu0 0.0
    %1713 = vmatpush1.msra.mxu0 0.0
    %1714 = vmatprep.subr.mxu0 0.0
    %1715 = vmatpush1.msra.mxu0 0.0
    %1716 = vmatprep.subr.mxu0 0.0
    %1717 = vmatpush1.msra.mxu0 0.0
    %1718 = vmatprep.subr.mxu0 0.0
    %1719 = vmatpush1.msra.mxu0 0.0
    %1720 = vmatprep.subr.mxu0 0.0
    %1721 = vmatpush1.msra.mxu0 0.0
    %1722 = vmatprep.subr.mxu0 0.0
    %1723 = vmatpush1.msra.mxu0 0.0
    %1724 = vmatprep.subr.mxu0 0.0
    %1725 = vmatpush1.msra.mxu0 0.0
    %1726 = vmatprep.subr.mxu0 0.0
    %1727 = vmatpush1.msra.mxu0 0.0
    %1728 = vmatprep.subr.mxu0 0.0
    %1729 = vmatpush1.msra.mxu0 0.0
    %1730 = vmatprep.subr.mxu0 0.0
    %1731 = vmatpush1.msra.mxu0 0.0
    %1732 = vmatprep.mubr.f32.mxu0 0.0
    %1733 = vmatmul.mubr.f32.gmra.mrb[0].mxu0 %v1666
    %v1734 = vpop.f32.mrb[0].mxu0
    %v1735 = vadd.f32 %v1592, %v1734
    %v1736 = vpop.f32.mrb[0].mxu0
    %1737 = vdwg.mxu0
    %v1739 = vsel %vm48, %v1522, 0
    %1741 = vmatprep.subr.mxu0 0.0
    %1742 = vmatpush1.msra.mxu0 %v1049
    %1743 = vmatprep.subr.mxu0 0.0
    %1744 = vmatpush1.msra.mxu0 %v1050
    %1745 = vmatprep.subr.mxu0 0.0
    %1746 = vmatpush1.msra.mxu0 %v1051
    %1747 = vmatprep.subr.mxu0 0.0
    %1748 = vmatpush1.msra.mxu0 %v1052
    %1749 = vmatprep.subr.mxu0 0.0
    %1750 = vmatpush1.msra.mxu0 0.0
    %1751 = vmatprep.subr.mxu0 0.0
    %1752 = vmatpush1.msra.mxu0 0.0
    %1753 = vmatprep.subr.mxu0 0.0
    %1754 = vmatpush1.msra.mxu0 0.0
    %1755 = vmatprep.subr.mxu0 0.0
    %1756 = vmatpush1.msra.mxu0 0.0
    %1757 = vmatprep.subr.mxu0 0.0
    %1758 = vmatpush1.msra.mxu0 0.0
    %1759 = vmatprep.subr.mxu0 0.0
    %1760 = vmatpush1.msra.mxu0 0.0
    %1761 = vmatprep.subr.mxu0 0.0
    %1762 = vmatpush1.msra.mxu0 0.0
    %1763 = vmatprep.subr.mxu0 0.0
    %1764 = vmatpush1.msra.mxu0 0.0
    %1765 = vmatprep.subr.mxu0 0.0
    %1766 = vmatpush1.msra.mxu0 0.0
    %1767 = vmatprep.subr.mxu0 0.0
    %1768 = vmatpush1.msra.mxu0 0.0
    %1769 = vmatprep.subr.mxu0 0.0
    %1770 = vmatpush1.msra.mxu0 0.0
    %1771 = vmatprep.subr.mxu0 0.0
    %1772 = vmatpush1.msra.mxu0 0.0
    %1773 = vmatprep.subr.mxu0 0.0
    %1774 = vmatpush1.msra.mxu0 0.0
    %1775 = vmatprep.subr.mxu0 0.0
    %1776 = vmatpush1.msra.mxu0 0.0
    %1777 = vmatprep.subr.mxu0 0.0
    %1778 = vmatpush1.msra.mxu0 0.0
    %1779 = vmatprep.subr.mxu0 0.0
    %1780 = vmatpush1.msra.mxu0 0.0
    %1781 = vmatprep.subr.mxu0 0.0
    %1782 = vmatpush1.msra.mxu0 0.0
    %1783 = vmatprep.subr.mxu0 0.0
    %1784 = vmatpush1.msra.mxu0 0.0
    %1785 = vmatprep.subr.mxu0 0.0
    %1786 = vmatpush1.msra.mxu0 0.0
    %1787 = vmatprep.subr.mxu0 0.0
    %1788 = vmatpush1.msra.mxu0 0.0
    %1789 = vmatprep.subr.mxu0 0.0
    %1790 = vmatpush1.msra.mxu0 0.0
    %1791 = vmatprep.subr.mxu0 0.0
    %1792 = vmatpush1.msra.mxu0 0.0
    %1793 = vmatprep.subr.mxu0 0.0
    %1794 = vmatpush1.msra.mxu0 0.0
    %1795 = vmatprep.subr.mxu0 0.0
    %1796 = vmatpush1.msra.mxu0 0.0
    %1797 = vmatprep.subr.mxu0 0.0
    %1798 = vmatpush1.msra.mxu0 0.0
    %1799 = vmatprep.subr.mxu0 0.0
    %1800 = vmatpush1.msra.mxu0 0.0
    %1801 = vmatprep.subr.mxu0 0.0
    %1802 = vmatpush1.msra.mxu0 0.0
    %1803 = vmatprep.subr.mxu0 0.0
    %1804 = vmatpush1.msra.mxu0 0.0
    %1805 = vmatprep.mubr.f32.mxu0 0.0
    %1806 = vmatmul.mubr.f32.gmra.mrb[0].mxu0 %v1739
    %v1807 = vpop.f32.mrb[0].mxu0
    %v1808 = vadd.f32 %v1662, %v1807
    %v1809 = vpop.f32.mrb[0].mxu0
    %1810 = vdwg.mxu0
    %v1811 = vtanh.pop %v1735
    %v1812 = vtanh.pop %v1808
    %vm1813 = vcmask 260096
    %1814 = vst.msk [vmem:[%s9] sm:$0x7f] %vm1813, %v1811
    %1815 = vst.msk [vmem:[%s9 + $0x8] sm:$0x7f] %vm1813, %v1812
    %1816 = vst.msk [vmem:[%s10] sm:$0x7f] %vm1355, %v1376
    %1817 = vst.msk [vmem:[%s10 + $0x8] sm:$0x7f] %vm1355, %v1377
    // Predicated region
    $region38: #{_forward_core.3} parent=1 // pred_check
      _
    $region39: #{_forward_core.3} parent=1 // pred_check_branch
      %1819 = sbr.rel (0) target = $region41
    $region40: #{_forward_core.3} parent=1 // pred_region
      _
    $region41: #{_forward_core.3} parent=1 // pred_fallthru
      _
    // Predicated region
    $region42: #{_forward_core.3} parent=1 // pred_check
      _
    $region43: #{_forward_core.3} parent=1 // pred_check_branch
      %1821 = sbr.rel (0) target = $region45
    $region44: #{_forward_core.3} parent=1 // pred_region
      _
    $region45: #{_forward_core.3} parent=1 // pred_fallthru
      _
    // Predicated region
    $region46: #{_forward_core.3} parent=1 // pred_check
      _
    $region47: #{_forward_core.3} parent=1 // pred_check_branch
      %1823 = sbr.rel (0) target = $region49
    $region48: #{_forward_core.3} parent=1 // pred_region
      %s1825 = ssub.s32 32, 32
      %1826 = vsyncadd [#allocation4], %s1825
      %s1828 = sshll.u32 [#allocation3], 4
      %s1829 = int_to_ptr.vmem [resolvable:$true] %s1828
      %1831 = dma.vmem_to_hbm [thread:$0]  %s1829, 32, %s11, [#allocation4]
    $region49: #{_forward_core.3} parent=1 // pred_fallthru
      _
    // Predicated region
    $region50: #{_forward_core.3} parent=1 // pred_check
      _
    $region51: #{_forward_core.3} parent=1 // pred_check_branch
      %1833 = sbr.rel (0) target = $region53
    $region52: #{_forward_core.3} parent=1 // pred_region
      %s1835 = ssub.s32 32, 32
      %1836 = vsyncadd [#allocation6], %s1835
      %s1838 = sshll.u32 [#allocation5], 4
      %s1839 = int_to_ptr.vmem [resolvable:$true] %s1838
      %1841 = dma.vmem_to_hbm [thread:$0]  %s1839, 32, %s12, [#allocation6]
    $region53: #{_forward_core.3} parent=1 // pred_fallthru
      _
    // Predicated region
    $region54: #{_forward_core.3} parent=1 // pred_check
      _
    $region55: #{_forward_core.3} parent=1 // pred_check_branch
      %1843 = sbr.rel (0) target = $region57
    $region56: #{_forward_core.3} parent=1 // pred_region
      _
    $region57: #{_forward_core.3} parent=1 // pred_fallthru
      _
    // Predicated region
    $region58: #{_forward_core.3} parent=1 // pred_check
      _
    $region59: #{_forward_core.3} parent=1 // pred_check_branch
      %1845 = sbr.rel (0) target = $region61
    $region60: #{_forward_core.3} parent=1 // pred_region
      _
    $region61: #{_forward_core.3} parent=1 // pred_fallthru
      _
    // Predicated region
    $region62: #{_forward_core.3} parent=1 // pred_check
      _
    $region63: #{_forward_core.3} parent=1 // pred_check_branch
      %1847 = sbr.rel (0) target = $region65
    $region64: #{_forward_core.3} parent=1 // pred_region
      %1848 = dma.done [#allocation4], 32
    $region65: #{_forward_core.3} parent=1 // pred_fallthru
      _
    // Predicated region
    $region66: #{_forward_core.3} parent=1 // pred_check
      _
    $region67: #{_forward_core.3} parent=1 // pred_check_branch
      %1850 = sbr.rel (0) target = $region69
    $region68: #{_forward_core.3} parent=1 // pred_region
      %1851 = dma.done [#allocation6], 32
    $region69: #{_forward_core.3} parent=1 // pred_fallthru
      _
    %1852 = vsyncpa [#allocation4], 1
    %1853 = vsyncpa [#allocation6], 1

</llo_original>
